<compile_context>
chip_gen: v5e
topology: v5e:2x2
jax: 0.10.0
libtpu: 0.0.40
codegen_flags: <defaults>
</compile_context>

<pallas_src>
import functools

import jax
import jax.numpy as jnp
from jax.experimental import pallas as pl
from jax.experimental.pallas import tpu as pltpu


# ----------------------------------------------------------------------------
# In-kernel helpers.  Activations are batch-flattened channels-last slabs
# (Btile*L, C); per-sample boundaries are enforced with row masks.
# ----------------------------------------------------------------------------
def _row_in_sample(shape, L):
    """Row index within its own length-L sample, broadcast to `shape`."""
    return jax.lax.broadcasted_iota(jnp.int32, shape, 0) % L


def _shift_prev(x, L):
    """out[i] = x[i-1] within each length-L sample; 0 at each sample's row 0."""
    rolled = pltpu.roll(x, shift=1, axis=0)            # rolled[i] = x[(i-1) % R]
    first = _row_in_sample(x.shape, L) == 0
    return jnp.where(first, jnp.zeros_like(rolled), rolled)


def _shift_next(x, L):
    """out[i] = x[i+1] within each length-L sample; 0 at each sample's last row."""
    R = x.shape[0]
    rolled = pltpu.roll(x, shift=R - 1, axis=0)        # rolled[i] = x[(i+1) % R]
    last = _row_in_sample(x.shape, L) == L - 1
    return jnp.where(last, jnp.zeros_like(rolled), rolled)


def _conv3_bn(x, w_ref, scale_ref, shift_ref, *, L):
    """Conv1d(kernel=3, padding=1) + folded bias/BatchNorm, channels-last.

    x: (Btile*L, Cin) f32.  w_ref: (3, Cin, Cout) bf16, tap order [l-1, l, l+1]
    (imported PyTorch Conv1d weights (Cout, Cin, 3) map via transpose(2,1,0)).
    Three accumulating per-tap MXU dots; f32 accumulate + f32 BN epilogue.
    """
    xb = x.astype(jnp.bfloat16)
    xp = _shift_prev(x, L).astype(jnp.bfloat16)
    xn = _shift_next(x, L).astype(jnp.bfloat16)
    y = jnp.dot(xb, w_ref[1], preferred_element_type=jnp.float32)
    y = y + jnp.dot(xp, w_ref[0], preferred_element_type=jnp.float32)
    y = y + jnp.dot(xn, w_ref[2], preferred_element_type=jnp.float32)
    return y * scale_ref[...] + shift_ref[...]


def _maxpool3s2p1(h, L):
    """MaxPool1d(kernel=3, stride=2, padding=1) per sample on (Btile*L, C).

    h is post-ReLU (>= 0) so zero edge padding == PyTorch's -inf padding.
    L must be even so the stride-2 downsample keeps samples contiguous.
    """
    R, C = h.shape
    m = jnp.maximum(jnp.maximum(_shift_prev(h, L), h), _shift_next(h, L))
    # even-row (stride-2) pick; per-sample segments stay contiguous (L even).
    # TODO(synk): a sublane-strided ref read (pl.ds(..., stride=2)) via a
    # scratch buffer would avoid this small on-chip relayout.
    return m.reshape(R // 2, 2, C)[:, 0, :]


# ----------------------------------------------------------------------------
# Fused conv-stack kernel: conv0 + all ConvBlocks + all MaxPools in one call.
# ----------------------------------------------------------------------------
def _conv_stack_kernel(*refs, plan, L0, apply_shortcut):
    """refs = (x_ref, <3 refs per conv in plan order>, o_ref).

    All intermediates stay on-chip (f32 between layers, bf16 matmul operands).
    """
    x_ref, o_ref = refs[0], refs[-1]
    wrefs = refs[1:-1]
    pos = [0]

    def next_conv():
        w, sc, sh = wrefs[pos[0]], wrefs[pos[0] + 1], wrefs[pos[0] + 2]
        pos[0] += 3
        return w, sc, sh

    L = L0
    h = x_ref[...].astype(jnp.float32)                     # (Btile*L0, E)

    for op in plan:
        kind = op[0]
        if kind == "conv0":
            h = jnp.maximum(_conv3_bn(h, *next_conv(), L=L), 0.0)
            # TODO(synk): dropout is identity here (eval mode).
        elif kind == "block":
            has_sc = op[1]
            csc = next_conv() if has_sc else None
            c1 = next_conv()
            c2 = next_conv()
            h1 = jnp.maximum(_conv3_bn(h, *c1, L=L), 0.0)  # conv1 + bn1 + ReLU
            h2 = _conv3_bn(h1, *c2, L=L)                   # conv2 + bn2
            if apply_shortcut:
                # shortcut conv evaluated AFTER conv2 to shorten its live range
                x_prev = _conv3_bn(h, *csc, L=L) if has_sc else h
                h2 = (h2 + x_prev) * 0.5                   # (x + x_prev) / 2
            h = jnp.maximum(h2, 0.0)                       # ReLU (dropout = id)
        else:                                              # "pool"
            h = _maxpool3s2p1(h, L)
            L //= 2

    o_ref[...] = h.astype(o_ref.dtype)


def conv_stack(x_flat, params, *, batch, seq_len, batch_tile=None):
    """Single pallas_call for the whole conv stack.

    x_flat: (batch*seq_len, emb) bf16, channels-last, batch-flattened rows.
    Returns (out_flat, L_final, C_final) with out_flat: (batch*L_final, C_final).
    """
    apply_shortcut = params["apply_shortcut"]
    btile = batch if batch_tile is None else batch_tile
    assert batch % btile == 0
    n_tiles = batch // btile   # for large batches keep this a multiple of 2 on v7x

    plan, args, w_specs = [], [], []

    def add_conv(cp):
        args.extend([cp["w"], cp["scale"], cp["shift"]])
        w_specs.append(pl.BlockSpec(cp["w"].shape, lambda i: (0, 0, 0)))
        w_specs.append(pl.BlockSpec(cp["scale"].shape, lambda i: (0, 0)))
        w_specs.append(pl.BlockSpec(cp["shift"].shape, lambda i: (0, 0)))

    plan.append(("conv0",))
    add_conv(params["conv0"])
    L, C = seq_len, params["conv0"]["w"].shape[2]
    for part in params["conv_parts"]:
        for blk in part:
            has_sc = apply_shortcut and ("conv_sc" in blk)
            plan.append(("block", has_sc))
            if has_sc:
                add_conv(blk["conv_sc"])
            add_conv(blk["conv1"])
            add_conv(blk["conv2"])
            C = blk["conv1"]["w"].shape[2]
        assert L % 2 == 0, "odd sequence length before MaxPool not supported"
        plan.append(("pool",))     # reference applies max_pool after every part
        L //= 2

    emb_dim = x_flat.shape[1]
    kernel = functools.partial(_conv_stack_kernel, plan=tuple(plan),
                               L0=seq_len, apply_shortcut=apply_shortcut)
    out = pl.pallas_call(
        kernel,
        out_shape=jax.ShapeDtypeStruct((batch * L, C), jnp.bfloat16),
        grid=(n_tiles,),
        in_specs=[pl.BlockSpec((btile * seq_len, emb_dim), lambda i: (i, 0))]
                 + w_specs,
        out_specs=pl.BlockSpec((btile * L, C), lambda i: (i, 0)),
        # VMEM use (weights + activations) is < 1 MiB, far below even v7x's
        # 32 MiB scoped limit, so no vmem_limit_bytes override is needed.
        compiler_params=pltpu.CompilerParams(
            dimension_semantics=("parallel",)),
    )(x_flat, *args)
    return out, L, C


# ----------------------------------------------------------------------------
# Fused dense head
# ----------------------------------------------------------------------------
def _dense_head_kernel(*refs, n_layers):
    x_ref, o_ref = refs[0], refs[-1]
    h = x_ref[...].astype(jnp.float32)
    for i in range(n_layers):
        w_ref, b_ref = refs[1 + 2 * i], refs[2 + 2 * i]
        h = jnp.dot(h.astype(w_ref.dtype), w_ref[...],
                    preferred_element_type=jnp.float32) + b_ref[...]
        if i < n_layers - 1:
            h = jnp.maximum(h, 0.0)
    o_ref[...] = h.astype(o_ref.dtype)


def dense_head(x, layers):
    B, F = x.shape
    n = len(layers)
    n_out = layers[-1]["wT"].shape[1]
    in_specs = [pl.BlockSpec((B, F), lambda i: (0, 0))]
    args = [x]
    for lp in layers:
        in_specs.append(pl.BlockSpec(lp["wT"].shape, lambda i: (0, 0)))
        in_specs.append(pl.BlockSpec(lp["b"].shape, lambda i: (0, 0)))
        args.extend([lp["wT"], lp["b"]])
    return pl.pallas_call(
        functools.partial(_dense_head_kernel, n_layers=n),
        out_shape=jax.ShapeDtypeStruct((B, n_out), jnp.float32),
        grid=(1,),
        in_specs=in_specs,
        out_specs=pl.BlockSpec((B, n_out), lambda i: (0, 0)),
    )(*args)


# ----------------------------------------------------------------------------
# VDCNN forward (glue)
# ----------------------------------------------------------------------------
def kmax_pooling(x, k):
    # TODO(synk): order-preserving top-k (top_k + sort + gather) stays in plain
    # JAX glue; the tensor here is tiny (B, C, L_final).
    B, C, L = x.shape
    if L < k:
        pad = jnp.zeros((B, C, k - L), x.dtype)
        return jnp.concatenate([x, pad], axis=2)
    _, idx = jax.lax.top_k(x, k)
    idx_sorted = jnp.sort(idx, axis=-1)
    return jnp.take_along_axis(x, idx_sorted, axis=-1)


def vdcnn_forward(tokens, params, k):
    # tokens: (seq_len, batch) int32 — matches the PyTorch forward signature.
    seq_len, batch = tokens.shape
    emb = params["embedding"][tokens]                       # (L, B, E) glue gather
    x = jnp.transpose(emb, (1, 0, 2)).astype(jnp.bfloat16)  # (B, L, E) channels-last
    x_flat = x.reshape(batch * seq_len, -1)                 # batch-flattened rows

    h_flat, L_f, C_f = conv_stack(x_flat, params, batch=batch, seq_len=seq_len)

    h = h_flat.reshape(batch, L_f, C_f).astype(jnp.float32)
    h = jnp.transpose(h, (0, 2, 1))                         # (B, C, L_f)
    h = kmax_pooling(h, k)                                  # (B, C, k)
    feats = h.reshape(batch, -1)                            # == x.view(B, -1)

    logits = dense_head(feats, params["dense"])             # all dense layers fused
    # softmax followed by argmax == argmax of logits (glue)
    return jnp.argmax(logits, axis=-1)


# ----------------------------------------------------------------------------
# Deterministic parameter construction (bias folded into BN shift; bf16 weights)
# ----------------------------------------------------------------------------
def _conv_bn_params(key, cin, cout, *, with_bn=True, eps=1e-5):
    kw, kb, kg, kbe, km, kv = jax.random.split(key, 6)
    # w[t] multiplies input tap l-1+t (t = 0, 1, 2), shape (Cin, Cout).
    w = 0.1 * jax.random.normal(kw, (3, cin, cout), jnp.float32)
    bias = 0.1 * jax.random.normal(kb, (1, cout), jnp.float32)
    if with_bn:
        gamma = 1.0 + 0.1 * jax.random.normal(kg, (1, cout), jnp.float32)
        beta = 0.1 * jax.random.normal(kbe, (1, cout), jnp.float32)
        mean = 0.1 * jax.random.normal(km, (1, cout), jnp.float32)
        var = jnp.abs(1.0 + 0.1 * jax.random.normal(kv, (1, cout), jnp.float32))
        scale = gamma / jnp.sqrt(var + eps)
        shift = beta + (bias - mean) * scale                # bias folded into BN shift
    else:
        scale = jnp.ones((1, cout), jnp.float32)
        shift = bias
    return {"w": w.astype(jnp.bfloat16), "scale": scale, "shift": shift}


def build_params(key, *, vocab, emb_size, conv0_fmaps, part_plan, k,
                 dense_hidden, n_labels, apply_shortcut):
    keys = iter(jax.random.split(key, 128))
    params = {"apply_shortcut": apply_shortcut}

    emb = 0.1 * jax.random.normal(next(keys), (vocab, emb_size), jnp.float32)
    params["embedding"] = emb.at[0].set(0.0)                # padding_idx=0

    params["conv0"] = _conv_bn_params(next(keys), emb_size, conv0_fmaps,
                                      with_bn=False)

    current = conv0_fmaps
    conv_parts = []
    for n_fmaps, n_blocks in part_plan:
        blocks = []
        for _ in range(n_blocks):
            blk = {"conv1": _conv_bn_params(next(keys), current, n_fmaps),
                   "conv2": _conv_bn_params(next(keys), n_fmaps, n_fmaps)}
            if current != n_fmaps and apply_shortcut:
                blk["conv_sc"] = _conv_bn_params(next(keys), current, n_fmaps)
            blocks.append(blk)
            current = n_fmaps
        conv_parts.append(blocks)
    params["conv_parts"] = conv_parts

    features = current * k
    dense = [
        {"wT": (0.1 * jax.random.normal(next(keys), (features, dense_hidden),
                                        jnp.float32)).astype(jnp.bfloat16),
         "b": 0.1 * jax.random.normal(next(keys), (1, dense_hidden), jnp.float32)},
        {"wT": (0.1 * jax.random.normal(next(keys), (dense_hidden, n_labels),
                                        jnp.float32)).astype(jnp.bfloat16),
         "b": 0.1 * jax.random.normal(next(keys), (1, n_labels), jnp.float32)},
    ]
    params["dense"] = dense
    return params


# ----------------------------------------------------------------------------
if __name__ == "__main__":
    key = jax.random.PRNGKey(0)
    kp, kx = jax.random.split(key)

    # synthetic config (mirrors the module's __init__ arithmetic)
    VOCAB = 50
    EMB = 16
    CONV0 = 32                                    # max(32, conv0_nfmaps)
    # (n_fmaps, n_blocks) for conv parts 1..4; min_fmaps doubles: 32,64,128,256
    PART_PLAN = [(32, 1), (64, 1), (128, 0), (256, 0)]
    K = 2                                         # k-max pooling
    DENSE_HIDDEN = 64                             # max(64, dense_nfeatures)
    N_LABELS = 4
    SEQ_LEN, BATCH = 64, 2

    params = build_params(kp, vocab=VOCAB, emb_size=EMB, conv0_fmaps=CONV0,
                          part_plan=PART_PLAN, k=K, dense_hidden=DENSE_HIDDEN,
                          n_labels=N_LABELS, apply_shortcut=True)

    tokens = jax.random.randint(kx, (SEQ_LEN, BATCH), 0, VOCAB, dtype=jnp.int32)

    preds = vdcnn_forward(tokens, params, K)
    preds = jax.block_until_ready(preds)
    assert preds.shape == (BATCH,)
    print("KERNEL_OK")
</pallas_src>

<mosaic_0001>
module attributes {stable_mosaic.version = 11 : i64} {
  func.func @_conv_stack_kernel(%arg0: i32, %arg1: memref<128x16xbf16, #tpu.memory_space<vmem>>, %arg2: memref<3x16x32xbf16, #tpu.memory_space<vmem>>, %arg3: memref<1x32xf32, #tpu.memory_space<vmem>>, %arg4: memref<1x32xf32, #tpu.memory_space<vmem>>, %arg5: memref<3x32x32xbf16, #tpu.memory_space<vmem>>, %arg6: memref<1x32xf32, #tpu.memory_space<vmem>>, %arg7: memref<1x32xf32, #tpu.memory_space<vmem>>, %arg8: memref<3x32x32xbf16, #tpu.memory_space<vmem>>, %arg9: memref<1x32xf32, #tpu.memory_space<vmem>>, %arg10: memref<1x32xf32, #tpu.memory_space<vmem>>, %arg11: memref<3x32x64xbf16, #tpu.memory_space<vmem>>, %arg12: memref<1x64xf32, #tpu.memory_space<vmem>>, %arg13: memref<1x64xf32, #tpu.memory_space<vmem>>, %arg14: memref<3x32x64xbf16, #tpu.memory_space<vmem>>, %arg15: memref<1x64xf32, #tpu.memory_space<vmem>>, %arg16: memref<1x64xf32, #tpu.memory_space<vmem>>, %arg17: memref<3x64x64xbf16, #tpu.memory_space<vmem>>, %arg18: memref<1x64xf32, #tpu.memory_space<vmem>>, %arg19: memref<1x64xf32, #tpu.memory_space<vmem>>, %arg20: memref<8x64xbf16, #tpu.memory_space<vmem>>) attributes {dimension_semantics = [#tpu.dimension_semantics<parallel>], iteration_bounds = array<i64: 1>, scalar_prefetch = 0 : i64, scratch_operands = 0 : i64, tpu.core_type = #tpu.core_type<tc>, window_params = [{transform_indices = @transform_0, window_bounds = array<i64: 128, 16>}, {pipeline_mode = #tpu.pipeline_mode<synchronous>, transform_indices = @transform_1, window_bounds = array<i64: 3, 16, 32>}, {pipeline_mode = #tpu.pipeline_mode<synchronous>, transform_indices = @transform_2, window_bounds = array<i64: 1, 32>}, {pipeline_mode = #tpu.pipeline_mode<synchronous>, transform_indices = @transform_3, window_bounds = array<i64: 1, 32>}, {pipeline_mode = #tpu.pipeline_mode<synchronous>, transform_indices = @transform_4, window_bounds = array<i64: 3, 32, 32>}, {pipeline_mode = #tpu.pipeline_mode<synchronous>, transform_indices = @transform_5, window_bounds = array<i64: 1, 32>}, {pipeline_mode = #tpu.pipeline_mode<synchronous>, transform_indices = @transform_6, window_bounds = array<i64: 1, 32>}, {pipeline_mode = #tpu.pipeline_mode<synchronous>, transform_indices = @transform_7, window_bounds = array<i64: 3, 32, 32>}, {pipeline_mode = #tpu.pipeline_mode<synchronous>, transform_indices = @transform_8, window_bounds = array<i64: 1, 32>}, {pipeline_mode = #tpu.pipeline_mode<synchronous>, transform_indices = @transform_9, window_bounds = array<i64: 1, 32>}, {pipeline_mode = #tpu.pipeline_mode<synchronous>, transform_indices = @transform_10, window_bounds = array<i64: 3, 32, 64>}, {pipeline_mode = #tpu.pipeline_mode<synchronous>, transform_indices = @transform_11, window_bounds = array<i64: 1, 64>}, {pipeline_mode = #tpu.pipeline_mode<synchronous>, transform_indices = @transform_12, window_bounds = array<i64: 1, 64>}, {pipeline_mode = #tpu.pipeline_mode<synchronous>, transform_indices = @transform_13, window_bounds = array<i64: 3, 32, 64>}, {pipeline_mode = #tpu.pipeline_mode<synchronous>, transform_indices = @transform_14, window_bounds = array<i64: 1, 64>}, {pipeline_mode = #tpu.pipeline_mode<synchronous>, transform_indices = @transform_15, window_bounds = array<i64: 1, 64>}, {pipeline_mode = #tpu.pipeline_mode<synchronous>, transform_indices = @transform_16, window_bounds = array<i64: 3, 64, 64>}, {pipeline_mode = #tpu.pipeline_mode<synchronous>, transform_indices = @transform_17, window_bounds = array<i64: 1, 64>}, {pipeline_mode = #tpu.pipeline_mode<synchronous>, transform_indices = @transform_18, window_bounds = array<i64: 1, 64>}, {transform_indices = @transform_19, window_bounds = array<i64: 8, 64>}]} {
    %c0 = arith.constant 0 : index
    %c0_0 = arith.constant 0 : index
    %0 = vector.load %arg1[%c0, %c0_0] : memref<128x16xbf16, #tpu.memory_space<vmem>>, vector<128x16xbf16>
    %1 = arith.extf %0 : vector<128x16xbf16> to vector<128x16xf32>
    %2 = arith.truncf %1 : vector<128x16xf32> to vector<128x16xbf16>
    %c1_i32 = arith.constant 1 : i32
    %3 = tpu.dynamic_rotate %1 by %c1_i32 dim 0 : vector<128x16xf32>, i32 -> vector<128x16xf32>
    %4 = tpu.iota {dimensions = array<i32: 0>} : vector<128x16xi32>
    %c64_i32 = arith.constant 64 : i32
    %c0_i32 = arith.constant 0 : i32
    %5 = arith.cmpi eq, %c64_i32, %c0_i32 : i32
    %c1_i32_1 = arith.constant 1 : i32
    %6 = arith.select %5, %c1_i32_1, %c64_i32 : i32
    %7 = vector.broadcast %6 : i32 to vector<128x16xi32>
    %8 = arith.remsi %4, %7 : vector<128x16xi32>
    %c0_i32_2 = arith.constant 0 : i32
    %9 = vector.broadcast %c0_i32_2 : i32 to vector<128x16xi32>
    %10 = arith.cmpi ne, %8, %9 : vector<128x16xi32>
    %c0_i32_3 = arith.constant 0 : i32
    %11 = vector.broadcast %c0_i32_3 : i32 to vector<128x16xi32>
    %12 = arith.cmpi slt, %8, %11 : vector<128x16xi32>
    %c0_i32_4 = arith.constant 0 : i32
    %13 = arith.cmpi slt, %6, %c0_i32_4 : i32
    %14 = vector.broadcast %13 : i1 to vector<128x16xi1>
    %15 = vector.broadcast %14 : vector<128x16xi1> to vector<128x16xi1>
    %16 = arith.xori %12, %15 : vector<128x16xi1>
    %17 = arith.andi %16, %10 : vector<128x16xi1>
    %18 = vector.broadcast %6 : i32 to vector<128x16xi32>
    %19 = arith.addi %8, %18 : vector<128x16xi32>
    %20 = arith.select %17, %19, %8 : vector<128x16xi1>, vector<128x16xi32>
    %c0_i32_5 = arith.constant 0 : i32
    %21 = vector.broadcast %c0_i32_5 : i32 to vector<128x16xi32>
    %22 = arith.cmpi eq, %20, %21 : vector<128x16xi32>
    %cst = arith.constant 0.000000e+00 : f32
    %23 = vector.broadcast %cst : f32 to vector<128x16xf32>
    %24 = arith.select %22, %23, %3 : vector<128x16xi1>, vector<128x16xf32>
    %25 = arith.truncf %24 : vector<128x16xf32> to vector<128x16xbf16>
    %c127_i32 = arith.constant 127 : i32
    %26 = tpu.dynamic_rotate %1 by %c127_i32 dim 0 : vector<128x16xf32>, i32 -> vector<128x16xf32>
    %27 = tpu.iota {dimensions = array<i32: 0>} : vector<128x16xi32>
    %c64_i32_6 = arith.constant 64 : i32
    %c0_i32_7 = arith.constant 0 : i32
    %28 = arith.cmpi eq, %c64_i32_6, %c0_i32_7 : i32
    %c1_i32_8 = arith.constant 1 : i32
    %29 = arith.select %28, %c1_i32_8, %c64_i32_6 : i32
    %30 = vector.broadcast %29 : i32 to vector<128x16xi32>
    %31 = arith.remsi %27, %30 : vector<128x16xi32>
    %c0_i32_9 = arith.constant 0 : i32
    %32 = vector.broadcast %c0_i32_9 : i32 to vector<128x16xi32>
    %33 = arith.cmpi ne, %31, %32 : vector<128x16xi32>
    %c0_i32_10 = arith.constant 0 : i32
    %34 = vector.broadcast %c0_i32_10 : i32 to vector<128x16xi32>
    %35 = arith.cmpi slt, %31, %34 : vector<128x16xi32>
    %c0_i32_11 = arith.constant 0 : i32
    %36 = arith.cmpi slt, %29, %c0_i32_11 : i32
    %37 = vector.broadcast %36 : i1 to vector<128x16xi1>
    %38 = vector.broadcast %37 : vector<128x16xi1> to vector<128x16xi1>
    %39 = arith.xori %35, %38 : vector<128x16xi1>
    %40 = arith.andi %39, %33 : vector<128x16xi1>
    %41 = vector.broadcast %29 : i32 to vector<128x16xi32>
    %42 = arith.addi %31, %41 : vector<128x16xi32>
    %43 = arith.select %40, %42, %31 : vector<128x16xi1>, vector<128x16xi32>
    %c63_i32 = arith.constant 63 : i32
    %44 = vector.broadcast %c63_i32 : i32 to vector<128x16xi32>
    %45 = arith.cmpi eq, %43, %44 : vector<128x16xi32>
    %cst_12 = arith.constant 0.000000e+00 : f32
    %46 = vector.broadcast %cst_12 : f32 to vector<128x16xf32>
    %47 = arith.select %45, %46, %26 : vector<128x16xi1>, vector<128x16xf32>
    %48 = arith.truncf %47 : vector<128x16xf32> to vector<128x16xbf16>
    %c1 = arith.constant 1 : index
    %c0_13 = arith.constant 0 : index
    %c0_14 = arith.constant 0 : index
    %49 = vector.load %arg2[%c1, %c0_13, %c0_14] : memref<3x16x32xbf16, #tpu.memory_space<vmem>>, vector<1x16x32xbf16>
    %50 = vector.shape_cast %49 : vector<1x16x32xbf16> to vector<16x32xbf16>
    %cst_15 = arith.constant dense<0.000000e+00> : vector<128x32xf32>
    %51 = tpu.matmul %2, %50, %cst_15 {dimension_numbers = #tpu.dot_dimension_numbers<[1], [0], [0], [1], [0, 0, 1, 1], [], []>} : vector<128x16xbf16>, vector<16x32xbf16>, vector<128x32xf32> -> vector<128x32xf32>
    %c0_16 = arith.constant 0 : index
    %c0_17 = arith.constant 0 : index
    %c0_18 = arith.constant 0 : index
    %52 = vector.load %arg2[%c0_16, %c0_17, %c0_18] : memref<3x16x32xbf16, #tpu.memory_space<vmem>>, vector<1x16x32xbf16>
    %53 = vector.shape_cast %52 : vector<1x16x32xbf16> to vector<16x32xbf16>
    %cst_19 = arith.constant dense<0.000000e+00> : vector<128x32xf32>
    %54 = tpu.matmul %25, %53, %cst_19 {dimension_numbers = #tpu.dot_dimension_numbers<[1], [0], [0], [1], [0, 0, 1, 1], [], []>} : vector<128x16xbf16>, vector<16x32xbf16>, vector<128x32xf32> -> vector<128x32xf32>
    %55 = arith.addf %51, %54 : vector<128x32xf32>
    %c2 = arith.constant 2 : index
    %c0_20 = arith.constant 0 : index
    %c0_21 = arith.constant 0 : index
    %56 = vector.load %arg2[%c2, %c0_20, %c0_21] : memref<3x16x32xbf16, #tpu.memory_space<vmem>>, vector<1x16x32xbf16>
    %57 = vector.shape_cast %56 : vector<1x16x32xbf16> to vector<16x32xbf16>
    %cst_22 = arith.constant dense<0.000000e+00> : vector<128x32xf32>
    %58 = tpu.matmul %48, %57, %cst_22 {dimension_numbers = #tpu.dot_dimension_numbers<[1], [0], [0], [1], [0, 0, 1, 1], [], []>} : vector<128x16xbf16>, vector<16x32xbf16>, vector<128x32xf32> -> vector<128x32xf32>
    %59 = arith.addf %55, %58 : vector<128x32xf32>
    %c0_23 = arith.constant 0 : index
    %c0_24 = arith.constant 0 : index
    %60 = vector.load %arg3[%c0_23, %c0_24] : memref<1x32xf32, #tpu.memory_space<vmem>>, vector<1x32xf32>
    %61 = vector.broadcast %60 : vector<1x32xf32> to vector<128x32xf32>
    %62 = arith.mulf %59, %61 : vector<128x32xf32>
    %c0_25 = arith.constant 0 : index
    %c0_26 = arith.constant 0 : index
    %63 = vector.load %arg4[%c0_25, %c0_26] : memref<1x32xf32, #tpu.memory_space<vmem>>, vector<1x32xf32>
    %64 = vector.broadcast %63 : vector<1x32xf32> to vector<128x32xf32>
    %65 = arith.addf %62, %64 : vector<128x32xf32>
    %cst_27 = arith.constant 0.000000e+00 : f32
    %66 = vector.broadcast %cst_27 : f32 to vector<128x32xf32>
    %67 = arith.maximumf %65, %66 : vector<128x32xf32>
    %68 = arith.truncf %67 : vector<128x32xf32> to vector<128x32xbf16>
    %c1_i32_28 = arith.constant 1 : i32
    %69 = tpu.dynamic_rotate %67 by %c1_i32_28 dim 0 : vector<128x32xf32>, i32 -> vector<128x32xf32>
    %70 = tpu.iota {dimensions = array<i32: 0>} : vector<128x32xi32>
    %c64_i32_29 = arith.constant 64 : i32
    %c0_i32_30 = arith.constant 0 : i32
    %71 = arith.cmpi eq, %c64_i32_29, %c0_i32_30 : i32
    %c1_i32_31 = arith.constant 1 : i32
    %72 = arith.select %71, %c1_i32_31, %c64_i32_29 : i32
    %73 = vector.broadcast %72 : i32 to vector<128x32xi32>
    %74 = arith.remsi %70, %73 : vector<128x32xi32>
    %c0_i32_32 = arith.constant 0 : i32
    %75 = vector.broadcast %c0_i32_32 : i32 to vector<128x32xi32>
    %76 = arith.cmpi ne, %74, %75 : vector<128x32xi32>
    %c0_i32_33 = arith.constant 0 : i32
    %77 = vector.broadcast %c0_i32_33 : i32 to vector<128x32xi32>
    %78 = arith.cmpi slt, %74, %77 : vector<128x32xi32>
    %c0_i32_34 = arith.constant 0 : i32
    %79 = arith.cmpi slt, %72, %c0_i32_34 : i32
    %80 = vector.broadcast %79 : i1 to vector<128x32xi1>
    %81 = vector.broadcast %80 : vector<128x32xi1> to vector<128x32xi1>
    %82 = arith.xori %78, %81 : vector<128x32xi1>
    %83 = arith.andi %82, %76 : vector<128x32xi1>
    %84 = vector.broadcast %72 : i32 to vector<128x32xi32>
    %85 = arith.addi %74, %84 : vector<128x32xi32>
    %86 = arith.select %83, %85, %74 : vector<128x32xi1>, vector<128x32xi32>
    %c0_i32_35 = arith.constant 0 : i32
    %87 = vector.broadcast %c0_i32_35 : i32 to vector<128x32xi32>
    %88 = arith.cmpi eq, %86, %87 : vector<128x32xi32>
    %cst_36 = arith.constant 0.000000e+00 : f32
    %89 = vector.broadcast %cst_36 : f32 to vector<128x32xf32>
    %90 = arith.select %88, %89, %69 : vector<128x32xi1>, vector<128x32xf32>
    %91 = arith.truncf %90 : vector<128x32xf32> to vector<128x32xbf16>
    %c127_i32_37 = arith.constant 127 : i32
    %92 = tpu.dynamic_rotate %67 by %c127_i32_37 dim 0 : vector<128x32xf32>, i32 -> vector<128x32xf32>
    %93 = tpu.iota {dimensions = array<i32: 0>} : vector<128x32xi32>
    %c64_i32_38 = arith.constant 64 : i32
    %c0_i32_39 = arith.constant 0 : i32
    %94 = arith.cmpi eq, %c64_i32_38, %c0_i32_39 : i32
    %c1_i32_40 = arith.constant 1 : i32
    %95 = arith.select %94, %c1_i32_40, %c64_i32_38 : i32
    %96 = vector.broadcast %95 : i32 to vector<128x32xi32>
    %97 = arith.remsi %93, %96 : vector<128x32xi32>
    %c0_i32_41 = arith.constant 0 : i32
    %98 = vector.broadcast %c0_i32_41 : i32 to vector<128x32xi32>
    %99 = arith.cmpi ne, %97, %98 : vector<128x32xi32>
    %c0_i32_42 = arith.constant 0 : i32
    %100 = vector.broadcast %c0_i32_42 : i32 to vector<128x32xi32>
    %101 = arith.cmpi slt, %97, %100 : vector<128x32xi32>
    %c0_i32_43 = arith.constant 0 : i32
    %102 = arith.cmpi slt, %95, %c0_i32_43 : i32
    %103 = vector.broadcast %102 : i1 to vector<128x32xi1>
    %104 = vector.broadcast %103 : vector<128x32xi1> to vector<128x32xi1>
    %105 = arith.xori %101, %104 : vector<128x32xi1>
    %106 = arith.andi %105, %99 : vector<128x32xi1>
    %107 = vector.broadcast %95 : i32 to vector<128x32xi32>
    %108 = arith.addi %97, %107 : vector<128x32xi32>
    %109 = arith.select %106, %108, %97 : vector<128x32xi1>, vector<128x32xi32>
    %c63_i32_44 = arith.constant 63 : i32
    %110 = vector.broadcast %c63_i32_44 : i32 to vector<128x32xi32>
    %111 = arith.cmpi eq, %109, %110 : vector<128x32xi32>
    %cst_45 = arith.constant 0.000000e+00 : f32
    %112 = vector.broadcast %cst_45 : f32 to vector<128x32xf32>
    %113 = arith.select %111, %112, %92 : vector<128x32xi1>, vector<128x32xf32>
    %114 = arith.truncf %113 : vector<128x32xf32> to vector<128x32xbf16>
    %c1_46 = arith.constant 1 : index
    %c0_47 = arith.constant 0 : index
    %c0_48 = arith.constant 0 : index
    %115 = vector.load %arg5[%c1_46, %c0_47, %c0_48] : memref<3x32x32xbf16, #tpu.memory_space<vmem>>, vector<1x32x32xbf16>
    %116 = vector.shape_cast %115 : vector<1x32x32xbf16> to vector<32x32xbf16>
    %cst_49 = arith.constant dense<0.000000e+00> : vector<128x32xf32>
    %117 = tpu.matmul %68, %116, %cst_49 {dimension_numbers = #tpu.dot_dimension_numbers<[1], [0], [0], [1], [0, 0, 1, 1], [], []>} : vector<128x32xbf16>, vector<32x32xbf16>, vector<128x32xf32> -> vector<128x32xf32>
    %c0_50 = arith.constant 0 : index
    %c0_51 = arith.constant 0 : index
    %c0_52 = arith.constant 0 : index
    %118 = vector.load %arg5[%c0_50, %c0_51, %c0_52] : memref<3x32x32xbf16, #tpu.memory_space<vmem>>, vector<1x32x32xbf16>
    %119 = vector.shape_cast %118 : vector<1x32x32xbf16> to vector<32x32xbf16>
    %cst_53 = arith.constant dense<0.000000e+00> : vector<128x32xf32>
    %120 = tpu.matmul %91, %119, %cst_53 {dimension_numbers = #tpu.dot_dimension_numbers<[1], [0], [0], [1], [0, 0, 1, 1], [], []>} : vector<128x32xbf16>, vector<32x32xbf16>, vector<128x32xf32> -> vector<128x32xf32>
    %121 = arith.addf %117, %120 : vector<128x32xf32>
    %c2_54 = arith.constant 2 : index
    %c0_55 = arith.constant 0 : index
    %c0_56 = arith.constant 0 : index
    %122 = vector.load %arg5[%c2_54, %c0_55, %c0_56] : memref<3x32x32xbf16, #tpu.memory_space<vmem>>, vector<1x32x32xbf16>
    %123 = vector.shape_cast %122 : vector<1x32x32xbf16> to vector<32x32xbf16>
    %cst_57 = arith.constant dense<0.000000e+00> : vector<128x32xf32>
    %124 = tpu.matmul %114, %123, %cst_57 {dimension_numbers = #tpu.dot_dimension_numbers<[1], [0], [0], [1], [0, 0, 1, 1], [], []>} : vector<128x32xbf16>, vector<32x32xbf16>, vector<128x32xf32> -> vector<128x32xf32>
    %125 = arith.addf %121, %124 : vector<128x32xf32>
    %c0_58 = arith.constant 0 : index
    %c0_59 = arith.constant 0 : index
    %126 = vector.load %arg6[%c0_58, %c0_59] : memref<1x32xf32, #tpu.memory_space<vmem>>, vector<1x32xf32>
    %127 = vector.broadcast %126 : vector<1x32xf32> to vector<128x32xf32>
    %128 = arith.mulf %125, %127 : vector<128x32xf32>
    %c0_60 = arith.constant 0 : index
    %c0_61 = arith.constant 0 : index
    %129 = vector.load %arg7[%c0_60, %c0_61] : memref<1x32xf32, #tpu.memory_space<vmem>>, vector<1x32xf32>
    %130 = vector.broadcast %129 : vector<1x32xf32> to vector<128x32xf32>
    %131 = arith.addf %128, %130 : vector<128x32xf32>
    %cst_62 = arith.constant 0.000000e+00 : f32
    %132 = vector.broadcast %cst_62 : f32 to vector<128x32xf32>
    %133 = arith.maximumf %131, %132 : vector<128x32xf32>
    %134 = arith.truncf %133 : vector<128x32xf32> to vector<128x32xbf16>
    %c1_i32_63 = arith.constant 1 : i32
    %135 = tpu.dynamic_rotate %133 by %c1_i32_63 dim 0 : vector<128x32xf32>, i32 -> vector<128x32xf32>
    %136 = tpu.iota {dimensions = array<i32: 0>} : vector<128x32xi32>
    %c64_i32_64 = arith.constant 64 : i32
    %c0_i32_65 = arith.constant 0 : i32
    %137 = arith.cmpi eq, %c64_i32_64, %c0_i32_65 : i32
    %c1_i32_66 = arith.constant 1 : i32
    %138 = arith.select %137, %c1_i32_66, %c64_i32_64 : i32
    %139 = vector.broadcast %138 : i32 to vector<128x32xi32>
    %140 = arith.remsi %136, %139 : vector<128x32xi32>
    %c0_i32_67 = arith.constant 0 : i32
    %141 = vector.broadcast %c0_i32_67 : i32 to vector<128x32xi32>
    %142 = arith.cmpi ne, %140, %141 : vector<128x32xi32>
    %c0_i32_68 = arith.constant 0 : i32
    %143 = vector.broadcast %c0_i32_68 : i32 to vector<128x32xi32>
    %144 = arith.cmpi slt, %140, %143 : vector<128x32xi32>
    %c0_i32_69 = arith.constant 0 : i32
    %145 = arith.cmpi slt, %138, %c0_i32_69 : i32
    %146 = vector.broadcast %145 : i1 to vector<128x32xi1>
    %147 = vector.broadcast %146 : vector<128x32xi1> to vector<128x32xi1>
    %148 = arith.xori %144, %147 : vector<128x32xi1>
    %149 = arith.andi %148, %142 : vector<128x32xi1>
    %150 = vector.broadcast %138 : i32 to vector<128x32xi32>
    %151 = arith.addi %140, %150 : vector<128x32xi32>
    %152 = arith.select %149, %151, %140 : vector<128x32xi1>, vector<128x32xi32>
    %c0_i32_70 = arith.constant 0 : i32
    %153 = vector.broadcast %c0_i32_70 : i32 to vector<128x32xi32>
    %154 = arith.cmpi eq, %152, %153 : vector<128x32xi32>
    %cst_71 = arith.constant 0.000000e+00 : f32
    %155 = vector.broadcast %cst_71 : f32 to vector<128x32xf32>
    %156 = arith.select %154, %155, %135 : vector<128x32xi1>, vector<128x32xf32>
    %157 = arith.truncf %156 : vector<128x32xf32> to vector<128x32xbf16>
    %c127_i32_72 = arith.constant 127 : i32
    %158 = tpu.dynamic_rotate %133 by %c127_i32_72 dim 0 : vector<128x32xf32>, i32 -> vector<128x32xf32>
    %159 = tpu.iota {dimensions = array<i32: 0>} : vector<128x32xi32>
    %c64_i32_73 = arith.constant 64 : i32
    %c0_i32_74 = arith.constant 0 : i32
    %160 = arith.cmpi eq, %c64_i32_73, %c0_i32_74 : i32
    %c1_i32_75 = arith.constant 1 : i32
    %161 = arith.select %160, %c1_i32_75, %c64_i32_73 : i32
    %162 = vector.broadcast %161 : i32 to vector<128x32xi32>
    %163 = arith.remsi %159, %162 : vector<128x32xi32>
    %c0_i32_76 = arith.constant 0 : i32
    %164 = vector.broadcast %c0_i32_76 : i32 to vector<128x32xi32>
    %165 = arith.cmpi ne, %163, %164 : vector<128x32xi32>
    %c0_i32_77 = arith.constant 0 : i32
    %166 = vector.broadcast %c0_i32_77 : i32 to vector<128x32xi32>
    %167 = arith.cmpi slt, %163, %166 : vector<128x32xi32>
    %c0_i32_78 = arith.constant 0 : i32
    %168 = arith.cmpi slt, %161, %c0_i32_78 : i32
    %169 = vector.broadcast %168 : i1 to vector<128x32xi1>
    %170 = vector.broadcast %169 : vector<128x32xi1> to vector<128x32xi1>
    %171 = arith.xori %167, %170 : vector<128x32xi1>
    %172 = arith.andi %171, %165 : vector<128x32xi1>
    %173 = vector.broadcast %161 : i32 to vector<128x32xi32>
    %174 = arith.addi %163, %173 : vector<128x32xi32>
    %175 = arith.select %172, %174, %163 : vector<128x32xi1>, vector<128x32xi32>
    %c63_i32_79 = arith.constant 63 : i32
    %176 = vector.broadcast %c63_i32_79 : i32 to vector<128x32xi32>
    %177 = arith.cmpi eq, %175, %176 : vector<128x32xi32>
    %cst_80 = arith.constant 0.000000e+00 : f32
    %178 = vector.broadcast %cst_80 : f32 to vector<128x32xf32>
    %179 = arith.select %177, %178, %158 : vector<128x32xi1>, vector<128x32xf32>
    %180 = arith.truncf %179 : vector<128x32xf32> to vector<128x32xbf16>
    %c1_81 = arith.constant 1 : index
    %c0_82 = arith.constant 0 : index
    %c0_83 = arith.constant 0 : index
    %181 = vector.load %arg8[%c1_81, %c0_82, %c0_83] : memref<3x32x32xbf16, #tpu.memory_space<vmem>>, vector<1x32x32xbf16>
    %182 = vector.shape_cast %181 : vector<1x32x32xbf16> to vector<32x32xbf16>
    %cst_84 = arith.constant dense<0.000000e+00> : vector<128x32xf32>
    %183 = tpu.matmul %134, %182, %cst_84 {dimension_numbers = #tpu.dot_dimension_numbers<[1], [0], [0], [1], [0, 0, 1, 1], [], []>} : vector<128x32xbf16>, vector<32x32xbf16>, vector<128x32xf32> -> vector<128x32xf32>
    %c0_85 = arith.constant 0 : index
    %c0_86 = arith.constant 0 : index
    %c0_87 = arith.constant 0 : index
    %184 = vector.load %arg8[%c0_85, %c0_86, %c0_87] : memref<3x32x32xbf16, #tpu.memory_space<vmem>>, vector<1x32x32xbf16>
    %185 = vector.shape_cast %184 : vector<1x32x32xbf16> to vector<32x32xbf16>
    %cst_88 = arith.constant dense<0.000000e+00> : vector<128x32xf32>
    %186 = tpu.matmul %157, %185, %cst_88 {dimension_numbers = #tpu.dot_dimension_numbers<[1], [0], [0], [1], [0, 0, 1, 1], [], []>} : vector<128x32xbf16>, vector<32x32xbf16>, vector<128x32xf32> -> vector<128x32xf32>
    %187 = arith.addf %183, %186 : vector<128x32xf32>
    %c2_89 = arith.constant 2 : index
    %c0_90 = arith.constant 0 : index
    %c0_91 = arith.constant 0 : index
    %188 = vector.load %arg8[%c2_89, %c0_90, %c0_91] : memref<3x32x32xbf16, #tpu.memory_space<vmem>>, vector<1x32x32xbf16>
    %189 = vector.shape_cast %188 : vector<1x32x32xbf16> to vector<32x32xbf16>
    %cst_92 = arith.constant dense<0.000000e+00> : vector<128x32xf32>
    %190 = tpu.matmul %180, %189, %cst_92 {dimension_numbers = #tpu.dot_dimension_numbers<[1], [0], [0], [1], [0, 0, 1, 1], [], []>} : vector<128x32xbf16>, vector<32x32xbf16>, vector<128x32xf32> -> vector<128x32xf32>
    %191 = arith.addf %187, %190 : vector<128x32xf32>
    %c0_93 = arith.constant 0 : index
    %c0_94 = arith.constant 0 : index
    %192 = vector.load %arg9[%c0_93, %c0_94] : memref<1x32xf32, #tpu.memory_space<vmem>>, vector<1x32xf32>
    %193 = vector.broadcast %192 : vector<1x32xf32> to vector<128x32xf32>
    %194 = arith.mulf %191, %193 : vector<128x32xf32>
    %c0_95 = arith.constant 0 : index
    %c0_96 = arith.constant 0 : index
    %195 = vector.load %arg10[%c0_95, %c0_96] : memref<1x32xf32, #tpu.memory_space<vmem>>, vector<1x32xf32>
    %196 = vector.broadcast %195 : vector<1x32xf32> to vector<128x32xf32>
    %197 = arith.addf %194, %196 : vector<128x32xf32>
    %198 = arith.addf %197, %67 : vector<128x32xf32>
    %cst_97 = arith.constant 5.000000e-01 : f32
    %199 = vector.broadcast %cst_97 : f32 to vector<128x32xf32>
    %200 = arith.mulf %198, %199 : vector<128x32xf32>
    %cst_98 = arith.constant 0.000000e+00 : f32
    %201 = vector.broadcast %cst_98 : f32 to vector<128x32xf32>
    %202 = arith.maximumf %200, %201 : vector<128x32xf32>
    %c1_i32_99 = arith.constant 1 : i32
    %203 = tpu.dynamic_rotate %202 by %c1_i32_99 dim 0 : vector<128x32xf32>, i32 -> vector<128x32xf32>
    %204 = tpu.iota {dimensions = array<i32: 0>} : vector<128x32xi32>
    %c64_i32_100 = arith.constant 64 : i32
    %c0_i32_101 = arith.constant 0 : i32
    %205 = arith.cmpi eq, %c64_i32_100, %c0_i32_101 : i32
    %c1_i32_102 = arith.constant 1 : i32
    %206 = arith.select %205, %c1_i32_102, %c64_i32_100 : i32
    %207 = vector.broadcast %206 : i32 to vector<128x32xi32>
    %208 = arith.remsi %204, %207 : vector<128x32xi32>
    %c0_i32_103 = arith.constant 0 : i32
    %209 = vector.broadcast %c0_i32_103 : i32 to vector<128x32xi32>
    %210 = arith.cmpi ne, %208, %209 : vector<128x32xi32>
    %c0_i32_104 = arith.constant 0 : i32
    %211 = vector.broadcast %c0_i32_104 : i32 to vector<128x32xi32>
    %212 = arith.cmpi slt, %208, %211 : vector<128x32xi32>
    %c0_i32_105 = arith.constant 0 : i32
    %213 = arith.cmpi slt, %206, %c0_i32_105 : i32
    %214 = vector.broadcast %213 : i1 to vector<128x32xi1>
    %215 = vector.broadcast %214 : vector<128x32xi1> to vector<128x32xi1>
    %216 = arith.xori %212, %215 : vector<128x32xi1>
    %217 = arith.andi %216, %210 : vector<128x32xi1>
    %218 = vector.broadcast %206 : i32 to vector<128x32xi32>
    %219 = arith.addi %208, %218 : vector<128x32xi32>
    %220 = arith.select %217, %219, %208 : vector<128x32xi1>, vector<128x32xi32>
    %c0_i32_106 = arith.constant 0 : i32
    %221 = vector.broadcast %c0_i32_106 : i32 to vector<128x32xi32>
    %222 = arith.cmpi eq, %220, %221 : vector<128x32xi32>
    %cst_107 = arith.constant 0.000000e+00 : f32
    %223 = vector.broadcast %cst_107 : f32 to vector<128x32xf32>
    %224 = arith.select %222, %223, %203 : vector<128x32xi1>, vector<128x32xf32>
    %225 = arith.maximumf %224, %202 : vector<128x32xf32>
    %c127_i32_108 = arith.constant 127 : i32
    %226 = tpu.dynamic_rotate %202 by %c127_i32_108 dim 0 : vector<128x32xf32>, i32 -> vector<128x32xf32>
    %227 = tpu.iota {dimensions = array<i32: 0>} : vector<128x32xi32>
    %c64_i32_109 = arith.constant 64 : i32
    %c0_i32_110 = arith.constant 0 : i32
    %228 = arith.cmpi eq, %c64_i32_109, %c0_i32_110 : i32
    %c1_i32_111 = arith.constant 1 : i32
    %229 = arith.select %228, %c1_i32_111, %c64_i32_109 : i32
    %230 = vector.broadcast %229 : i32 to vector<128x32xi32>
    %231 = arith.remsi %227, %230 : vector<128x32xi32>
    %c0_i32_112 = arith.constant 0 : i32
    %232 = vector.broadcast %c0_i32_112 : i32 to vector<128x32xi32>
    %233 = arith.cmpi ne, %231, %232 : vector<128x32xi32>
    %c0_i32_113 = arith.constant 0 : i32
    %234 = vector.broadcast %c0_i32_113 : i32 to vector<128x32xi32>
    %235 = arith.cmpi slt, %231, %234 : vector<128x32xi32>
    %c0_i32_114 = arith.constant 0 : i32
    %236 = arith.cmpi slt, %229, %c0_i32_114 : i32
    %237 = vector.broadcast %236 : i1 to vector<128x32xi1>
    %238 = vector.broadcast %237 : vector<128x32xi1> to vector<128x32xi1>
    %239 = arith.xori %235, %238 : vector<128x32xi1>
    %240 = arith.andi %239, %233 : vector<128x32xi1>
    %241 = vector.broadcast %229 : i32 to vector<128x32xi32>
    %242 = arith.addi %231, %241 : vector<128x32xi32>
    %243 = arith.select %240, %242, %231 : vector<128x32xi1>, vector<128x32xi32>
    %c63_i32_115 = arith.constant 63 : i32
    %244 = vector.broadcast %c63_i32_115 : i32 to vector<128x32xi32>
    %245 = arith.cmpi eq, %243, %244 : vector<128x32xi32>
    %cst_116 = arith.constant 0.000000e+00 : f32
    %246 = vector.broadcast %cst_116 : f32 to vector<128x32xf32>
    %247 = arith.select %245, %246, %226 : vector<128x32xi1>, vector<128x32xf32>
    %248 = arith.maximumf %225, %247 : vector<128x32xf32>
    %249 = vector.shape_cast %248 : vector<128x32xf32> to vector<64x2x32xf32>
    %250 = vector.extract_strided_slice %249 {offsets = [0, 0, 0], sizes = [64, 1, 32], strides = [1, 1, 1]} : vector<64x2x32xf32> to vector<64x1x32xf32>
    %251 = vector.shape_cast %250 : vector<64x1x32xf32> to vector<64x32xf32>
    %252 = arith.truncf %251 : vector<64x32xf32> to vector<64x32xbf16>
    %c1_i32_117 = arith.constant 1 : i32
    %253 = tpu.dynamic_rotate %251 by %c1_i32_117 dim 0 : vector<64x32xf32>, i32 -> vector<64x32xf32>
    %254 = tpu.iota {dimensions = array<i32: 0>} : vector<64x32xi32>
    %c32_i32 = arith.constant 32 : i32
    %c0_i32_118 = arith.constant 0 : i32
    %255 = arith.cmpi eq, %c32_i32, %c0_i32_118 : i32
    %c1_i32_119 = arith.constant 1 : i32
    %256 = arith.select %255, %c1_i32_119, %c32_i32 : i32
    %257 = vector.broadcast %256 : i32 to vector<64x32xi32>
    %258 = arith.remsi %254, %257 : vector<64x32xi32>
    %c0_i32_120 = arith.constant 0 : i32
    %259 = vector.broadcast %c0_i32_120 : i32 to vector<64x32xi32>
    %260 = arith.cmpi ne, %258, %259 : vector<64x32xi32>
    %c0_i32_121 = arith.constant 0 : i32
    %261 = vector.broadcast %c0_i32_121 : i32 to vector<64x32xi32>
    %262 = arith.cmpi slt, %258, %261 : vector<64x32xi32>
    %c0_i32_122 = arith.constant 0 : i32
    %263 = arith.cmpi slt, %256, %c0_i32_122 : i32
    %264 = vector.broadcast %263 : i1 to vector<64x32xi1>
    %265 = vector.broadcast %264 : vector<64x32xi1> to vector<64x32xi1>
    %266 = arith.xori %262, %265 : vector<64x32xi1>
    %267 = arith.andi %266, %260 : vector<64x32xi1>
    %268 = vector.broadcast %256 : i32 to vector<64x32xi32>
    %269 = arith.addi %258, %268 : vector<64x32xi32>
    %270 = arith.select %267, %269, %258 : vector<64x32xi1>, vector<64x32xi32>
    %c0_i32_123 = arith.constant 0 : i32
    %271 = vector.broadcast %c0_i32_123 : i32 to vector<64x32xi32>
    %272 = arith.cmpi eq, %270, %271 : vector<64x32xi32>
    %cst_124 = arith.constant 0.000000e+00 : f32
    %273 = vector.broadcast %cst_124 : f32 to vector<64x32xf32>
    %274 = arith.select %272, %273, %253 : vector<64x32xi1>, vector<64x32xf32>
    %275 = arith.truncf %274 : vector<64x32xf32> to vector<64x32xbf16>
    %c63_i32_125 = arith.constant 63 : i32
    %276 = tpu.dynamic_rotate %251 by %c63_i32_125 dim 0 : vector<64x32xf32>, i32 -> vector<64x32xf32>
    %277 = tpu.iota {dimensions = array<i32: 0>} : vector<64x32xi32>
    %c32_i32_126 = arith.constant 32 : i32
    %c0_i32_127 = arith.constant 0 : i32
    %278 = arith.cmpi eq, %c32_i32_126, %c0_i32_127 : i32
    %c1_i32_128 = arith.constant 1 : i32
    %279 = arith.select %278, %c1_i32_128, %c32_i32_126 : i32
    %280 = vector.broadcast %279 : i32 to vector<64x32xi32>
    %281 = arith.remsi %277, %280 : vector<64x32xi32>
    %c0_i32_129 = arith.constant 0 : i32
    %282 = vector.broadcast %c0_i32_129 : i32 to vector<64x32xi32>
    %283 = arith.cmpi ne, %281, %282 : vector<64x32xi32>
    %c0_i32_130 = arith.constant 0 : i32
    %284 = vector.broadcast %c0_i32_130 : i32 to vector<64x32xi32>
    %285 = arith.cmpi slt, %281, %284 : vector<64x32xi32>
    %c0_i32_131 = arith.constant 0 : i32
    %286 = arith.cmpi slt, %279, %c0_i32_131 : i32
    %287 = vector.broadcast %286 : i1 to vector<64x32xi1>
    %288 = vector.broadcast %287 : vector<64x32xi1> to vector<64x32xi1>
    %289 = arith.xori %285, %288 : vector<64x32xi1>
    %290 = arith.andi %289, %283 : vector<64x32xi1>
    %291 = vector.broadcast %279 : i32 to vector<64x32xi32>
    %292 = arith.addi %281, %291 : vector<64x32xi32>
    %293 = arith.select %290, %292, %281 : vector<64x32xi1>, vector<64x32xi32>
    %c31_i32 = arith.constant 31 : i32
    %294 = vector.broadcast %c31_i32 : i32 to vector<64x32xi32>
    %295 = arith.cmpi eq, %293, %294 : vector<64x32xi32>
    %cst_132 = arith.constant 0.000000e+00 : f32
    %296 = vector.broadcast %cst_132 : f32 to vector<64x32xf32>
    %297 = arith.select %295, %296, %276 : vector<64x32xi1>, vector<64x32xf32>
    %298 = arith.truncf %297 : vector<64x32xf32> to vector<64x32xbf16>
    %c1_133 = arith.constant 1 : index
    %c0_134 = arith.constant 0 : index
    %c0_135 = arith.constant 0 : index
    %299 = vector.load %arg14[%c1_133, %c0_134, %c0_135] : memref<3x32x64xbf16, #tpu.memory_space<vmem>>, vector<1x32x64xbf16>
    %300 = vector.shape_cast %299 : vector<1x32x64xbf16> to vector<32x64xbf16>
    %cst_136 = arith.constant dense<0.000000e+00> : vector<64x64xf32>
    %301 = tpu.matmul %252, %300, %cst_136 {dimension_numbers = #tpu.dot_dimension_numbers<[1], [0], [0], [1], [0, 0, 1, 1], [], []>} : vector<64x32xbf16>, vector<32x64xbf16>, vector<64x64xf32> -> vector<64x64xf32>
    %c0_137 = arith.constant 0 : index
    %c0_138 = arith.constant 0 : index
    %c0_139 = arith.constant 0 : index
    %302 = vector.load %arg14[%c0_137, %c0_138, %c0_139] : memref<3x32x64xbf16, #tpu.memory_space<vmem>>, vector<1x32x64xbf16>
    %303 = vector.shape_cast %302 : vector<1x32x64xbf16> to vector<32x64xbf16>
    %cst_140 = arith.constant dense<0.000000e+00> : vector<64x64xf32>
    %304 = tpu.matmul %275, %303, %cst_140 {dimension_numbers = #tpu.dot_dimension_numbers<[1], [0], [0], [1], [0, 0, 1, 1], [], []>} : vector<64x32xbf16>, vector<32x64xbf16>, vector<64x64xf32> -> vector<64x64xf32>
    %305 = arith.addf %301, %304 : vector<64x64xf32>
    %c2_141 = arith.constant 2 : index
    %c0_142 = arith.constant 0 : index
    %c0_143 = arith.constant 0 : index
    %306 = vector.load %arg14[%c2_141, %c0_142, %c0_143] : memref<3x32x64xbf16, #tpu.memory_space<vmem>>, vector<1x32x64xbf16>
    %307 = vector.shape_cast %306 : vector<1x32x64xbf16> to vector<32x64xbf16>
    %cst_144 = arith.constant dense<0.000000e+00> : vector<64x64xf32>
    %308 = tpu.matmul %298, %307, %cst_144 {dimension_numbers = #tpu.dot_dimension_numbers<[1], [0], [0], [1], [0, 0, 1, 1], [], []>} : vector<64x32xbf16>, vector<32x64xbf16>, vector<64x64xf32> -> vector<64x64xf32>
    %309 = arith.addf %305, %308 : vector<64x64xf32>
    %c0_145 = arith.constant 0 : index
    %c0_146 = arith.constant 0 : index
    %310 = vector.load %arg15[%c0_145, %c0_146] : memref<1x64xf32, #tpu.memory_space<vmem>>, vector<1x64xf32>
    %311 = vector.broadcast %310 : vector<1x64xf32> to vector<64x64xf32>
    %312 = arith.mulf %309, %311 : vector<64x64xf32>
    %c0_147 = arith.constant 0 : index
    %c0_148 = arith.constant 0 : index
    %313 = vector.load %arg16[%c0_147, %c0_148] : memref<1x64xf32, #tpu.memory_space<vmem>>, vector<1x64xf32>
    %314 = vector.broadcast %313 : vector<1x64xf32> to vector<64x64xf32>
    %315 = arith.addf %312, %314 : vector<64x64xf32>
    %cst_149 = arith.constant 0.000000e+00 : f32
    %316 = vector.broadcast %cst_149 : f32 to vector<64x64xf32>
    %317 = arith.maximumf %315, %316 : vector<64x64xf32>
    %318 = arith.truncf %317 : vector<64x64xf32> to vector<64x64xbf16>
    %c1_i32_150 = arith.constant 1 : i32
    %319 = tpu.dynamic_rotate %317 by %c1_i32_150 dim 0 : vector<64x64xf32>, i32 -> vector<64x64xf32>
    %320 = tpu.iota {dimensions = array<i32: 0>} : vector<64x64xi32>
    %c32_i32_151 = arith.constant 32 : i32
    %c0_i32_152 = arith.constant 0 : i32
    %321 = arith.cmpi eq, %c32_i32_151, %c0_i32_152 : i32
    %c1_i32_153 = arith.constant 1 : i32
    %322 = arith.select %321, %c1_i32_153, %c32_i32_151 : i32
    %323 = vector.broadcast %322 : i32 to vector<64x64xi32>
    %324 = arith.remsi %320, %323 : vector<64x64xi32>
    %c0_i32_154 = arith.constant 0 : i32
    %325 = vector.broadcast %c0_i32_154 : i32 to vector<64x64xi32>
    %326 = arith.cmpi ne, %324, %325 : vector<64x64xi32>
    %c0_i32_155 = arith.constant 0 : i32
    %327 = vector.broadcast %c0_i32_155 : i32 to vector<64x64xi32>
    %328 = arith.cmpi slt, %324, %327 : vector<64x64xi32>
    %c0_i32_156 = arith.constant 0 : i32
    %329 = arith.cmpi slt, %322, %c0_i32_156 : i32
    %330 = vector.broadcast %329 : i1 to vector<64x64xi1>
    %331 = vector.broadcast %330 : vector<64x64xi1> to vector<64x64xi1>
    %332 = arith.xori %328, %331 : vector<64x64xi1>
    %333 = arith.andi %332, %326 : vector<64x64xi1>
    %334 = vector.broadcast %322 : i32 to vector<64x64xi32>
    %335 = arith.addi %324, %334 : vector<64x64xi32>
    %336 = arith.select %333, %335, %324 : vector<64x64xi1>, vector<64x64xi32>
    %c0_i32_157 = arith.constant 0 : i32
    %337 = vector.broadcast %c0_i32_157 : i32 to vector<64x64xi32>
    %338 = arith.cmpi eq, %336, %337 : vector<64x64xi32>
    %cst_158 = arith.constant 0.000000e+00 : f32
    %339 = vector.broadcast %cst_158 : f32 to vector<64x64xf32>
    %340 = arith.select %338, %339, %319 : vector<64x64xi1>, vector<64x64xf32>
    %341 = arith.truncf %340 : vector<64x64xf32> to vector<64x64xbf16>
    %c63_i32_159 = arith.constant 63 : i32
    %342 = tpu.dynamic_rotate %317 by %c63_i32_159 dim 0 : vector<64x64xf32>, i32 -> vector<64x64xf32>
    %343 = tpu.iota {dimensions = array<i32: 0>} : vector<64x64xi32>
    %c32_i32_160 = arith.constant 32 : i32
    %c0_i32_161 = arith.constant 0 : i32
    %344 = arith.cmpi eq, %c32_i32_160, %c0_i32_161 : i32
    %c1_i32_162 = arith.constant 1 : i32
    %345 = arith.select %344, %c1_i32_162, %c32_i32_160 : i32
    %346 = vector.broadcast %345 : i32 to vector<64x64xi32>
    %347 = arith.remsi %343, %346 : vector<64x64xi32>
    %c0_i32_163 = arith.constant 0 : i32
    %348 = vector.broadcast %c0_i32_163 : i32 to vector<64x64xi32>
    %349 = arith.cmpi ne, %347, %348 : vector<64x64xi32>
    %c0_i32_164 = arith.constant 0 : i32
    %350 = vector.broadcast %c0_i32_164 : i32 to vector<64x64xi32>
    %351 = arith.cmpi slt, %347, %350 : vector<64x64xi32>
    %c0_i32_165 = arith.constant 0 : i32
    %352 = arith.cmpi slt, %345, %c0_i32_165 : i32
    %353 = vector.broadcast %352 : i1 to vector<64x64xi1>
    %354 = vector.broadcast %353 : vector<64x64xi1> to vector<64x64xi1>
    %355 = arith.xori %351, %354 : vector<64x64xi1>
    %356 = arith.andi %355, %349 : vector<64x64xi1>
    %357 = vector.broadcast %345 : i32 to vector<64x64xi32>
    %358 = arith.addi %347, %357 : vector<64x64xi32>
    %359 = arith.select %356, %358, %347 : vector<64x64xi1>, vector<64x64xi32>
    %c31_i32_166 = arith.constant 31 : i32
    %360 = vector.broadcast %c31_i32_166 : i32 to vector<64x64xi32>
    %361 = arith.cmpi eq, %359, %360 : vector<64x64xi32>
    %cst_167 = arith.constant 0.000000e+00 : f32
    %362 = vector.broadcast %cst_167 : f32 to vector<64x64xf32>
    %363 = arith.select %361, %362, %342 : vector<64x64xi1>, vector<64x64xf32>
    %364 = arith.truncf %363 : vector<64x64xf32> to vector<64x64xbf16>
    %c1_168 = arith.constant 1 : index
    %c0_169 = arith.constant 0 : index
    %c0_170 = arith.constant 0 : index
    %365 = vector.load %arg17[%c1_168, %c0_169, %c0_170] : memref<3x64x64xbf16, #tpu.memory_space<vmem>>, vector<1x64x64xbf16>
    %366 = vector.shape_cast %365 : vector<1x64x64xbf16> to vector<64x64xbf16>
    %cst_171 = arith.constant dense<0.000000e+00> : vector<64x64xf32>
    %367 = tpu.matmul %318, %366, %cst_171 {dimension_numbers = #tpu.dot_dimension_numbers<[1], [0], [0], [1], [0, 0, 1, 1], [], []>} : vector<64x64xbf16>, vector<64x64xbf16>, vector<64x64xf32> -> vector<64x64xf32>
    %c0_172 = arith.constant 0 : index
    %c0_173 = arith.constant 0 : index
    %c0_174 = arith.constant 0 : index
    %368 = vector.load %arg17[%c0_172, %c0_173, %c0_174] : memref<3x64x64xbf16, #tpu.memory_space<vmem>>, vector<1x64x64xbf16>
    %369 = vector.shape_cast %368 : vector<1x64x64xbf16> to vector<64x64xbf16>
    %cst_175 = arith.constant dense<0.000000e+00> : vector<64x64xf32>
    %370 = tpu.matmul %341, %369, %cst_175 {dimension_numbers = #tpu.dot_dimension_numbers<[1], [0], [0], [1], [0, 0, 1, 1], [], []>} : vector<64x64xbf16>, vector<64x64xbf16>, vector<64x64xf32> -> vector<64x64xf32>
    %371 = arith.addf %367, %370 : vector<64x64xf32>
    %c2_176 = arith.constant 2 : index
    %c0_177 = arith.constant 0 : index
    %c0_178 = arith.constant 0 : index
    %372 = vector.load %arg17[%c2_176, %c0_177, %c0_178] : memref<3x64x64xbf16, #tpu.memory_space<vmem>>, vector<1x64x64xbf16>
    %373 = vector.shape_cast %372 : vector<1x64x64xbf16> to vector<64x64xbf16>
    %cst_179 = arith.constant dense<0.000000e+00> : vector<64x64xf32>
    %374 = tpu.matmul %364, %373, %cst_179 {dimension_numbers = #tpu.dot_dimension_numbers<[1], [0], [0], [1], [0, 0, 1, 1], [], []>} : vector<64x64xbf16>, vector<64x64xbf16>, vector<64x64xf32> -> vector<64x64xf32>
    %375 = arith.addf %371, %374 : vector<64x64xf32>
    %c0_180 = arith.constant 0 : index
    %c0_181 = arith.constant 0 : index
    %376 = vector.load %arg18[%c0_180, %c0_181] : memref<1x64xf32, #tpu.memory_space<vmem>>, vector<1x64xf32>
    %377 = vector.broadcast %376 : vector<1x64xf32> to vector<64x64xf32>
    %378 = arith.mulf %375, %377 : vector<64x64xf32>
    %c0_182 = arith.constant 0 : index
    %c0_183 = arith.constant 0 : index
    %379 = vector.load %arg19[%c0_182, %c0_183] : memref<1x64xf32, #tpu.memory_space<vmem>>, vector<1x64xf32>
    %380 = vector.broadcast %379 : vector<1x64xf32> to vector<64x64xf32>
    %381 = arith.addf %378, %380 : vector<64x64xf32>
    %382 = arith.truncf %251 : vector<64x32xf32> to vector<64x32xbf16>
    %c1_i32_184 = arith.constant 1 : i32
    %383 = tpu.dynamic_rotate %251 by %c1_i32_184 dim 0 : vector<64x32xf32>, i32 -> vector<64x32xf32>
    %384 = tpu.iota {dimensions = array<i32: 0>} : vector<64x32xi32>
    %c32_i32_185 = arith.constant 32 : i32
    %c0_i32_186 = arith.constant 0 : i32
    %385 = arith.cmpi eq, %c32_i32_185, %c0_i32_186 : i32
    %c1_i32_187 = arith.constant 1 : i32
    %386 = arith.select %385, %c1_i32_187, %c32_i32_185 : i32
    %387 = vector.broadcast %386 : i32 to vector<64x32xi32>
    %388 = arith.remsi %384, %387 : vector<64x32xi32>
    %c0_i32_188 = arith.constant 0 : i32
    %389 = vector.broadcast %c0_i32_188 : i32 to vector<64x32xi32>
    %390 = arith.cmpi ne, %388, %389 : vector<64x32xi32>
    %c0_i32_189 = arith.constant 0 : i32
    %391 = vector.broadcast %c0_i32_189 : i32 to vector<64x32xi32>
    %392 = arith.cmpi slt, %388, %391 : vector<64x32xi32>
    %c0_i32_190 = arith.constant 0 : i32
    %393 = arith.cmpi slt, %386, %c0_i32_190 : i32
    %394 = vector.broadcast %393 : i1 to vector<64x32xi1>
    %395 = vector.broadcast %394 : vector<64x32xi1> to vector<64x32xi1>
    %396 = arith.xori %392, %395 : vector<64x32xi1>
    %397 = arith.andi %396, %390 : vector<64x32xi1>
    %398 = vector.broadcast %386 : i32 to vector<64x32xi32>
    %399 = arith.addi %388, %398 : vector<64x32xi32>
    %400 = arith.select %397, %399, %388 : vector<64x32xi1>, vector<64x32xi32>
    %c0_i32_191 = arith.constant 0 : i32
    %401 = vector.broadcast %c0_i32_191 : i32 to vector<64x32xi32>
    %402 = arith.cmpi eq, %400, %401 : vector<64x32xi32>
    %cst_192 = arith.constant 0.000000e+00 : f32
    %403 = vector.broadcast %cst_192 : f32 to vector<64x32xf32>
    %404 = arith.select %402, %403, %383 : vector<64x32xi1>, vector<64x32xf32>
    %405 = arith.truncf %404 : vector<64x32xf32> to vector<64x32xbf16>
    %c63_i32_193 = arith.constant 63 : i32
    %406 = tpu.dynamic_rotate %251 by %c63_i32_193 dim 0 : vector<64x32xf32>, i32 -> vector<64x32xf32>
    %407 = tpu.iota {dimensions = array<i32: 0>} : vector<64x32xi32>
    %c32_i32_194 = arith.constant 32 : i32
    %c0_i32_195 = arith.constant 0 : i32
    %408 = arith.cmpi eq, %c32_i32_194, %c0_i32_195 : i32
    %c1_i32_196 = arith.constant 1 : i32
    %409 = arith.select %408, %c1_i32_196, %c32_i32_194 : i32
    %410 = vector.broadcast %409 : i32 to vector<64x32xi32>
    %411 = arith.remsi %407, %410 : vector<64x32xi32>
    %c0_i32_197 = arith.constant 0 : i32
    %412 = vector.broadcast %c0_i32_197 : i32 to vector<64x32xi32>
    %413 = arith.cmpi ne, %411, %412 : vector<64x32xi32>
    %c0_i32_198 = arith.constant 0 : i32
    %414 = vector.broadcast %c0_i32_198 : i32 to vector<64x32xi32>
    %415 = arith.cmpi slt, %411, %414 : vector<64x32xi32>
    %c0_i32_199 = arith.constant 0 : i32
    %416 = arith.cmpi slt, %409, %c0_i32_199 : i32
    %417 = vector.broadcast %416 : i1 to vector<64x32xi1>
    %418 = vector.broadcast %417 : vector<64x32xi1> to vector<64x32xi1>
    %419 = arith.xori %415, %418 : vector<64x32xi1>
    %420 = arith.andi %419, %413 : vector<64x32xi1>
    %421 = vector.broadcast %409 : i32 to vector<64x32xi32>
    %422 = arith.addi %411, %421 : vector<64x32xi32>
    %423 = arith.select %420, %422, %411 : vector<64x32xi1>, vector<64x32xi32>
    %c31_i32_200 = arith.constant 31 : i32
    %424 = vector.broadcast %c31_i32_200 : i32 to vector<64x32xi32>
    %425 = arith.cmpi eq, %423, %424 : vector<64x32xi32>
    %cst_201 = arith.constant 0.000000e+00 : f32
    %426 = vector.broadcast %cst_201 : f32 to vector<64x32xf32>
    %427 = arith.select %425, %426, %406 : vector<64x32xi1>, vector<64x32xf32>
    %428 = arith.truncf %427 : vector<64x32xf32> to vector<64x32xbf16>
    %c1_202 = arith.constant 1 : index
    %c0_203 = arith.constant 0 : index
    %c0_204 = arith.constant 0 : index
    %429 = vector.load %arg11[%c1_202, %c0_203, %c0_204] : memref<3x32x64xbf16, #tpu.memory_space<vmem>>, vector<1x32x64xbf16>
    %430 = vector.shape_cast %429 : vector<1x32x64xbf16> to vector<32x64xbf16>
    %cst_205 = arith.constant dense<0.000000e+00> : vector<64x64xf32>
    %431 = tpu.matmul %382, %430, %cst_205 {dimension_numbers = #tpu.dot_dimension_numbers<[1], [0], [0], [1], [0, 0, 1, 1], [], []>} : vector<64x32xbf16>, vector<32x64xbf16>, vector<64x64xf32> -> vector<64x64xf32>
    %c0_206 = arith.constant 0 : index
    %c0_207 = arith.constant 0 : index
    %c0_208 = arith.constant 0 : index
    %432 = vector.load %arg11[%c0_206, %c0_207, %c0_208] : memref<3x32x64xbf16, #tpu.memory_space<vmem>>, vector<1x32x64xbf16>
    %433 = vector.shape_cast %432 : vector<1x32x64xbf16> to vector<32x64xbf16>
    %cst_209 = arith.constant dense<0.000000e+00> : vector<64x64xf32>
    %434 = tpu.matmul %405, %433, %cst_209 {dimension_numbers = #tpu.dot_dimension_numbers<[1], [0], [0], [1], [0, 0, 1, 1], [], []>} : vector<64x32xbf16>, vector<32x64xbf16>, vector<64x64xf32> -> vector<64x64xf32>
    %435 = arith.addf %431, %434 : vector<64x64xf32>
    %c2_210 = arith.constant 2 : index
    %c0_211 = arith.constant 0 : index
    %c0_212 = arith.constant 0 : index
    %436 = vector.load %arg11[%c2_210, %c0_211, %c0_212] : memref<3x32x64xbf16, #tpu.memory_space<vmem>>, vector<1x32x64xbf16>
    %437 = vector.shape_cast %436 : vector<1x32x64xbf16> to vector<32x64xbf16>
    %cst_213 = arith.constant dense<0.000000e+00> : vector<64x64xf32>
    %438 = tpu.matmul %428, %437, %cst_213 {dimension_numbers = #tpu.dot_dimension_numbers<[1], [0], [0], [1], [0, 0, 1, 1], [], []>} : vector<64x32xbf16>, vector<32x64xbf16>, vector<64x64xf32> -> vector<64x64xf32>
    %439 = arith.addf %435, %438 : vector<64x64xf32>
    %c0_214 = arith.constant 0 : index
    %c0_215 = arith.constant 0 : index
    %440 = vector.load %arg12[%c0_214, %c0_215] : memref<1x64xf32, #tpu.memory_space<vmem>>, vector<1x64xf32>
    %441 = vector.broadcast %440 : vector<1x64xf32> to vector<64x64xf32>
    %442 = arith.mulf %439, %441 : vector<64x64xf32>
    %c0_216 = arith.constant 0 : index
    %c0_217 = arith.constant 0 : index
    %443 = vector.load %arg13[%c0_216, %c0_217] : memref<1x64xf32, #tpu.memory_space<vmem>>, vector<1x64xf32>
    %444 = vector.broadcast %443 : vector<1x64xf32> to vector<64x64xf32>
    %445 = arith.addf %442, %444 : vector<64x64xf32>
    %446 = arith.addf %381, %445 : vector<64x64xf32>
    %cst_218 = arith.constant 5.000000e-01 : f32
    %447 = vector.broadcast %cst_218 : f32 to vector<64x64xf32>
    %448 = arith.mulf %446, %447 : vector<64x64xf32>
    %cst_219 = arith.constant 0.000000e+00 : f32
    %449 = vector.broadcast %cst_219 : f32 to vector<64x64xf32>
    %450 = arith.maximumf %448, %449 : vector<64x64xf32>
    %c1_i32_220 = arith.constant 1 : i32
    %451 = tpu.dynamic_rotate %450 by %c1_i32_220 dim 0 : vector<64x64xf32>, i32 -> vector<64x64xf32>
    %452 = tpu.iota {dimensions = array<i32: 0>} : vector<64x64xi32>
    %c32_i32_221 = arith.constant 32 : i32
    %c0_i32_222 = arith.constant 0 : i32
    %453 = arith.cmpi eq, %c32_i32_221, %c0_i32_222 : i32
    %c1_i32_223 = arith.constant 1 : i32
    %454 = arith.select %453, %c1_i32_223, %c32_i32_221 : i32
    %455 = vector.broadcast %454 : i32 to vector<64x64xi32>
    %456 = arith.remsi %452, %455 : vector<64x64xi32>
    %c0_i32_224 = arith.constant 0 : i32
    %457 = vector.broadcast %c0_i32_224 : i32 to vector<64x64xi32>
    %458 = arith.cmpi ne, %456, %457 : vector<64x64xi32>
    %c0_i32_225 = arith.constant 0 : i32
    %459 = vector.broadcast %c0_i32_225 : i32 to vector<64x64xi32>
    %460 = arith.cmpi slt, %456, %459 : vector<64x64xi32>
    %c0_i32_226 = arith.constant 0 : i32
    %461 = arith.cmpi slt, %454, %c0_i32_226 : i32
    %462 = vector.broadcast %461 : i1 to vector<64x64xi1>
    %463 = vector.broadcast %462 : vector<64x64xi1> to vector<64x64xi1>
    %464 = arith.xori %460, %463 : vector<64x64xi1>
    %465 = arith.andi %464, %458 : vector<64x64xi1>
    %466 = vector.broadcast %454 : i32 to vector<64x64xi32>
    %467 = arith.addi %456, %466 : vector<64x64xi32>
    %468 = arith.select %465, %467, %456 : vector<64x64xi1>, vector<64x64xi32>
    %c0_i32_227 = arith.constant 0 : i32
    %469 = vector.broadcast %c0_i32_227 : i32 to vector<64x64xi32>
    %470 = arith.cmpi eq, %468, %469 : vector<64x64xi32>
    %cst_228 = arith.constant 0.000000e+00 : f32
    %471 = vector.broadcast %cst_228 : f32 to vector<64x64xf32>
    %472 = arith.select %470, %471, %451 : vector<64x64xi1>, vector<64x64xf32>
    %473 = arith.maximumf %472, %450 : vector<64x64xf32>
    %c63_i32_229 = arith.constant 63 : i32
    %474 = tpu.dynamic_rotate %450 by %c63_i32_229 dim 0 : vector<64x64xf32>, i32 -> vector<64x64xf32>
    %475 = tpu.iota {dimensions = array<i32: 0>} : vector<64x64xi32>
    %c32_i32_230 = arith.constant 32 : i32
    %c0_i32_231 = arith.constant 0 : i32
    %476 = arith.cmpi eq, %c32_i32_230, %c0_i32_231 : i32
    %c1_i32_232 = arith.constant 1 : i32
    %477 = arith.select %476, %c1_i32_232, %c32_i32_230 : i32
    %478 = vector.broadcast %477 : i32 to vector<64x64xi32>
    %479 = arith.remsi %475, %478 : vector<64x64xi32>
    %c0_i32_233 = arith.constant 0 : i32
    %480 = vector.broadcast %c0_i32_233 : i32 to vector<64x64xi32>
    %481 = arith.cmpi ne, %479, %480 : vector<64x64xi32>
    %c0_i32_234 = arith.constant 0 : i32
    %482 = vector.broadcast %c0_i32_234 : i32 to vector<64x64xi32>
    %483 = arith.cmpi slt, %479, %482 : vector<64x64xi32>
    %c0_i32_235 = arith.constant 0 : i32
    %484 = arith.cmpi slt, %477, %c0_i32_235 : i32
    %485 = vector.broadcast %484 : i1 to vector<64x64xi1>
    %486 = vector.broadcast %485 : vector<64x64xi1> to vector<64x64xi1>
    %487 = arith.xori %483, %486 : vector<64x64xi1>
    %488 = arith.andi %487, %481 : vector<64x64xi1>
    %489 = vector.broadcast %477 : i32 to vector<64x64xi32>
    %490 = arith.addi %479, %489 : vector<64x64xi32>
    %491 = arith.select %488, %490, %479 : vector<64x64xi1>, vector<64x64xi32>
    %c31_i32_236 = arith.constant 31 : i32
    %492 = vector.broadcast %c31_i32_236 : i32 to vector<64x64xi32>
    %493 = arith.cmpi eq, %491, %492 : vector<64x64xi32>
    %cst_237 = arith.constant 0.000000e+00 : f32
    %494 = vector.broadcast %cst_237 : f32 to vector<64x64xf32>
    %495 = arith.select %493, %494, %474 : vector<64x64xi1>, vector<64x64xf32>
    %496 = arith.maximumf %473, %495 : vector<64x64xf32>
    %497 = vector.shape_cast %496 : vector<64x64xf32> to vector<32x2x64xf32>
    %498 = vector.extract_strided_slice %497 {offsets = [0, 0, 0], sizes = [32, 1, 64], strides = [1, 1, 1]} : vector<32x2x64xf32> to vector<32x1x64xf32>
    %499 = vector.shape_cast %498 : vector<32x1x64xf32> to vector<32x64xf32>
    %c1_i32_238 = arith.constant 1 : i32
    %500 = tpu.dynamic_rotate %499 by %c1_i32_238 dim 0 : vector<32x64xf32>, i32 -> vector<32x64xf32>
    %501 = tpu.iota {dimensions = array<i32: 0>} : vector<32x64xi32>
    %c16_i32 = arith.constant 16 : i32
    %c0_i32_239 = arith.constant 0 : i32
    %502 = arith.cmpi eq, %c16_i32, %c0_i32_239 : i32
    %c1_i32_240 = arith.constant 1 : i32
    %503 = arith.select %502, %c1_i32_240, %c16_i32 : i32
    %504 = vector.broadcast %503 : i32 to vector<32x64xi32>
    %505 = arith.remsi %501, %504 : vector<32x64xi32>
    %c0_i32_241 = arith.constant 0 : i32
    %506 = vector.broadcast %c0_i32_241 : i32 to vector<32x64xi32>
    %507 = arith.cmpi ne, %505, %506 : vector<32x64xi32>
    %c0_i32_242 = arith.constant 0 : i32
    %508 = vector.broadcast %c0_i32_242 : i32 to vector<32x64xi32>
    %509 = arith.cmpi slt, %505, %508 : vector<32x64xi32>
    %c0_i32_243 = arith.constant 0 : i32
    %510 = arith.cmpi slt, %503, %c0_i32_243 : i32
    %511 = vector.broadcast %510 : i1 to vector<32x64xi1>
    %512 = vector.broadcast %511 : vector<32x64xi1> to vector<32x64xi1>
    %513 = arith.xori %509, %512 : vector<32x64xi1>
    %514 = arith.andi %513, %507 : vector<32x64xi1>
    %515 = vector.broadcast %503 : i32 to vector<32x64xi32>
    %516 = arith.addi %505, %515 : vector<32x64xi32>
    %517 = arith.select %514, %516, %505 : vector<32x64xi1>, vector<32x64xi32>
    %c0_i32_244 = arith.constant 0 : i32
    %518 = vector.broadcast %c0_i32_244 : i32 to vector<32x64xi32>
    %519 = arith.cmpi eq, %517, %518 : vector<32x64xi32>
    %cst_245 = arith.constant 0.000000e+00 : f32
    %520 = vector.broadcast %cst_245 : f32 to vector<32x64xf32>
    %521 = arith.select %519, %520, %500 : vector<32x64xi1>, vector<32x64xf32>
    %522 = arith.maximumf %521, %499 : vector<32x64xf32>
    %c31_i32_246 = arith.constant 31 : i32
    %523 = tpu.dynamic_rotate %499 by %c31_i32_246 dim 0 : vector<32x64xf32>, i32 -> vector<32x64xf32>
    %524 = tpu.iota {dimensions = array<i32: 0>} : vector<32x64xi32>
    %c16_i32_247 = arith.constant 16 : i32
    %c0_i32_248 = arith.constant 0 : i32
    %525 = arith.cmpi eq, %c16_i32_247, %c0_i32_248 : i32
    %c1_i32_249 = arith.constant 1 : i32
    %526 = arith.select %525, %c1_i32_249, %c16_i32_247 : i32
    %527 = vector.broadcast %526 : i32 to vector<32x64xi32>
    %528 = arith.remsi %524, %527 : vector<32x64xi32>
    %c0_i32_250 = arith.constant 0 : i32
    %529 = vector.broadcast %c0_i32_250 : i32 to vector<32x64xi32>
    %530 = arith.cmpi ne, %528, %529 : vector<32x64xi32>
    %c0_i32_251 = arith.constant 0 : i32
    %531 = vector.broadcast %c0_i32_251 : i32 to vector<32x64xi32>
    %532 = arith.cmpi slt, %528, %531 : vector<32x64xi32>
    %c0_i32_252 = arith.constant 0 : i32
    %533 = arith.cmpi slt, %526, %c0_i32_252 : i32
    %534 = vector.broadcast %533 : i1 to vector<32x64xi1>
    %535 = vector.broadcast %534 : vector<32x64xi1> to vector<32x64xi1>
    %536 = arith.xori %532, %535 : vector<32x64xi1>
    %537 = arith.andi %536, %530 : vector<32x64xi1>
    %538 = vector.broadcast %526 : i32 to vector<32x64xi32>
    %539 = arith.addi %528, %538 : vector<32x64xi32>
    %540 = arith.select %537, %539, %528 : vector<32x64xi1>, vector<32x64xi32>
    %c15_i32 = arith.constant 15 : i32
    %541 = vector.broadcast %c15_i32 : i32 to vector<32x64xi32>
    %542 = arith.cmpi eq, %540, %541 : vector<32x64xi32>
    %cst_253 = arith.constant 0.000000e+00 : f32
    %543 = vector.broadcast %cst_253 : f32 to vector<32x64xf32>
    %544 = arith.select %542, %543, %523 : vector<32x64xi1>, vector<32x64xf32>
    %545 = arith.maximumf %522, %544 : vector<32x64xf32>
    %546 = vector.shape_cast %545 : vector<32x64xf32> to vector<16x2x64xf32>
    %547 = vector.extract_strided_slice %546 {offsets = [0, 0, 0], sizes = [16, 1, 64], strides = [1, 1, 1]} : vector<16x2x64xf32> to vector<16x1x64xf32>
    %548 = vector.shape_cast %547 : vector<16x1x64xf32> to vector<16x64xf32>
    %c1_i32_254 = arith.constant 1 : i32
    %549 = tpu.dynamic_rotate %548 by %c1_i32_254 dim 0 : vector<16x64xf32>, i32 -> vector<16x64xf32>
    %550 = tpu.iota {dimensions = array<i32: 0>} : vector<16x64xi32>
    %c8_i32 = arith.constant 8 : i32
    %c0_i32_255 = arith.constant 0 : i32
    %551 = arith.cmpi eq, %c8_i32, %c0_i32_255 : i32
    %c1_i32_256 = arith.constant 1 : i32
    %552 = arith.select %551, %c1_i32_256, %c8_i32 : i32
    %553 = vector.broadcast %552 : i32 to vector<16x64xi32>
    %554 = arith.remsi %550, %553 : vector<16x64xi32>
    %c0_i32_257 = arith.constant 0 : i32
    %555 = vector.broadcast %c0_i32_257 : i32 to vector<16x64xi32>
    %556 = arith.cmpi ne, %554, %555 : vector<16x64xi32>
    %c0_i32_258 = arith.constant 0 : i32
    %557 = vector.broadcast %c0_i32_258 : i32 to vector<16x64xi32>
    %558 = arith.cmpi slt, %554, %557 : vector<16x64xi32>
    %c0_i32_259 = arith.constant 0 : i32
    %559 = arith.cmpi slt, %552, %c0_i32_259 : i32
    %560 = vector.broadcast %559 : i1 to vector<16x64xi1>
    %561 = vector.broadcast %560 : vector<16x64xi1> to vector<16x64xi1>
    %562 = arith.xori %558, %561 : vector<16x64xi1>
    %563 = arith.andi %562, %556 : vector<16x64xi1>
    %564 = vector.broadcast %552 : i32 to vector<16x64xi32>
    %565 = arith.addi %554, %564 : vector<16x64xi32>
    %566 = arith.select %563, %565, %554 : vector<16x64xi1>, vector<16x64xi32>
    %c0_i32_260 = arith.constant 0 : i32
    %567 = vector.broadcast %c0_i32_260 : i32 to vector<16x64xi32>
    %568 = arith.cmpi eq, %566, %567 : vector<16x64xi32>
    %cst_261 = arith.constant 0.000000e+00 : f32
    %569 = vector.broadcast %cst_261 : f32 to vector<16x64xf32>
    %570 = arith.select %568, %569, %549 : vector<16x64xi1>, vector<16x64xf32>
    %571 = arith.maximumf %570, %548 : vector<16x64xf32>
    %c15_i32_262 = arith.constant 15 : i32
    %572 = tpu.dynamic_rotate %548 by %c15_i32_262 dim 0 : vector<16x64xf32>, i32 -> vector<16x64xf32>
    %573 = tpu.iota {dimensions = array<i32: 0>} : vector<16x64xi32>
    %c8_i32_263 = arith.constant 8 : i32
    %c0_i32_264 = arith.constant 0 : i32
    %574 = arith.cmpi eq, %c8_i32_263, %c0_i32_264 : i32
    %c1_i32_265 = arith.constant 1 : i32
    %575 = arith.select %574, %c1_i32_265, %c8_i32_263 : i32
    %576 = vector.broadcast %575 : i32 to vector<16x64xi32>
    %577 = arith.remsi %573, %576 : vector<16x64xi32>
    %c0_i32_266 = arith.constant 0 : i32
    %578 = vector.broadcast %c0_i32_266 : i32 to vector<16x64xi32>
    %579 = arith.cmpi ne, %577, %578 : vector<16x64xi32>
    %c0_i32_267 = arith.constant 0 : i32
    %580 = vector.broadcast %c0_i32_267 : i32 to vector<16x64xi32>
    %581 = arith.cmpi slt, %577, %580 : vector<16x64xi32>
    %c0_i32_268 = arith.constant 0 : i32
    %582 = arith.cmpi slt, %575, %c0_i32_268 : i32
    %583 = vector.broadcast %582 : i1 to vector<16x64xi1>
    %584 = vector.broadcast %583 : vector<16x64xi1> to vector<16x64xi1>
    %585 = arith.xori %581, %584 : vector<16x64xi1>
    %586 = arith.andi %585, %579 : vector<16x64xi1>
    %587 = vector.broadcast %575 : i32 to vector<16x64xi32>
    %588 = arith.addi %577, %587 : vector<16x64xi32>
    %589 = arith.select %586, %588, %577 : vector<16x64xi1>, vector<16x64xi32>
    %c7_i32 = arith.constant 7 : i32
    %590 = vector.broadcast %c7_i32 : i32 to vector<16x64xi32>
    %591 = arith.cmpi eq, %589, %590 : vector<16x64xi32>
    %cst_269 = arith.constant 0.000000e+00 : f32
    %592 = vector.broadcast %cst_269 : f32 to vector<16x64xf32>
    %593 = arith.select %591, %592, %572 : vector<16x64xi1>, vector<16x64xf32>
    %594 = arith.maximumf %571, %593 : vector<16x64xf32>
    %595 = vector.shape_cast %594 : vector<16x64xf32> to vector<8x2x64xf32>
    %596 = vector.extract_strided_slice %595 {offsets = [0, 0, 0], sizes = [8, 1, 64], strides = [1, 1, 1]} : vector<8x2x64xf32> to vector<8x1x64xf32>
    %597 = vector.shape_cast %596 : vector<8x1x64xf32> to vector<8x64xf32>
    %598 = arith.truncf %597 : vector<8x64xf32> to vector<8x64xbf16>
    %c0_270 = arith.constant 0 : index
    %c0_271 = arith.constant 0 : index
    %599 = vector.load %arg20[%c0_270, %c0_271] : memref<8x64xbf16, #tpu.memory_space<vmem>>, vector<8x64xbf16>
    tpu.vector_store %arg20[%c0_270, %c0_271], %598 {strides = array<i32>} : memref<8x64xbf16, #tpu.memory_space<vmem>>, vector<8x64xbf16>,
    return
  }
  func.func @transform_0(%arg0: i32) -> (i32, i32) {
    %c0_i32 = arith.constant 0 : i32
    %c0_i32_0 = arith.constant 0 : i32
    return %arg0, %c0_i32 : i32, i32
  }
  func.func @transform_1(%arg0: i32) -> (i32, i32, i32) {
    %c0_i32 = arith.constant 0 : i32
    %c0_i32_0 = arith.constant 0 : i32
    %c0_i32_1 = arith.constant 0 : i32
    %c0_i32_2 = arith.constant 0 : i32
    return %c0_i32, %c0_i32_0, %c0_i32_1 : i32, i32, i32
  }
  func.func @transform_2(%arg0: i32) -> (i32, i32) {
    %c0_i32 = arith.constant 0 : i32
    %c0_i32_0 = arith.constant 0 : i32
    %c0_i32_1 = arith.constant 0 : i32
    return %c0_i32, %c0_i32_0 : i32, i32
  }
  func.func @transform_3(%arg0: i32) -> (i32, i32) {
    %c0_i32 = arith.constant 0 : i32
    %c0_i32_0 = arith.constant 0 : i32
    %c0_i32_1 = arith.constant 0 : i32
    return %c0_i32, %c0_i32_0 : i32, i32
  }
  func.func @transform_4(%arg0: i32) -> (i32, i32, i32) {
    %c0_i32 = arith.constant 0 : i32
    %c0_i32_0 = arith.constant 0 : i32
    %c0_i32_1 = arith.constant 0 : i32
    %c0_i32_2 = arith.constant 0 : i32
    return %c0_i32, %c0_i32_0, %c0_i32_1 : i32, i32, i32
  }
  func.func @transform_5(%arg0: i32) -> (i32, i32) {
    %c0_i32 = arith.constant 0 : i32
    %c0_i32_0 = arith.constant 0 : i32
    %c0_i32_1 = arith.constant 0 : i32
    return %c0_i32, %c0_i32_0 : i32, i32
  }
  func.func @transform_6(%arg0: i32) -> (i32, i32) {
    %c0_i32 = arith.constant 0 : i32
    %c0_i32_0 = arith.constant 0 : i32
    %c0_i32_1 = arith.constant 0 : i32
    return %c0_i32, %c0_i32_0 : i32, i32
  }
  func.func @transform_7(%arg0: i32) -> (i32, i32, i32) {
    %c0_i32 = arith.constant 0 : i32
    %c0_i32_0 = arith.constant 0 : i32
    %c0_i32_1 = arith.constant 0 : i32
    %c0_i32_2 = arith.constant 0 : i32
    return %c0_i32, %c0_i32_0, %c0_i32_1 : i32, i32, i32
  }
  func.func @transform_8(%arg0: i32) -> (i32, i32) {
    %c0_i32 = arith.constant 0 : i32
    %c0_i32_0 = arith.constant 0 : i32
    %c0_i32_1 = arith.constant 0 : i32
    return %c0_i32, %c0_i32_0 : i32, i32
  }
  func.func @transform_9(%arg0: i32) -> (i32, i32) {
    %c0_i32 = arith.constant 0 : i32
    %c0_i32_0 = arith.constant 0 : i32
    %c0_i32_1 = arith.constant 0 : i32
    return %c0_i32, %c0_i32_0 : i32, i32
  }
  func.func @transform_10(%arg0: i32) -> (i32, i32, i32) {
    %c0_i32 = arith.constant 0 : i32
    %c0_i32_0 = arith.constant 0 : i32
    %c0_i32_1 = arith.constant 0 : i32
    %c0_i32_2 = arith.constant 0 : i32
    return %c0_i32, %c0_i32_0, %c0_i32_1 : i32, i32, i32
  }
  func.func @transform_11(%arg0: i32) -> (i32, i32) {
    %c0_i32 = arith.constant 0 : i32
    %c0_i32_0 = arith.constant 0 : i32
    %c0_i32_1 = arith.constant 0 : i32
    return %c0_i32, %c0_i32_0 : i32, i32
  }
  func.func @transform_12(%arg0: i32) -> (i32, i32) {
    %c0_i32 = arith.constant 0 : i32
    %c0_i32_0 = arith.constant 0 : i32
    %c0_i32_1 = arith.constant 0 : i32
    return %c0_i32, %c0_i32_0 : i32, i32
  }
  func.func @transform_13(%arg0: i32) -> (i32, i32, i32) {
    %c0_i32 = arith.constant 0 : i32
    %c0_i32_0 = arith.constant 0 : i32
    %c0_i32_1 = arith.constant 0 : i32
    %c0_i32_2 = arith.constant 0 : i32
    return %c0_i32, %c0_i32_0, %c0_i32_1 : i32, i32, i32
  }
  func.func @transform_14(%arg0: i32) -> (i32, i32) {
    %c0_i32 = arith.constant 0 : i32
    %c0_i32_0 = arith.constant 0 : i32
    %c0_i32_1 = arith.constant 0 : i32
    return %c0_i32, %c0_i32_0 : i32, i32
  }
  func.func @transform_15(%arg0: i32) -> (i32, i32) {
    %c0_i32 = arith.constant 0 : i32
    %c0_i32_0 = arith.constant 0 : i32
    %c0_i32_1 = arith.constant 0 : i32
    return %c0_i32, %c0_i32_0 : i32, i32
  }
  func.func @transform_16(%arg0: i32) -> (i32, i32, i32) {
    %c0_i32 = arith.constant 0 : i32
    %c0_i32_0 = arith.constant 0 : i32
    %c0_i32_1 = arith.constant 0 : i32
    %c0_i32_2 = arith.constant 0 : i32
    return %c0_i32, %c0_i32_0, %c0_i32_1 : i32, i32, i32
  }
  func.func @transform_17(%arg0: i32) -> (i32, i32) {
    %c0_i32 = arith.constant 0 : i32
    %c0_i32_0 = arith.constant 0 : i32
    %c0_i32_1 = arith.constant 0 : i32
    return %c0_i32, %c0_i32_0 : i32, i32
  }
  func.func @transform_18(%arg0: i32) -> (i32, i32) {
    %c0_i32 = arith.constant 0 : i32
    %c0_i32_0 = arith.constant 0 : i32
    %c0_i32_1 = arith.constant 0 : i32
    return %c0_i32, %c0_i32_0 : i32, i32
  }
  func.func @transform_19(%arg0: i32) -> (i32, i32) {
    %c0_i32 = arith.constant 0 : i32
    %c0_i32_0 = arith.constant 0 : i32
    return %arg0, %c0_i32 : i32, i32
  }
}

</mosaic_0001>

<llo_original>
// kernel: tpu_custom_call.1
$region0: #{tpu_custom_call.1}
  #allocation0 [shape = 'u32[]', space=smem, size = 0x4, offset = 0x4, fixed_abs, tag = 'smem constant byte address 0x4 - core index']
  #allocation1 [shape = 'u32[72,128]{1,0:T(1,128)}', space=vmem, size = 0x9000, scoped, tag = 'internal scratch']
  %s0 = inlined_call_operand.vmem [shape: bf16[128,16], index: 0, kind: input, shape index: {}]
  %s1 = inlined_call_operand.vmem [shape: bf16[3,16,32], index: 1, kind: input, shape index: {}]
  %s2 = inlined_call_operand.vmem [shape: f32[1,32], index: 2, kind: input, shape index: {}]
  %s3 = inlined_call_operand.vmem [shape: f32[1,32], index: 3, kind: input, shape index: {}]
  %s4 = inlined_call_operand.vmem [shape: bf16[3,32,32], index: 4, kind: input, shape index: {}]
  %s5 = inlined_call_operand.vmem [shape: f32[1,32], index: 5, kind: input, shape index: {}]
  %s6 = inlined_call_operand.vmem [shape: f32[1,32], index: 6, kind: input, shape index: {}]
  %s7 = inlined_call_operand.hbm [shape: bf16[3,32,32], index: 7, kind: input, shape index: {}]
  %s8 = inlined_call_operand.vmem [shape: f32[1,32], index: 8, kind: input, shape index: {}]
  %s9 = inlined_call_operand.vmem [shape: f32[1,32], index: 9, kind: input, shape index: {}]
  %s10 = inlined_call_operand.hbm [shape: bf16[3,32,64], index: 10, kind: input, shape index: {}]
  %s11 = inlined_call_operand.vmem [shape: f32[1,64], index: 11, kind: input, shape index: {}]
  %s12 = inlined_call_operand.vmem [shape: f32[1,64], index: 12, kind: input, shape index: {}]
  %s13 = inlined_call_operand.hbm [shape: bf16[3,32,64], index: 13, kind: input, shape index: {}]
  %s14 = inlined_call_operand.vmem [shape: f32[1,64], index: 14, kind: input, shape index: {}]
  %s15 = inlined_call_operand.vmem [shape: f32[1,64], index: 15, kind: input, shape index: {}]
  %s16 = inlined_call_operand.hbm [shape: bf16[3,64,64], index: 16, kind: input, shape index: {}]
  %s17 = inlined_call_operand.vmem [shape: f32[1,64], index: 17, kind: input, shape index: {}]
  %s18 = inlined_call_operand.vmem [shape: f32[1,64], index: 18, kind: input, shape index: {}]
  %s19 = inlined_call_operand.hbm [shape: bf16[8,64], index: 19, kind: output, shape index: {}]
  %s20 = sld [smem:[#allocation0]]
  $region102: #{tpu_custom_call.1} parent=0
    _
  %s22 = ssub.s32 1, %s20
  %s23 = scalar_select 0, %s22, %s20
  $region1: #{tpu_custom_call.1} parent=0
    #allocation2 [shape = 'u8[24576]{0}', space=vmem, size = 0x6000, scoped, tag = 'input window, operand 7, single buffered']
    #allocation3 [shape = 's32[1]{0}', space=sflag, size = 0x4, scoped, tag = 'scoped memory for tpu_custom_call.1']
    #allocation4 [shape = 's32[1]{0}', space=sflag, size = 0x4, scoped, tag = 'scoped memory for tpu_custom_call.1']
    #allocation5 [shape = 'u8[24576]{0}', space=vmem, size = 0x6000, scoped, tag = 'input window, operand 10, single buffered']
    #allocation6 [shape = 's32[1]{0}', space=sflag, size = 0x4, scoped, tag = 'scoped memory for tpu_custom_call.1']
    #allocation7 [shape = 'u8[24576]{0}', space=vmem, size = 0x6000, scoped, tag = 'input window, operand 13, single buffered']
    #allocation8 [shape = 'u8[49152]{0}', space=vmem, size = 0xc000, scoped, tag = 'input window, operand 16, single buffered']
    #allocation9 [shape = 's32[1]{0}', space=sflag, size = 0x4, scoped, tag = 'scoped memory for tpu_custom_call.1']
    #allocation10 [shape = 'u8[2048]{0}', space=vmem, size = 0x800, scoped, tag = 'output window, operand 0, single buffered']
    %24 = vsyncpa [#allocation3], 0
    %25 = vsyncpa [#allocation6], 0
    %26 = vsyncpa [#allocation9], 0
    %27 = vsyncpa [#allocation4], 0
    // Predicated region
    $region2: #{tpu_custom_call.1} parent=1 // pred_check
      _
    $region3: #{tpu_custom_call.1} parent=1 // pred_check_branch
      %29 = sbr.rel (0) target = $region5
    $region4: #{tpu_custom_call.1} parent=1 // pred_region
      _
    $region5: #{tpu_custom_call.1} parent=1 // pred_fallthru
      _
    // Predicated region
    $region6: #{tpu_custom_call.1} parent=1 // pred_check
      _
    $region7: #{tpu_custom_call.1} parent=1 // pred_check_branch
      %31 = sbr.rel (0) target = $region9
    $region8: #{tpu_custom_call.1} parent=1 // pred_region
      _
    $region9: #{tpu_custom_call.1} parent=1 // pred_fallthru
      _
    // Predicated region
    $region10: #{tpu_custom_call.1} parent=1 // pred_check
      _
    $region11: #{tpu_custom_call.1} parent=1 // pred_check_branch
      %33 = sbr.rel (0) target = $region13
    $region12: #{tpu_custom_call.1} parent=1 // pred_region
      _
    $region13: #{tpu_custom_call.1} parent=1 // pred_fallthru
      _
    // Predicated region
    $region14: #{tpu_custom_call.1} parent=1 // pred_check
      _
    $region15: #{tpu_custom_call.1} parent=1 // pred_check_branch
      %35 = sbr.rel (0) target = $region17
    $region16: #{tpu_custom_call.1} parent=1 // pred_region
      _
    $region17: #{tpu_custom_call.1} parent=1 // pred_fallthru
      _
    // Predicated region
    $region18: #{tpu_custom_call.1} parent=1 // pred_check
      _
    $region19: #{tpu_custom_call.1} parent=1 // pred_check_branch
      %37 = sbr.rel (0) target = $region21
    $region20: #{tpu_custom_call.1} parent=1 // pred_region
      _
    $region21: #{tpu_custom_call.1} parent=1 // pred_fallthru
      _
    // Predicated region
    $region22: #{tpu_custom_call.1} parent=1 // pred_check
      _
    $region23: #{tpu_custom_call.1} parent=1 // pred_check_branch
      %39 = sbr.rel (0) target = $region25
    $region24: #{tpu_custom_call.1} parent=1 // pred_region
      _
    $region25: #{tpu_custom_call.1} parent=1 // pred_fallthru
      _
    // Predicated region
    $region26: #{tpu_custom_call.1} parent=1 // pred_check
      _
    $region27: #{tpu_custom_call.1} parent=1 // pred_check_branch
      %41 = sbr.rel (0) target = $region29
    $region28: #{tpu_custom_call.1} parent=1 // pred_region
      _
    $region29: #{tpu_custom_call.1} parent=1 // pred_fallthru
      _
    // Predicated region
    $region30: #{tpu_custom_call.1} parent=1 // pred_check
      _
    $region31: #{tpu_custom_call.1} parent=1 // pred_check_branch
      %43 = sbr.rel (0) target = $region33
    $region32: #{tpu_custom_call.1} parent=1 // pred_region
      %45 = vsyncadd [#allocation3], 0
      %s46 = sshll.u32 %s7, 4
      %s47 = int_to_ptr.hbm [resolvable:$true] %s46
      %s48 = sshll.u32 [#allocation2], 4
      %s49 = int_to_ptr.vmem [resolvable:$true] %s48
      %54 = dma.hbm_to_vmem [thread:$0]  %s47, 768, %s49, [#allocation3], 64, 64, 4
    $region33: #{tpu_custom_call.1} parent=1 // pred_fallthru
      _
    // Predicated region
    $region34: #{tpu_custom_call.1} parent=1 // pred_check
      _
    $region35: #{tpu_custom_call.1} parent=1 // pred_check_branch
      %56 = sbr.rel (0) target = $region37
    $region36: #{tpu_custom_call.1} parent=1 // pred_region
      _
    $region37: #{tpu_custom_call.1} parent=1 // pred_fallthru
      _
    // Predicated region
    $region38: #{tpu_custom_call.1} parent=1 // pred_check
      _
    $region39: #{tpu_custom_call.1} parent=1 // pred_check_branch
      %58 = sbr.rel (0) target = $region41
    $region40: #{tpu_custom_call.1} parent=1 // pred_region
      _
    $region41: #{tpu_custom_call.1} parent=1 // pred_fallthru
      _
    // Predicated region
    $region42: #{tpu_custom_call.1} parent=1 // pred_check
      _
    $region43: #{tpu_custom_call.1} parent=1 // pred_check_branch
      %60 = sbr.rel (0) target = $region45
    $region44: #{tpu_custom_call.1} parent=1 // pred_region
      %62 = vsyncadd [#allocation6], 0
      %s63 = sshll.u32 %s10, 4
      %s64 = int_to_ptr.hbm [resolvable:$true] %s63
      %s65 = sshll.u32 [#allocation5], 4
      %s66 = int_to_ptr.vmem [resolvable:$true] %s65
      %71 = dma.hbm_to_vmem [thread:$0]  %s64, 768, %s66, [#allocation6], 64, 64, 4
    $region45: #{tpu_custom_call.1} parent=1 // pred_fallthru
      _
    // Predicated region
    $region46: #{tpu_custom_call.1} parent=1 // pred_check
      _
    $region47: #{tpu_custom_call.1} parent=1 // pred_check_branch
      %73 = sbr.rel (0) target = $region49
    $region48: #{tpu_custom_call.1} parent=1 // pred_region
      _
    $region49: #{tpu_custom_call.1} parent=1 // pred_fallthru
      _
    // Predicated region
    $region50: #{tpu_custom_call.1} parent=1 // pred_check
      _
    $region51: #{tpu_custom_call.1} parent=1 // pred_check_branch
      %75 = sbr.rel (0) target = $region53
    $region52: #{tpu_custom_call.1} parent=1 // pred_region
      _
    $region53: #{tpu_custom_call.1} parent=1 // pred_fallthru
      _
    // Predicated region
    $region54: #{tpu_custom_call.1} parent=1 // pred_check
      _
    $region55: #{tpu_custom_call.1} parent=1 // pred_check_branch
      %77 = sbr.rel (0) target = $region57
    $region56: #{tpu_custom_call.1} parent=1 // pred_region
      %79 = vsyncadd [#allocation6], 0
      %s80 = sshll.u32 %s13, 4
      %s81 = int_to_ptr.hbm [resolvable:$true] %s80
      %s82 = sshll.u32 [#allocation7], 4
      %s83 = int_to_ptr.vmem [resolvable:$true] %s82
      %88 = dma.hbm_to_vmem [thread:$0]  %s81, 768, %s83, [#allocation6], 64, 64, 4
    $region57: #{tpu_custom_call.1} parent=1 // pred_fallthru
      _
    // Predicated region
    $region58: #{tpu_custom_call.1} parent=1 // pred_check
      _
    $region59: #{tpu_custom_call.1} parent=1 // pred_check_branch
      %90 = sbr.rel (0) target = $region61
    $region60: #{tpu_custom_call.1} parent=1 // pred_region
      _
    $region61: #{tpu_custom_call.1} parent=1 // pred_fallthru
      _
    // Predicated region
    $region62: #{tpu_custom_call.1} parent=1 // pred_check
      _
    $region63: #{tpu_custom_call.1} parent=1 // pred_check_branch
      %92 = sbr.rel (0) target = $region65
    $region64: #{tpu_custom_call.1} parent=1 // pred_region
      _
    $region65: #{tpu_custom_call.1} parent=1 // pred_fallthru
      _
    // Predicated region
    $region66: #{tpu_custom_call.1} parent=1 // pred_check
      _
    $region67: #{tpu_custom_call.1} parent=1 // pred_check_branch
      %94 = sbr.rel (0) target = $region69
    $region68: #{tpu_custom_call.1} parent=1 // pred_region
      %96 = vsyncadd [#allocation9], 0
      %s97 = sshll.u32 %s16, 4
      %s98 = int_to_ptr.hbm [resolvable:$true] %s97
      %s99 = sshll.u32 [#allocation8], 4
      %s100 = int_to_ptr.vmem [resolvable:$true] %s99
      %105 = dma.hbm_to_vmem [thread:$0]  %s98, 1536, %s100, [#allocation9], 64, 64, 4
    $region69: #{tpu_custom_call.1} parent=1 // pred_fallthru
      _
    // Predicated region
    $region70: #{tpu_custom_call.1} parent=1 // pred_check
      _
    $region71: #{tpu_custom_call.1} parent=1 // pred_check_branch
      %107 = sbr.rel (0) target = $region73
    $region72: #{tpu_custom_call.1} parent=1 // pred_region
      _
    $region73: #{tpu_custom_call.1} parent=1 // pred_fallthru
      _
    // Predicated region
    $region74: #{tpu_custom_call.1} parent=1 // pred_check
      _
    $region75: #{tpu_custom_call.1} parent=1 // pred_check_branch
      %109 = sbr.rel (0) target = $region77
    $region76: #{tpu_custom_call.1} parent=1 // pred_region
      _
    $region77: #{tpu_custom_call.1} parent=1 // pred_fallthru
      _
    // Predicated region
    $region78: #{tpu_custom_call.1} parent=1 // pred_check
      _
    $region79: #{tpu_custom_call.1} parent=1 // pred_check_branch
      %111 = sbr.rel (0) target = $region81
    $region80: #{tpu_custom_call.1} parent=1 // pred_region
      %113 = dma.done [#allocation3], 768
    $region81: #{tpu_custom_call.1} parent=1 // pred_fallthru
      _
    // Predicated region
    $region82: #{tpu_custom_call.1} parent=1 // pred_check
      _
    $region83: #{tpu_custom_call.1} parent=1 // pred_check_branch
      %115 = sbr.rel (0) target = $region85
    $region84: #{tpu_custom_call.1} parent=1 // pred_region
      %117 = dma.done [#allocation6], 768
    $region85: #{tpu_custom_call.1} parent=1 // pred_fallthru
      _
    // Predicated region
    $region86: #{tpu_custom_call.1} parent=1 // pred_check
      _
    $region87: #{tpu_custom_call.1} parent=1 // pred_check_branch
      %119 = sbr.rel (0) target = $region89
    $region88: #{tpu_custom_call.1} parent=1 // pred_region
      %121 = dma.done [#allocation6], 768
    $region89: #{tpu_custom_call.1} parent=1 // pred_fallthru
      _
    // Predicated region
    $region90: #{tpu_custom_call.1} parent=1 // pred_check
      _
    $region91: #{tpu_custom_call.1} parent=1 // pred_check_branch
      %123 = sbr.rel (0) target = $region93
    $region92: #{tpu_custom_call.1} parent=1 // pred_region
      %125 = dma.done [#allocation9], 1536
    $region93: #{tpu_custom_call.1} parent=1 // pred_fallthru
      _
    %v127 = vld [vmem:[%s0] sm:$0xf]
    %v128 = vld [vmem:[%s0 + $0x4] sm:$0xf]
    %v129 = vld [vmem:[%s0 + $0x8] sm:$0xf]
    %v130 = vld [vmem:[%s0 + $0xc] sm:$0xf]
    %v131 = vld [vmem:[%s0 + $0x10] sm:$0xf]
    %v132 = vld [vmem:[%s0 + $0x14] sm:$0xf]
    %v133 = vld [vmem:[%s0 + $0x18] sm:$0xf]
    %v134 = vld [vmem:[%s0 + $0x1c] sm:$0xf]
    %v135 = vld [vmem:[%s0 + $0x20] sm:$0xf]
    %v136 = vld [vmem:[%s0 + $0x24] sm:$0xf]
    %v137 = vld [vmem:[%s0 + $0x28] sm:$0xf]
    %v138 = vld [vmem:[%s0 + $0x2c] sm:$0xf]
    %v139 = vld [vmem:[%s0 + $0x30] sm:$0xf]
    %v140 = vld [vmem:[%s0 + $0x34] sm:$0xf]
    %v141 = vld [vmem:[%s0 + $0x38] sm:$0xf]
    %v142 = vld [vmem:[%s0 + $0x3c] sm:$0xf]
    %v143 = vunpack.c.l.bf16 %v127
    %v144 = vunpack.c.l.bf16 %v128
    %v145 = vunpack.c.l.bf16 %v129
    %v146 = vunpack.c.l.bf16 %v130
    %v147 = vunpack.c.l.bf16 %v131
    %v148 = vunpack.c.l.bf16 %v132
    %v149 = vunpack.c.l.bf16 %v133
    %v150 = vunpack.c.l.bf16 %v134
    %v151 = vunpack.c.l.bf16 %v135
    %v152 = vunpack.c.l.bf16 %v136
    %v153 = vunpack.c.l.bf16 %v137
    %v154 = vunpack.c.l.bf16 %v138
    %v155 = vunpack.c.l.bf16 %v139
    %v156 = vunpack.c.l.bf16 %v140
    %v157 = vunpack.c.l.bf16 %v141
    %v158 = vunpack.c.l.bf16 %v142
    %v159 = vrot.slane %v143, 7
    %v160 = vrot.slane %v144, 7
    %v161 = vrot.slane %v145, 7
    %v162 = vrot.slane %v146, 7
    %v163 = vrot.slane %v147, 7
    %v164 = vrot.slane %v148, 7
    %v165 = vrot.slane %v149, 7
    %v166 = vrot.slane %v150, 7
    %v167 = vrot.slane %v151, 7
    %v168 = vrot.slane %v152, 7
    %v169 = vrot.slane %v153, 7
    %v170 = vrot.slane %v154, 7
    %v171 = vrot.slane %v155, 7
    %v172 = vrot.slane %v156, 7
    %v173 = vrot.slane %v157, 7
    %v174 = vrot.slane %v158, 7
    %v175 = vlaneseq
    %v176 = vshrl.u32 %v175, 7
    %vm177 = vcmp.lt.s32.totalorder %v176, 1
    %v178 = vsel %vm177, %v173, %v174
    %v179 = vsel %vm177, %v172, %v173
    %v180 = vsel %vm177, %v171, %v172
    %v181 = vsel %vm177, %v170, %v171
    %v182 = vsel %vm177, %v169, %v170
    %v183 = vsel %vm177, %v168, %v169
    %v184 = vsel %vm177, %v167, %v168
    %v185 = vsel %vm177, %v166, %v167
    %v186 = vsel %vm177, %v165, %v166
    %v187 = vsel %vm177, %v164, %v165
    %v188 = vsel %vm177, %v163, %v164
    %v189 = vsel %vm177, %v162, %v163
    %v190 = vsel %vm177, %v161, %v162
    %v191 = vsel %vm177, %v160, %v161
    %v192 = vsel %vm177, %v159, %v160
    %v193 = vsel %vm177, %v174, %v159
    %v194 = vadd.s32 %v176, 8
    %v195 = vadd.s32 %v176, 16
    %v196 = vadd.s32 %v176, 24
    %v197 = vadd.s32 %v176, 32
    %v198 = vadd.s32 %v176, 40
    %v199 = vadd.s32 %v176, 48
    %v200 = vadd.s32 %v176, 56
    %v201 = vadd.s32 %v176, 64
    %v202 = vadd.s32 %v176, 72
    %v203 = vadd.s32 %v176, 80
    %v204 = vadd.s32 %v176, 88
    %v205 = vadd.s32 %v176, 96
    %v206 = vadd.s32 %v176, 104
    %v207 = vadd.s32 %v176, 112
    %v208 = vadd.s32 %v176, 120
    %vm209 = vcmp.lt.s32.totalorder %v176, 0
    %v210 = vsub.s32 0, %v176
    %v211 = vsel %vm209, %v210, %v176
    %v212 = vshrl.u32 %v211, 6
    %v213 = vand.u32 %v211, 63
    %v214 = vsub.s32 0, %v213
    %v215 = vsel %vm209, %v214, %v213
    %vm216 = vcmp.lt.s32.totalorder %v194, 0
    %v217 = vsub.s32 0, %v194
    %v218 = vsel %vm216, %v217, %v194
    %v219 = vshrl.u32 %v218, 6
    %v220 = vand.u32 %v218, 63
    %v221 = vsub.s32 0, %v220
    %v222 = vsel %vm216, %v221, %v220
    %vm223 = vcmp.lt.s32.totalorder %v195, 0
    %v224 = vsub.s32 0, %v195
    %v225 = vsel %vm223, %v224, %v195
    %v226 = vshrl.u32 %v225, 6
    %v227 = vand.u32 %v225, 63
    %v228 = vsub.s32 0, %v227
    %v229 = vsel %vm223, %v228, %v227
    %vm230 = vcmp.lt.s32.totalorder %v196, 0
    %v231 = vsub.s32 0, %v196
    %v232 = vsel %vm230, %v231, %v196
    %v233 = vshrl.u32 %v232, 6
    %v234 = vand.u32 %v232, 63
    %v235 = vsub.s32 0, %v234
    %v236 = vsel %vm230, %v235, %v234
    %vm237 = vcmp.lt.s32.totalorder %v197, 0
    %v238 = vsub.s32 0, %v197
    %v239 = vsel %vm237, %v238, %v197
    %v240 = vshrl.u32 %v239, 6
    %v241 = vand.u32 %v239, 63
    %v242 = vsub.s32 0, %v241
    %v243 = vsel %vm237, %v242, %v241
    %vm244 = vcmp.lt.s32.totalorder %v198, 0
    %v245 = vsub.s32 0, %v198
    %v246 = vsel %vm244, %v245, %v198
    %v247 = vshrl.u32 %v246, 6
    %v248 = vand.u32 %v246, 63
    %v249 = vsub.s32 0, %v248
    %v250 = vsel %vm244, %v249, %v248
    %vm251 = vcmp.lt.s32.totalorder %v199, 0
    %v252 = vsub.s32 0, %v199
    %v253 = vsel %vm251, %v252, %v199
    %v254 = vshrl.u32 %v253, 6
    %v255 = vand.u32 %v253, 63
    %v256 = vsub.s32 0, %v255
    %v257 = vsel %vm251, %v256, %v255
    %vm258 = vcmp.lt.s32.totalorder %v200, 0
    %v259 = vsub.s32 0, %v200
    %v260 = vsel %vm258, %v259, %v200
    %v261 = vshrl.u32 %v260, 6
    %v262 = vand.u32 %v260, 63
    %v263 = vsub.s32 0, %v262
    %v264 = vsel %vm258, %v263, %v262
    %vm265 = vcmp.lt.s32.totalorder %v201, 0
    %v266 = vsub.s32 0, %v201
    %v267 = vsel %vm265, %v266, %v201
    %v268 = vshrl.u32 %v267, 6
    %v269 = vand.u32 %v267, 63
    %v270 = vsub.s32 0, %v269
    %v271 = vsel %vm265, %v270, %v269
    %vm272 = vcmp.lt.s32.totalorder %v202, 0
    %v273 = vsub.s32 0, %v202
    %v274 = vsel %vm272, %v273, %v202
    %v275 = vshrl.u32 %v274, 6
    %v276 = vand.u32 %v274, 63
    %v277 = vsub.s32 0, %v276
    %v278 = vsel %vm272, %v277, %v276
    %vm279 = vcmp.lt.s32.totalorder %v203, 0
    %v280 = vsub.s32 0, %v203
    %v281 = vsel %vm279, %v280, %v203
    %v282 = vshrl.u32 %v281, 6
    %v283 = vand.u32 %v281, 63
    %v284 = vsub.s32 0, %v283
    %v285 = vsel %vm279, %v284, %v283
    %vm286 = vcmp.lt.s32.totalorder %v204, 0
    %v287 = vsub.s32 0, %v204
    %v288 = vsel %vm286, %v287, %v204
    %v289 = vshrl.u32 %v288, 6
    %v290 = vand.u32 %v288, 63
    %v291 = vsub.s32 0, %v290
    %v292 = vsel %vm286, %v291, %v290
    %vm293 = vcmp.lt.s32.totalorder %v205, 0
    %v294 = vsub.s32 0, %v205
    %v295 = vsel %vm293, %v294, %v205
    %v296 = vshrl.u32 %v295, 6
    %v297 = vand.u32 %v295, 63
    %v298 = vsub.s32 0, %v297
    %v299 = vsel %vm293, %v298, %v297
    %vm300 = vcmp.lt.s32.totalorder %v206, 0
    %v301 = vsub.s32 0, %v206
    %v302 = vsel %vm300, %v301, %v206
    %v303 = vshrl.u32 %v302, 6
    %v304 = vand.u32 %v302, 63
    %v305 = vsub.s32 0, %v304
    %v306 = vsel %vm300, %v305, %v304
    %vm307 = vcmp.lt.s32.totalorder %v207, 0
    %v308 = vsub.s32 0, %v207
    %v309 = vsel %vm307, %v308, %v207
    %v310 = vshrl.u32 %v309, 6
    %v311 = vand.u32 %v309, 63
    %v312 = vsub.s32 0, %v311
    %v313 = vsel %vm307, %v312, %v311
    %vm314 = vcmp.lt.s32.totalorder %v208, 0
    %v315 = vsub.s32 0, %v208
    %v316 = vsel %vm314, %v315, %v208
    %v317 = vshrl.u32 %v316, 6
    %v318 = vand.u32 %v316, 63
    %v319 = vsub.s32 0, %v318
    %v320 = vsel %vm314, %v319, %v318
    %vm321 = vcmp.ne.s32.totalorder %v215, 0
    %vm322 = vcmp.ne.s32.totalorder %v222, 0
    %vm323 = vcmp.ne.s32.totalorder %v229, 0
    %vm324 = vcmp.ne.s32.totalorder %v236, 0
    %vm325 = vcmp.ne.s32.totalorder %v243, 0
    %vm326 = vcmp.ne.s32.totalorder %v250, 0
    %vm327 = vcmp.ne.s32.totalorder %v257, 0
    %vm328 = vcmp.ne.s32.totalorder %v264, 0
    %vm329 = vcmp.ne.s32.totalorder %v271, 0
    %vm330 = vcmp.ne.s32.totalorder %v278, 0
    %vm331 = vcmp.ne.s32.totalorder %v285, 0
    %vm332 = vcmp.ne.s32.totalorder %v292, 0
    %vm333 = vcmp.ne.s32.totalorder %v299, 0
    %vm334 = vcmp.ne.s32.totalorder %v306, 0
    %vm335 = vcmp.ne.s32.totalorder %v313, 0
    %vm336 = vcmp.ne.s32.totalorder %v320, 0
    %vm337 = vcmp.lt.s32.totalorder %v215, 0
    %vm338 = vcmp.lt.s32.totalorder %v222, 0
    %vm339 = vcmp.lt.s32.totalorder %v229, 0
    %vm340 = vcmp.lt.s32.totalorder %v236, 0
    %vm341 = vcmp.lt.s32.totalorder %v243, 0
    %vm342 = vcmp.lt.s32.totalorder %v250, 0
    %vm343 = vcmp.lt.s32.totalorder %v257, 0
    %vm344 = vcmp.lt.s32.totalorder %v264, 0
    %vm345 = vcmp.lt.s32.totalorder %v271, 0
    %vm346 = vcmp.lt.s32.totalorder %v278, 0
    %vm347 = vcmp.lt.s32.totalorder %v285, 0
    %vm348 = vcmp.lt.s32.totalorder %v292, 0
    %vm349 = vcmp.lt.s32.totalorder %v299, 0
    %vm350 = vcmp.lt.s32.totalorder %v306, 0
    %vm351 = vcmp.lt.s32.totalorder %v313, 0
    %vm352 = vcmp.lt.s32.totalorder %v320, 0
    %vm353 = vmand %vm337, %vm321
    %vm354 = vmand %vm338, %vm322
    %vm355 = vmand %vm339, %vm323
    %vm356 = vmand %vm340, %vm324
    %vm357 = vmand %vm341, %vm325
    %vm358 = vmand %vm342, %vm326
    %vm359 = vmand %vm343, %vm327
    %vm360 = vmand %vm344, %vm328
    %vm361 = vmand %vm345, %vm329
    %vm362 = vmand %vm346, %vm330
    %vm363 = vmand %vm347, %vm331
    %vm364 = vmand %vm348, %vm332
    %vm365 = vmand %vm349, %vm333
    %vm366 = vmand %vm350, %vm334
    %vm367 = vmand %vm351, %vm335
    %vm368 = vmand %vm352, %vm336
    %v369 = vadd.s32 %v215, 64
    %v370 = vadd.s32 %v222, 64
    %v371 = vadd.s32 %v229, 64
    %v372 = vadd.s32 %v236, 64
    %v373 = vadd.s32 %v243, 64
    %v374 = vadd.s32 %v250, 64
    %v375 = vadd.s32 %v257, 64
    %v376 = vadd.s32 %v264, 64
    %v377 = vadd.s32 %v271, 64
    %v378 = vadd.s32 %v278, 64
    %v379 = vadd.s32 %v285, 64
    %v380 = vadd.s32 %v292, 64
    %v381 = vadd.s32 %v299, 64
    %v382 = vadd.s32 %v306, 64
    %v383 = vadd.s32 %v313, 64
    %v384 = vadd.s32 %v320, 64
    %v385 = vsel %vm353, %v369, %v215
    %v386 = vsel %vm354, %v370, %v222
    %v387 = vsel %vm355, %v371, %v229
    %v388 = vsel %vm356, %v372, %v236
    %v389 = vsel %vm357, %v373, %v243
    %v390 = vsel %vm358, %v374, %v250
    %v391 = vsel %vm359, %v375, %v257
    %v392 = vsel %vm360, %v376, %v264
    %v393 = vsel %vm361, %v377, %v271
    %v394 = vsel %vm362, %v378, %v278
    %v395 = vsel %vm363, %v379, %v285
    %v396 = vsel %vm364, %v380, %v292
    %v397 = vsel %vm365, %v381, %v299
    %v398 = vsel %vm366, %v382, %v306
    %v399 = vsel %vm367, %v383, %v313
    %v400 = vsel %vm368, %v384, %v320
    %vm401 = vcmp.eq.s32.totalorder %v385, 0
    %vm402 = vcmp.eq.s32.totalorder %v386, 0
    %vm403 = vcmp.eq.s32.totalorder %v387, 0
    %vm404 = vcmp.eq.s32.totalorder %v388, 0
    %vm405 = vcmp.eq.s32.totalorder %v389, 0
    %vm406 = vcmp.eq.s32.totalorder %v390, 0
    %vm407 = vcmp.eq.s32.totalorder %v391, 0
    %vm408 = vcmp.eq.s32.totalorder %v392, 0
    %vm409 = vcmp.eq.s32.totalorder %v393, 0
    %vm410 = vcmp.eq.s32.totalorder %v394, 0
    %vm411 = vcmp.eq.s32.totalorder %v395, 0
    %vm412 = vcmp.eq.s32.totalorder %v396, 0
    %vm413 = vcmp.eq.s32.totalorder %v397, 0
    %vm414 = vcmp.eq.s32.totalorder %v398, 0
    %vm415 = vcmp.eq.s32.totalorder %v399, 0
    %vm416 = vcmp.eq.s32.totalorder %v400, 0
    %v417 = vsel %vm401, 0.0, %v193
    %v418 = vsel %vm402, 0.0, %v192
    %v419 = vsel %vm403, 0.0, %v191
    %v420 = vsel %vm404, 0.0, %v190
    %v421 = vsel %vm405, 0.0, %v189
    %v422 = vsel %vm406, 0.0, %v188
    %v423 = vsel %vm407, 0.0, %v187
    %v424 = vsel %vm408, 0.0, %v186
    %v425 = vsel %vm409, 0.0, %v185
    %v426 = vsel %vm410, 0.0, %v184
    %v427 = vsel %vm411, 0.0, %v183
    %v428 = vsel %vm412, 0.0, %v182
    %v429 = vsel %vm413, 0.0, %v181
    %v430 = vsel %vm414, 0.0, %v180
    %v431 = vsel %vm415, 0.0, %v179
    %v432 = vsel %vm416, 0.0, %v178
    %v433 = vpack.c.bf16 %v418, %v417
    %v434 = vpack.c.bf16 %v420, %v419
    %v435 = vpack.c.bf16 %v422, %v421
    %v436 = vpack.c.bf16 %v424, %v423
    %v437 = vpack.c.bf16 %v426, %v425
    %v438 = vpack.c.bf16 %v428, %v427
    %v439 = vpack.c.bf16 %v430, %v429
    %v440 = vpack.c.bf16 %v432, %v431
    %v441 = vrot.slane %v143, 1
    %v442 = vrot.slane %v144, 1
    %v443 = vrot.slane %v145, 1
    %v444 = vrot.slane %v146, 1
    %v445 = vrot.slane %v147, 1
    %v446 = vrot.slane %v148, 1
    %v447 = vrot.slane %v149, 1
    %v448 = vrot.slane %v150, 1
    %v449 = vrot.slane %v151, 1
    %v450 = vrot.slane %v152, 1
    %v451 = vrot.slane %v153, 1
    %v452 = vrot.slane %v154, 1
    %v453 = vrot.slane %v155, 1
    %v454 = vrot.slane %v156, 1
    %v455 = vrot.slane %v157, 1
    %v456 = vrot.slane %v158, 1
    %vm457 = vcmp.lt.s32.totalorder %v176, 7
    %v458 = vsel %vm457, %v455, %v456
    %v459 = vsel %vm457, %v454, %v455
    %v460 = vsel %vm457, %v453, %v454
    %v461 = vsel %vm457, %v452, %v453
    %v462 = vsel %vm457, %v451, %v452
    %v463 = vsel %vm457, %v450, %v451
    %v464 = vsel %vm457, %v449, %v450
    %v465 = vsel %vm457, %v448, %v449
    %v466 = vsel %vm457, %v447, %v448
    %v467 = vsel %vm457, %v446, %v447
    %v468 = vsel %vm457, %v445, %v446
    %v469 = vsel %vm457, %v444, %v445
    %v470 = vsel %vm457, %v443, %v444
    %v471 = vsel %vm457, %v442, %v443
    %v472 = vsel %vm457, %v441, %v442
    %v473 = vsel %vm457, %v456, %v441
    %vm474 = vcmp.eq.s32.totalorder %v385, 63
    %vm475 = vcmp.eq.s32.totalorder %v386, 63
    %vm476 = vcmp.eq.s32.totalorder %v387, 63
    %vm477 = vcmp.eq.s32.totalorder %v388, 63
    %vm478 = vcmp.eq.s32.totalorder %v389, 63
    %vm479 = vcmp.eq.s32.totalorder %v390, 63
    %vm480 = vcmp.eq.s32.totalorder %v391, 63
    %vm481 = vcmp.eq.s32.totalorder %v392, 63
    %vm482 = vcmp.eq.s32.totalorder %v393, 63
    %vm483 = vcmp.eq.s32.totalorder %v394, 63
    %vm484 = vcmp.eq.s32.totalorder %v395, 63
    %vm485 = vcmp.eq.s32.totalorder %v396, 63
    %vm486 = vcmp.eq.s32.totalorder %v397, 63
    %vm487 = vcmp.eq.s32.totalorder %v398, 63
    %vm488 = vcmp.eq.s32.totalorder %v399, 63
    %vm489 = vcmp.eq.s32.totalorder %v400, 63
    %v490 = vsel %vm474, 0.0, %v472
    %v491 = vsel %vm475, 0.0, %v471
    %v492 = vsel %vm476, 0.0, %v470
    %v493 = vsel %vm477, 0.0, %v469
    %v494 = vsel %vm478, 0.0, %v468
    %v495 = vsel %vm479, 0.0, %v467
    %v496 = vsel %vm480, 0.0, %v466
    %v497 = vsel %vm481, 0.0, %v465
    %v498 = vsel %vm482, 0.0, %v464
    %v499 = vsel %vm483, 0.0, %v463
    %v500 = vsel %vm484, 0.0, %v462
    %v501 = vsel %vm485, 0.0, %v461
    %v502 = vsel %vm486, 0.0, %v460
    %v503 = vsel %vm487, 0.0, %v459
    %v504 = vsel %vm488, 0.0, %v458
    %v505 = vsel %vm489, 0.0, %v473
    %v506 = vpack.c.bf16 %v491, %v490
    %v507 = vpack.c.bf16 %v493, %v492
    %v508 = vpack.c.bf16 %v495, %v494
    %v509 = vpack.c.bf16 %v497, %v496
    %v510 = vpack.c.bf16 %v499, %v498
    %v511 = vpack.c.bf16 %v501, %v500
    %v512 = vpack.c.bf16 %v503, %v502
    %v513 = vpack.c.bf16 %v505, %v504
    %s514 = scalar_lea.vmem %s1, 8
    %v515 = vld [vmem:[%s514] sm:$0xf]
    %v516 = vld [vmem:[%s514 + $0x4] sm:$0xf]
    %v517 = vld [vmem:[%s1] sm:$0xf]
    %v518 = vld [vmem:[%s1 + $0x4] sm:$0xf]
    %v521 = vunpack.c.l.b16 %v517
    %v522 = vunpack.c.l.b16 %v518
    %v523 = vpack.c.b16 %v522, %v521
    %vm525 = vcmask 130048
    %v527 = vsel %vm525, %v433, 0
    %v530 = vsel %vm525, %v434, 0
    %v533 = vsel %vm525, %v435, 0
    %v536 = vsel %vm525, %v436, 0
    %v539 = vsel %vm525, %v437, 0
    %v542 = vsel %vm525, %v438, 0
    %v545 = vsel %vm525, %v439, 0
    %v548 = vsel %vm525, %v440, 0
    %550 = vmatpush.bf16.msra.mxu0 0
    %551 = vmatpush.bf16.msra.mxu0 0
    %552 = vmatpush.bf16.msra.mxu0 0
    %553 = vmatpush.bf16.msra.mxu0 0
    %554 = vmatpush.bf16.msra.mxu0 0
    %555 = vmatpush.bf16.msra.mxu0 0
    %556 = vmatpush.bf16.msra.mxu0 0
    %557 = vmatpush.bf16.msra.mxu0 %v523
    %558 = vmatmul.bf16.gmra.mxu0 %v527
    %v559 = vpop.f32.mrf.mxu0
    %v560 = vadd.f32 0.0, %v559
    %v561 = vpop.f32.mrf.mxu0
    %v562 = vadd.f32 0.0, %v561
    %563 = vmatmul.bf16.gmra.mxu0 %v530
    %v564 = vpop.f32.mrf.mxu0
    %v565 = vadd.f32 0.0, %v564
    %v566 = vpop.f32.mrf.mxu0
    %v567 = vadd.f32 0.0, %v566
    %568 = vmatmul.bf16.gmra.mxu0 %v533
    %v569 = vpop.f32.mrf.mxu0
    %v570 = vadd.f32 0.0, %v569
    %v571 = vpop.f32.mrf.mxu0
    %v572 = vadd.f32 0.0, %v571
    %573 = vmatmul.bf16.gmra.mxu0 %v536
    %v574 = vpop.f32.mrf.mxu0
    %v575 = vadd.f32 0.0, %v574
    %v576 = vpop.f32.mrf.mxu0
    %v577 = vadd.f32 0.0, %v576
    %578 = vmatmul.bf16.gmra.mxu0 %v539
    %v579 = vpop.f32.mrf.mxu0
    %v580 = vadd.f32 0.0, %v579
    %v581 = vpop.f32.mrf.mxu0
    %v582 = vadd.f32 0.0, %v581
    %583 = vmatmul.bf16.gmra.mxu0 %v542
    %v584 = vpop.f32.mrf.mxu0
    %v585 = vadd.f32 0.0, %v584
    %v586 = vpop.f32.mrf.mxu0
    %v587 = vadd.f32 0.0, %v586
    %588 = vmatmul.bf16.gmra.mxu0 %v545
    %v589 = vpop.f32.mrf.mxu0
    %v590 = vadd.f32 0.0, %v589
    %v591 = vpop.f32.mrf.mxu0
    %v592 = vadd.f32 0.0, %v591
    %593 = vmatmul.bf16.gmra.mxu0 %v548
    %v594 = vpop.f32.mrf.mxu0
    %v595 = vadd.f32 0.0, %v594
    %v596 = vpop.f32.mrf.mxu0
    %v597 = vadd.f32 0.0, %v596
    %598 = vdwg.mxu0
    %v615 = vunpack.c.l.b16 %v127
    %v616 = vunpack.c.l.b16 %v128
    %v617 = vunpack.c.l.b16 %v129
    %v618 = vunpack.c.l.b16 %v130
    %v619 = vunpack.c.l.b16 %v131
    %v620 = vunpack.c.l.b16 %v132
    %v621 = vunpack.c.l.b16 %v133
    %v622 = vunpack.c.l.b16 %v134
    %v623 = vunpack.c.l.b16 %v135
    %v624 = vunpack.c.l.b16 %v136
    %v625 = vunpack.c.l.b16 %v137
    %v626 = vunpack.c.l.b16 %v138
    %v627 = vunpack.c.l.b16 %v139
    %v628 = vunpack.c.l.b16 %v140
    %v629 = vunpack.c.l.b16 %v141
    %v630 = vunpack.c.l.b16 %v142
    %v631 = vpack.c.b16 %v616, %v615
    %v632 = vpack.c.b16 %v618, %v617
    %v633 = vpack.c.b16 %v620, %v619
    %v634 = vpack.c.b16 %v622, %v621
    %v635 = vpack.c.b16 %v624, %v623
    %v636 = vpack.c.b16 %v626, %v625
    %v637 = vpack.c.b16 %v628, %v627
    %v638 = vpack.c.b16 %v630, %v629
    %v641 = vunpack.c.l.b16 %v515
    %v642 = vunpack.c.l.b16 %v516
    %v643 = vpack.c.b16 %v642, %v641
    %v646 = vsel %vm525, %v631, 0
    %v649 = vsel %vm525, %v632, 0
    %v652 = vsel %vm525, %v633, 0
    %v655 = vsel %vm525, %v634, 0
    %v658 = vsel %vm525, %v635, 0
    %v661 = vsel %vm525, %v636, 0
    %v664 = vsel %vm525, %v637, 0
    %v667 = vsel %vm525, %v638, 0
    %669 = vmatpush.bf16.msra.mxu0 0
    %670 = vmatpush.bf16.msra.mxu0 0
    %671 = vmatpush.bf16.msra.mxu0 0
    %672 = vmatpush.bf16.msra.mxu0 0
    %673 = vmatpush.bf16.msra.mxu0 0
    %674 = vmatpush.bf16.msra.mxu0 0
    %675 = vmatpush.bf16.msra.mxu0 0
    %676 = vmatpush.bf16.msra.mxu0 %v643
    %677 = vmatmul.bf16.gmra.mxu0 %v646
    %v678 = vpop.f32.mrf.mxu0
    %v679 = vadd.f32 %v560, %v678
    %v680 = vpop.f32.mrf.mxu0
    %v681 = vadd.f32 %v562, %v680
    %682 = vmatmul.bf16.gmra.mxu0 %v649
    %v683 = vpop.f32.mrf.mxu0
    %v684 = vadd.f32 %v565, %v683
    %v685 = vpop.f32.mrf.mxu0
    %v686 = vadd.f32 %v567, %v685
    %687 = vmatmul.bf16.gmra.mxu0 %v652
    %v688 = vpop.f32.mrf.mxu0
    %v689 = vadd.f32 %v570, %v688
    %v690 = vpop.f32.mrf.mxu0
    %v691 = vadd.f32 %v572, %v690
    %692 = vmatmul.bf16.gmra.mxu0 %v655
    %v693 = vpop.f32.mrf.mxu0
    %v694 = vadd.f32 %v575, %v693
    %v695 = vpop.f32.mrf.mxu0
    %v696 = vadd.f32 %v577, %v695
    %697 = vmatmul.bf16.gmra.mxu0 %v658
    %v698 = vpop.f32.mrf.mxu0
    %v699 = vadd.f32 %v580, %v698
    %v700 = vpop.f32.mrf.mxu0
    %v701 = vadd.f32 %v582, %v700
    %702 = vmatmul.bf16.gmra.mxu0 %v661
    %v703 = vpop.f32.mrf.mxu0
    %v704 = vadd.f32 %v585, %v703
    %v705 = vpop.f32.mrf.mxu0
    %v706 = vadd.f32 %v587, %v705
    %707 = vmatmul.bf16.gmra.mxu0 %v664
    %v708 = vpop.f32.mrf.mxu0
    %v709 = vadd.f32 %v590, %v708
    %v710 = vpop.f32.mrf.mxu0
    %v711 = vadd.f32 %v592, %v710
    %712 = vmatmul.bf16.gmra.mxu0 %v667
    %v713 = vpop.f32.mrf.mxu0
    %v714 = vadd.f32 %v595, %v713
    %v715 = vpop.f32.mrf.mxu0
    %v716 = vadd.f32 %v597, %v715
    %717 = vdwg.mxu0
    %s718 = scalar_lea.vmem %s1, 16
    %v719 = vld [vmem:[%s718] sm:$0xf]
    %v720 = vld [vmem:[%s718 + $0x4] sm:$0xf]
    %v723 = vunpack.c.l.b16 %v719
    %v724 = vunpack.c.l.b16 %v720
    %v725 = vpack.c.b16 %v724, %v723
    %v728 = vsel %vm525, %v506, 0
    %v731 = vsel %vm525, %v507, 0
    %v734 = vsel %vm525, %v508, 0
    %v737 = vsel %vm525, %v509, 0
    %v740 = vsel %vm525, %v510, 0
    %v743 = vsel %vm525, %v511, 0
    %v746 = vsel %vm525, %v512, 0
    %v749 = vsel %vm525, %v513, 0
    %751 = vmatpush.bf16.msra.mxu0 0
    %752 = vmatpush.bf16.msra.mxu0 0
    %753 = vmatpush.bf16.msra.mxu0 0
    %754 = vmatpush.bf16.msra.mxu0 0
    %755 = vmatpush.bf16.msra.mxu0 0
    %756 = vmatpush.bf16.msra.mxu0 0
    %757 = vmatpush.bf16.msra.mxu0 0
    %758 = vmatpush.bf16.msra.mxu0 %v725
    %759 = vmatmul.bf16.gmra.mxu0 %v728
    %v760 = vpop.f32.mrf.mxu0
    %v761 = vadd.f32 0.0, %v760
    %v762 = vpop.f32.mrf.mxu0
    %v763 = vadd.f32 0.0, %v762
    %764 = vmatmul.bf16.gmra.mxu0 %v731
    %v765 = vpop.f32.mrf.mxu0
    %v766 = vadd.f32 0.0, %v765
    %v767 = vpop.f32.mrf.mxu0
    %v768 = vadd.f32 0.0, %v767
    %769 = vmatmul.bf16.gmra.mxu0 %v734
    %v770 = vpop.f32.mrf.mxu0
    %v771 = vadd.f32 0.0, %v770
    %v772 = vpop.f32.mrf.mxu0
    %v773 = vadd.f32 0.0, %v772
    %774 = vmatmul.bf16.gmra.mxu0 %v737
    %v775 = vpop.f32.mrf.mxu0
    %v776 = vadd.f32 0.0, %v775
    %v777 = vpop.f32.mrf.mxu0
    %v778 = vadd.f32 0.0, %v777
    %779 = vmatmul.bf16.gmra.mxu0 %v740
    %v780 = vpop.f32.mrf.mxu0
    %v781 = vadd.f32 0.0, %v780
    %v782 = vpop.f32.mrf.mxu0
    %v783 = vadd.f32 0.0, %v782
    %784 = vmatmul.bf16.gmra.mxu0 %v743
    %v785 = vpop.f32.mrf.mxu0
    %v786 = vadd.f32 0.0, %v785
    %v787 = vpop.f32.mrf.mxu0
    %v788 = vadd.f32 0.0, %v787
    %789 = vmatmul.bf16.gmra.mxu0 %v746
    %v790 = vpop.f32.mrf.mxu0
    %v791 = vadd.f32 0.0, %v790
    %v792 = vpop.f32.mrf.mxu0
    %v793 = vadd.f32 0.0, %v792
    %794 = vmatmul.bf16.gmra.mxu0 %v749
    %v795 = vpop.f32.mrf.mxu0
    %v796 = vadd.f32 0.0, %v795
    %v797 = vpop.f32.mrf.mxu0
    %v798 = vadd.f32 0.0, %v797
    %799 = vdwg.mxu0
    %v800 = vadd.f32 %v679, %v761
    %v801 = vadd.f32 %v681, %v763
    %v802 = vadd.f32 %v684, %v766
    %v803 = vadd.f32 %v686, %v768
    %v804 = vadd.f32 %v689, %v771
    %v805 = vadd.f32 %v691, %v773
    %v806 = vadd.f32 %v694, %v776
    %v807 = vadd.f32 %v696, %v778
    %v808 = vadd.f32 %v699, %v781
    %v809 = vadd.f32 %v701, %v783
    %v810 = vadd.f32 %v704, %v786
    %v811 = vadd.f32 %v706, %v788
    %v812 = vadd.f32 %v709, %v791
    %v813 = vadd.f32 %v711, %v793
    %v814 = vadd.f32 %v714, %v796
    %v815 = vadd.f32 %v716, %v798
    %v816 = vld [vmem:[%s2] sm:$0x1]
    %v818 = vperm.slane %v816, 0
    %v820 = vmul.f32 %v800, %v818
    %v821 = vmul.f32 %v801, %v818
    %v822 = vmul.f32 %v802, %v818
    %v823 = vmul.f32 %v803, %v818
    %v824 = vmul.f32 %v804, %v818
    %v825 = vmul.f32 %v805, %v818
    %v826 = vmul.f32 %v806, %v818
    %v827 = vmul.f32 %v807, %v818
    %v828 = vmul.f32 %v808, %v818
    %v829 = vmul.f32 %v809, %v818
    %v830 = vmul.f32 %v810, %v818
    %v831 = vmul.f32 %v811, %v818
    %v832 = vmul.f32 %v812, %v818
    %v833 = vmul.f32 %v813, %v818
    %v834 = vmul.f32 %v814, %v818
    %v835 = vmul.f32 %v815, %v818
    %v836 = vld [vmem:[%s3] sm:$0x1]
    %v838 = vperm.slane %v836, 0
    %v840 = vadd.f32 %v820, %v838
    %v841 = vadd.f32 %v821, %v838
    %v842 = vadd.f32 %v822, %v838
    %v843 = vadd.f32 %v823, %v838
    %v844 = vadd.f32 %v824, %v838
    %v845 = vadd.f32 %v825, %v838
    %v846 = vadd.f32 %v826, %v838
    %v847 = vadd.f32 %v827, %v838
    %v848 = vadd.f32 %v828, %v838
    %v849 = vadd.f32 %v829, %v838
    %v850 = vadd.f32 %v830, %v838
    %v851 = vadd.f32 %v831, %v838
    %v852 = vadd.f32 %v832, %v838
    %v853 = vadd.f32 %v833, %v838
    %v854 = vadd.f32 %v834, %v838
    %v855 = vadd.f32 %v835, %v838
    %v856 = vmax.f32 %v840, 0.0
    %v857 = vmax.f32 %v841, 0.0
    %v858 = vmax.f32 %v842, 0.0
    %v859 = vmax.f32 %v843, 0.0
    %v860 = vmax.f32 %v844, 0.0
    %v861 = vmax.f32 %v845, 0.0
    %v862 = vmax.f32 %v846, 0.0
    %v863 = vmax.f32 %v847, 0.0
    %v864 = vmax.f32 %v848, 0.0
    %v865 = vmax.f32 %v849, 0.0
    %v866 = vmax.f32 %v850, 0.0
    %v867 = vmax.f32 %v851, 0.0
    %v868 = vmax.f32 %v852, 0.0
    %v869 = vmax.f32 %v853, 0.0
    %v870 = vmax.f32 %v854, 0.0
    %v871 = vmax.f32 %v855, 0.0
    %v872 = vpack.c.bf16 %v857, %v856
    %v873 = vpack.c.bf16 %v859, %v858
    %v874 = vpack.c.bf16 %v861, %v860
    %v875 = vpack.c.bf16 %v863, %v862
    %v876 = vpack.c.bf16 %v865, %v864
    %v877 = vpack.c.bf16 %v867, %v866
    %v878 = vpack.c.bf16 %v869, %v868
    %v879 = vpack.c.bf16 %v871, %v870
    %v880 = vrot.slane %v856, 7
    %v881 = vrot.slane %v857, 7
    %v882 = vrot.slane %v858, 7
    %v883 = vrot.slane %v859, 7
    %v884 = vrot.slane %v860, 7
    %v885 = vrot.slane %v861, 7
    %v886 = vrot.slane %v862, 7
    %v887 = vrot.slane %v863, 7
    %v888 = vrot.slane %v864, 7
    %v889 = vrot.slane %v865, 7
    %v890 = vrot.slane %v866, 7
    %v891 = vrot.slane %v867, 7
    %v892 = vrot.slane %v868, 7
    %v893 = vrot.slane %v869, 7
    %v894 = vrot.slane %v870, 7
    %v895 = vrot.slane %v871, 7
    %v896 = vsel %vm177, %v894, %v895
    %v897 = vsel %vm177, %v893, %v894
    %v898 = vsel %vm177, %v892, %v893
    %v899 = vsel %vm177, %v891, %v892
    %v900 = vsel %vm177, %v890, %v891
    %v901 = vsel %vm177, %v889, %v890
    %v902 = vsel %vm177, %v888, %v889
    %v903 = vsel %vm177, %v887, %v888
    %v904 = vsel %vm177, %v886, %v887
    %v905 = vsel %vm177, %v885, %v886
    %v906 = vsel %vm177, %v884, %v885
    %v907 = vsel %vm177, %v883, %v884
    %v908 = vsel %vm177, %v882, %v883
    %v909 = vsel %vm177, %v881, %v882
    %v910 = vsel %vm177, %v880, %v881
    %v911 = vsel %vm177, %v895, %v880
    %v912 = vsel %vm401, 0.0, %v911
    %v913 = vsel %vm402, 0.0, %v910
    %v914 = vsel %vm403, 0.0, %v909
    %v915 = vsel %vm404, 0.0, %v908
    %v916 = vsel %vm405, 0.0, %v907
    %v917 = vsel %vm406, 0.0, %v906
    %v918 = vsel %vm407, 0.0, %v905
    %v919 = vsel %vm408, 0.0, %v904
    %v920 = vsel %vm409, 0.0, %v903
    %v921 = vsel %vm410, 0.0, %v902
    %v922 = vsel %vm411, 0.0, %v901
    %v923 = vsel %vm412, 0.0, %v900
    %v924 = vsel %vm413, 0.0, %v899
    %v925 = vsel %vm414, 0.0, %v898
    %v926 = vsel %vm415, 0.0, %v897
    %v927 = vsel %vm416, 0.0, %v896
    %v928 = vpack.c.bf16 %v913, %v912
    %v929 = vpack.c.bf16 %v915, %v914
    %v930 = vpack.c.bf16 %v917, %v916
    %v931 = vpack.c.bf16 %v919, %v918
    %v932 = vpack.c.bf16 %v921, %v920
    %v933 = vpack.c.bf16 %v923, %v922
    %v934 = vpack.c.bf16 %v925, %v924
    %v935 = vpack.c.bf16 %v927, %v926
    %v936 = vrot.slane %v856, 1
    %v937 = vrot.slane %v857, 1
    %v938 = vrot.slane %v858, 1
    %v939 = vrot.slane %v859, 1
    %v940 = vrot.slane %v860, 1
    %v941 = vrot.slane %v861, 1
    %v942 = vrot.slane %v862, 1
    %v943 = vrot.slane %v863, 1
    %v944 = vrot.slane %v864, 1
    %v945 = vrot.slane %v865, 1
    %v946 = vrot.slane %v866, 1
    %v947 = vrot.slane %v867, 1
    %v948 = vrot.slane %v868, 1
    %v949 = vrot.slane %v869, 1
    %v950 = vrot.slane %v870, 1
    %v951 = vrot.slane %v871, 1
    %v952 = vsel %vm457, %v950, %v951
    %v953 = vsel %vm457, %v949, %v950
    %v954 = vsel %vm457, %v948, %v949
    %v955 = vsel %vm457, %v947, %v948
    %v956 = vsel %vm457, %v946, %v947
    %v957 = vsel %vm457, %v945, %v946
    %v958 = vsel %vm457, %v944, %v945
    %v959 = vsel %vm457, %v943, %v944
    %v960 = vsel %vm457, %v942, %v943
    %v961 = vsel %vm457, %v941, %v942
    %v962 = vsel %vm457, %v940, %v941
    %v963 = vsel %vm457, %v939, %v940
    %v964 = vsel %vm457, %v938, %v939
    %v965 = vsel %vm457, %v937, %v938
    %v966 = vsel %vm457, %v936, %v937
    %v967 = vsel %vm457, %v951, %v936
    %v968 = vsel %vm474, 0.0, %v966
    %v969 = vsel %vm475, 0.0, %v965
    %v970 = vsel %vm476, 0.0, %v964
    %v971 = vsel %vm477, 0.0, %v963
    %v972 = vsel %vm478, 0.0, %v962
    %v973 = vsel %vm479, 0.0, %v961
    %v974 = vsel %vm480, 0.0, %v960
    %v975 = vsel %vm481, 0.0, %v959
    %v976 = vsel %vm482, 0.0, %v958
    %v977 = vsel %vm483, 0.0, %v957
    %v978 = vsel %vm484, 0.0, %v956
    %v979 = vsel %vm485, 0.0, %v955
    %v980 = vsel %vm486, 0.0, %v954
    %v981 = vsel %vm487, 0.0, %v953
    %v982 = vsel %vm488, 0.0, %v952
    %v983 = vsel %vm489, 0.0, %v967
    %v984 = vpack.c.bf16 %v969, %v968
    %v985 = vpack.c.bf16 %v971, %v970
    %v986 = vpack.c.bf16 %v973, %v972
    %v987 = vpack.c.bf16 %v975, %v974
    %v988 = vpack.c.bf16 %v977, %v976
    %v989 = vpack.c.bf16 %v979, %v978
    %v990 = vpack.c.bf16 %v981, %v980
    %v991 = vpack.c.bf16 %v983, %v982
    %s992 = scalar_lea.vmem %s4, 16
    %v993 = vld [vmem:[%s992] sm:$0xf]
    %v994 = vld [vmem:[%s992 + $0x4] sm:$0xf]
    %v995 = vld [vmem:[%s992 + $0x8] sm:$0xf]
    %v996 = vld [vmem:[%s992 + $0xc] sm:$0xf]
    %v997 = vld [vmem:[%s4] sm:$0xf]
    %v998 = vld [vmem:[%s4 + $0x4] sm:$0xf]
    %v999 = vld [vmem:[%s4 + $0x8] sm:$0xf]
    %v1000 = vld [vmem:[%s4 + $0xc] sm:$0xf]
    %v1005 = vunpack.c.l.b16 %v997
    %v1006 = vunpack.c.l.b16 %v998
    %v1007 = vunpack.c.l.b16 %v999
    %v1008 = vunpack.c.l.b16 %v1000
    %v1009 = vpack.c.b16 %v1006, %v1005
    %v1010 = vpack.c.b16 %v1008, %v1007
    %vm1013 = vcmask 261120
    %v1015 = vsel %vm1013, %v928, 0
    %v1018 = vsel %vm1013, %v929, 0
    %v1021 = vsel %vm1013, %v930, 0
    %v1024 = vsel %vm1013, %v931, 0
    %v1027 = vsel %vm1013, %v932, 0
    %v1030 = vsel %vm1013, %v933, 0
    %v1033 = vsel %vm1013, %v934, 0
    %v1036 = vsel %vm1013, %v935, 0
    %1038 = vmatpush.bf16.msra.mxu0 0
    %1039 = vmatpush.bf16.msra.mxu0 0
    %1040 = vmatpush.bf16.msra.mxu0 0
    %1041 = vmatpush.bf16.msra.mxu0 0
    %1042 = vmatpush.bf16.msra.mxu0 0
    %1043 = vmatpush.bf16.msra.mxu0 0
    %1044 = vmatpush.bf16.msra.mxu0 %v1010
    %1045 = vmatpush.bf16.msra.mxu0 %v1009
    %1046 = vmatmul.bf16.gmra.mxu0 %v1015
    %v1047 = vpop.f32.mrf.mxu0
    %v1048 = vadd.f32 0.0, %v1047
    %v1049 = vpop.f32.mrf.mxu0
    %v1050 = vadd.f32 0.0, %v1049
    %1051 = vmatmul.bf16.gmra.mxu0 %v1018
    %v1052 = vpop.f32.mrf.mxu0
    %v1053 = vadd.f32 0.0, %v1052
    %v1054 = vpop.f32.mrf.mxu0
    %v1055 = vadd.f32 0.0, %v1054
    %1056 = vmatmul.bf16.gmra.mxu0 %v1021
    %v1057 = vpop.f32.mrf.mxu0
    %v1058 = vadd.f32 0.0, %v1057
    %v1059 = vpop.f32.mrf.mxu0
    %v1060 = vadd.f32 0.0, %v1059
    %1061 = vmatmul.bf16.gmra.mxu0 %v1024
    %v1062 = vpop.f32.mrf.mxu0
    %v1063 = vadd.f32 0.0, %v1062
    %v1064 = vpop.f32.mrf.mxu0
    %v1065 = vadd.f32 0.0, %v1064
    %1066 = vmatmul.bf16.gmra.mxu0 %v1027
    %v1067 = vpop.f32.mrf.mxu0
    %v1068 = vadd.f32 0.0, %v1067
    %v1069 = vpop.f32.mrf.mxu0
    %v1070 = vadd.f32 0.0, %v1069
    %1071 = vmatmul.bf16.gmra.mxu0 %v1030
    %v1072 = vpop.f32.mrf.mxu0
    %v1073 = vadd.f32 0.0, %v1072
    %v1074 = vpop.f32.mrf.mxu0
    %v1075 = vadd.f32 0.0, %v1074
    %1076 = vmatmul.bf16.gmra.mxu0 %v1033
    %v1077 = vpop.f32.mrf.mxu0
    %v1078 = vadd.f32 0.0, %v1077
    %v1079 = vpop.f32.mrf.mxu0
    %v1080 = vadd.f32 0.0, %v1079
    %1081 = vmatmul.bf16.gmra.mxu0 %v1036
    %v1082 = vpop.f32.mrf.mxu0
    %v1083 = vadd.f32 0.0, %v1082
    %v1084 = vpop.f32.mrf.mxu0
    %v1085 = vadd.f32 0.0, %v1084
    %1086 = vdwg.mxu0
    %v1091 = vunpack.c.l.b16 %v993
    %v1092 = vunpack.c.l.b16 %v994
    %v1093 = vunpack.c.l.b16 %v995
    %v1094 = vunpack.c.l.b16 %v996
    %v1095 = vpack.c.b16 %v1092, %v1091
    %v1096 = vpack.c.b16 %v1094, %v1093
    %v1100 = vsel %vm1013, %v872, 0
    %v1103 = vsel %vm1013, %v873, 0
    %v1106 = vsel %vm1013, %v874, 0
    %v1109 = vsel %vm1013, %v875, 0
    %v1112 = vsel %vm1013, %v876, 0
    %v1115 = vsel %vm1013, %v877, 0
    %v1118 = vsel %vm1013, %v878, 0
    %v1121 = vsel %vm1013, %v879, 0
    %1123 = vmatpush.bf16.msra.mxu0 0
    %1124 = vmatpush.bf16.msra.mxu0 0
    %1125 = vmatpush.bf16.msra.mxu0 0
    %1126 = vmatpush.bf16.msra.mxu0 0
    %1127 = vmatpush.bf16.msra.mxu0 0
    %1128 = vmatpush.bf16.msra.mxu0 0
    %1129 = vmatpush.bf16.msra.mxu0 %v1096
    %1130 = vmatpush.bf16.msra.mxu0 %v1095
    %1131 = vmatmul.bf16.gmra.mxu0 %v1100
    %v1132 = vpop.f32.mrf.mxu0
    %v1133 = vadd.f32 %v1048, %v1132
    %v1134 = vpop.f32.mrf.mxu0
    %v1135 = vadd.f32 %v1050, %v1134
    %1136 = vmatmul.bf16.gmra.mxu0 %v1103
    %v1137 = vpop.f32.mrf.mxu0
    %v1138 = vadd.f32 %v1053, %v1137
    %v1139 = vpop.f32.mrf.mxu0
    %v1140 = vadd.f32 %v1055, %v1139
    %1141 = vmatmul.bf16.gmra.mxu0 %v1106
    %v1142 = vpop.f32.mrf.mxu0
    %v1143 = vadd.f32 %v1058, %v1142
    %v1144 = vpop.f32.mrf.mxu0
    %v1145 = vadd.f32 %v1060, %v1144
    %1146 = vmatmul.bf16.gmra.mxu0 %v1109
    %v1147 = vpop.f32.mrf.mxu0
    %v1148 = vadd.f32 %v1063, %v1147
    %v1149 = vpop.f32.mrf.mxu0
    %v1150 = vadd.f32 %v1065, %v1149
    %1151 = vmatmul.bf16.gmra.mxu0 %v1112
    %v1152 = vpop.f32.mrf.mxu0
    %v1153 = vadd.f32 %v1068, %v1152
    %v1154 = vpop.f32.mrf.mxu0
    %v1155 = vadd.f32 %v1070, %v1154
    %1156 = vmatmul.bf16.gmra.mxu0 %v1115
    %v1157 = vpop.f32.mrf.mxu0
    %v1158 = vadd.f32 %v1073, %v1157
    %v1159 = vpop.f32.mrf.mxu0
    %v1160 = vadd.f32 %v1075, %v1159
    %1161 = vmatmul.bf16.gmra.mxu0 %v1118
    %v1162 = vpop.f32.mrf.mxu0
    %v1163 = vadd.f32 %v1078, %v1162
    %v1164 = vpop.f32.mrf.mxu0
    %v1165 = vadd.f32 %v1080, %v1164
    %1166 = vmatmul.bf16.gmra.mxu0 %v1121
    %v1167 = vpop.f32.mrf.mxu0
    %v1168 = vadd.f32 %v1083, %v1167
    %v1169 = vpop.f32.mrf.mxu0
    %v1170 = vadd.f32 %v1085, %v1169
    %1171 = vdwg.mxu0
    %s1172 = scalar_lea.vmem %s4, 32
    %v1173 = vld [vmem:[%s1172] sm:$0xf]
    %v1174 = vld [vmem:[%s1172 + $0x4] sm:$0xf]
    %v1175 = vld [vmem:[%s1172 + $0x8] sm:$0xf]
    %v1176 = vld [vmem:[%s1172 + $0xc] sm:$0xf]
    %v1181 = vunpack.c.l.b16 %v1173
    %v1182 = vunpack.c.l.b16 %v1174
    %v1183 = vunpack.c.l.b16 %v1175
    %v1184 = vunpack.c.l.b16 %v1176
    %v1185 = vpack.c.b16 %v1182, %v1181
    %v1186 = vpack.c.b16 %v1184, %v1183
    %v1190 = vsel %vm1013, %v984, 0
    %v1193 = vsel %vm1013, %v985, 0
    %v1196 = vsel %vm1013, %v986, 0
    %v1199 = vsel %vm1013, %v987, 0
    %v1202 = vsel %vm1013, %v988, 0
    %v1205 = vsel %vm1013, %v989, 0
    %v1208 = vsel %vm1013, %v990, 0
    %v1211 = vsel %vm1013, %v991, 0
    %1213 = vmatpush.bf16.msra.mxu0 0
    %1214 = vmatpush.bf16.msra.mxu0 0
    %1215 = vmatpush.bf16.msra.mxu0 0
    %1216 = vmatpush.bf16.msra.mxu0 0
    %1217 = vmatpush.bf16.msra.mxu0 0
    %1218 = vmatpush.bf16.msra.mxu0 0
    %1219 = vmatpush.bf16.msra.mxu0 %v1186
    %1220 = vmatpush.bf16.msra.mxu0 %v1185
    %1221 = vmatmul.bf16.gmra.mxu0 %v1190
    %v1222 = vpop.f32.mrf.mxu0
    %v1223 = vadd.f32 0.0, %v1222
    %v1224 = vpop.f32.mrf.mxu0
    %v1225 = vadd.f32 0.0, %v1224
    %1226 = vmatmul.bf16.gmra.mxu0 %v1193
    %v1227 = vpop.f32.mrf.mxu0
    %v1228 = vadd.f32 0.0, %v1227
    %v1229 = vpop.f32.mrf.mxu0
    %v1230 = vadd.f32 0.0, %v1229
    %1231 = vmatmul.bf16.gmra.mxu0 %v1196
    %v1232 = vpop.f32.mrf.mxu0
    %v1233 = vadd.f32 0.0, %v1232
    %v1234 = vpop.f32.mrf.mxu0
    %v1235 = vadd.f32 0.0, %v1234
    %1236 = vmatmul.bf16.gmra.mxu0 %v1199
    %v1237 = vpop.f32.mrf.mxu0
    %v1238 = vadd.f32 0.0, %v1237
    %v1239 = vpop.f32.mrf.mxu0
    %v1240 = vadd.f32 0.0, %v1239
    %1241 = vmatmul.bf16.gmra.mxu0 %v1202
    %v1242 = vpop.f32.mrf.mxu0
    %v1243 = vadd.f32 0.0, %v1242
    %v1244 = vpop.f32.mrf.mxu0
    %v1245 = vadd.f32 0.0, %v1244
    %1246 = vmatmul.bf16.gmra.mxu0 %v1205
    %v1247 = vpop.f32.mrf.mxu0
    %v1248 = vadd.f32 0.0, %v1247
    %v1249 = vpop.f32.mrf.mxu0
    %v1250 = vadd.f32 0.0, %v1249
    %1251 = vmatmul.bf16.gmra.mxu0 %v1208
    %v1252 = vpop.f32.mrf.mxu0
    %v1253 = vadd.f32 0.0, %v1252
    %v1254 = vpop.f32.mrf.mxu0
    %v1255 = vadd.f32 0.0, %v1254
    %1256 = vmatmul.bf16.gmra.mxu0 %v1211
    %v1257 = vpop.f32.mrf.mxu0
    %v1258 = vadd.f32 0.0, %v1257
    %v1259 = vpop.f32.mrf.mxu0
    %v1260 = vadd.f32 0.0, %v1259
    %1261 = vdwg.mxu0
    %v1262 = vadd.f32 %v1133, %v1223
    %v1263 = vadd.f32 %v1135, %v1225
    %v1264 = vadd.f32 %v1138, %v1228
    %v1265 = vadd.f32 %v1140, %v1230
    %v1266 = vadd.f32 %v1143, %v1233
    %v1267 = vadd.f32 %v1145, %v1235
    %v1268 = vadd.f32 %v1148, %v1238
    %v1269 = vadd.f32 %v1150, %v1240
    %v1270 = vadd.f32 %v1153, %v1243
    %v1271 = vadd.f32 %v1155, %v1245
    %v1272 = vadd.f32 %v1158, %v1248
    %v1273 = vadd.f32 %v1160, %v1250
    %v1274 = vadd.f32 %v1163, %v1253
    %v1275 = vadd.f32 %v1165, %v1255
    %v1276 = vadd.f32 %v1168, %v1258
    %v1277 = vadd.f32 %v1170, %v1260
    %v1278 = vld [vmem:[%s5] sm:$0x1]
    %v1280 = vperm.slane %v1278, 0
    %v1282 = vmul.f32 %v1262, %v1280
    %v1283 = vmul.f32 %v1263, %v1280
    %v1284 = vmul.f32 %v1264, %v1280
    %v1285 = vmul.f32 %v1265, %v1280
    %v1286 = vmul.f32 %v1266, %v1280
    %v1287 = vmul.f32 %v1267, %v1280
    %v1288 = vmul.f32 %v1268, %v1280
    %v1289 = vmul.f32 %v1269, %v1280
    %v1290 = vmul.f32 %v1270, %v1280
    %v1291 = vmul.f32 %v1271, %v1280
    %v1292 = vmul.f32 %v1272, %v1280
    %v1293 = vmul.f32 %v1273, %v1280
    %v1294 = vmul.f32 %v1274, %v1280
    %v1295 = vmul.f32 %v1275, %v1280
    %v1296 = vmul.f32 %v1276, %v1280
    %v1297 = vmul.f32 %v1277, %v1280
    %v1298 = vld [vmem:[%s6] sm:$0x1]
    %v1300 = vperm.slane %v1298, 0
    %v1302 = vadd.f32 %v1282, %v1300
    %v1303 = vadd.f32 %v1283, %v1300
    %v1304 = vadd.f32 %v1284, %v1300
    %v1305 = vadd.f32 %v1285, %v1300
    %v1306 = vadd.f32 %v1286, %v1300
    %v1307 = vadd.f32 %v1287, %v1300
    %v1308 = vadd.f32 %v1288, %v1300
    %v1309 = vadd.f32 %v1289, %v1300
    %v1310 = vadd.f32 %v1290, %v1300
    %v1311 = vadd.f32 %v1291, %v1300
    %v1312 = vadd.f32 %v1292, %v1300
    %v1313 = vadd.f32 %v1293, %v1300
    %v1314 = vadd.f32 %v1294, %v1300
    %v1315 = vadd.f32 %v1295, %v1300
    %v1316 = vadd.f32 %v1296, %v1300
    %v1317 = vadd.f32 %v1297, %v1300
    %v1318 = vmax.f32 %v1302, 0.0
    %v1319 = vmax.f32 %v1303, 0.0
    %v1320 = vmax.f32 %v1304, 0.0
    %v1321 = vmax.f32 %v1305, 0.0
    %v1322 = vmax.f32 %v1306, 0.0
    %v1323 = vmax.f32 %v1307, 0.0
    %v1324 = vmax.f32 %v1308, 0.0
    %v1325 = vmax.f32 %v1309, 0.0
    %v1326 = vmax.f32 %v1310, 0.0
    %v1327 = vmax.f32 %v1311, 0.0
    %v1328 = vmax.f32 %v1312, 0.0
    %v1329 = vmax.f32 %v1313, 0.0
    %v1330 = vmax.f32 %v1314, 0.0
    %v1331 = vmax.f32 %v1315, 0.0
    %v1332 = vmax.f32 %v1316, 0.0
    %v1333 = vmax.f32 %v1317, 0.0
    %v1334 = vpack.c.bf16 %v1319, %v1318
    %v1335 = vpack.c.bf16 %v1321, %v1320
    %v1336 = vpack.c.bf16 %v1323, %v1322
    %v1337 = vpack.c.bf16 %v1325, %v1324
    %v1338 = vpack.c.bf16 %v1327, %v1326
    %v1339 = vpack.c.bf16 %v1329, %v1328
    %v1340 = vpack.c.bf16 %v1331, %v1330
    %v1341 = vpack.c.bf16 %v1333, %v1332
    %v1342 = vrot.slane %v1318, 7
    %v1343 = vrot.slane %v1319, 7
    %v1344 = vrot.slane %v1320, 7
    %v1345 = vrot.slane %v1321, 7
    %v1346 = vrot.slane %v1322, 7
    %v1347 = vrot.slane %v1323, 7
    %v1348 = vrot.slane %v1324, 7
    %v1349 = vrot.slane %v1325, 7
    %v1350 = vrot.slane %v1326, 7
    %v1351 = vrot.slane %v1327, 7
    %v1352 = vrot.slane %v1328, 7
    %v1353 = vrot.slane %v1329, 7
    %v1354 = vrot.slane %v1330, 7
    %v1355 = vrot.slane %v1331, 7
    %v1356 = vrot.slane %v1332, 7
    %v1357 = vrot.slane %v1333, 7
    %v1358 = vsel %vm177, %v1356, %v1357
    %v1359 = vsel %vm177, %v1355, %v1356
    %v1360 = vsel %vm177, %v1354, %v1355
    %v1361 = vsel %vm177, %v1353, %v1354
    %v1362 = vsel %vm177, %v1352, %v1353
    %v1363 = vsel %vm177, %v1351, %v1352
    %v1364 = vsel %vm177, %v1350, %v1351
    %v1365 = vsel %vm177, %v1349, %v1350
    %v1366 = vsel %vm177, %v1348, %v1349
    %v1367 = vsel %vm177, %v1347, %v1348
    %v1368 = vsel %vm177, %v1346, %v1347
    %v1369 = vsel %vm177, %v1345, %v1346
    %v1370 = vsel %vm177, %v1344, %v1345
    %v1371 = vsel %vm177, %v1343, %v1344
    %v1372 = vsel %vm177, %v1342, %v1343
    %v1373 = vsel %vm177, %v1357, %v1342
    %v1374 = vsel %vm401, 0.0, %v1373
    %v1375 = vsel %vm402, 0.0, %v1372
    %v1376 = vsel %vm403, 0.0, %v1371
    %v1377 = vsel %vm404, 0.0, %v1370
    %v1378 = vsel %vm405, 0.0, %v1369
    %v1379 = vsel %vm406, 0.0, %v1368
    %v1380 = vsel %vm407, 0.0, %v1367
    %v1381 = vsel %vm408, 0.0, %v1366
    %v1382 = vsel %vm409, 0.0, %v1365
    %v1383 = vsel %vm410, 0.0, %v1364
    %v1384 = vsel %vm411, 0.0, %v1363
    %v1385 = vsel %vm412, 0.0, %v1362
    %v1386 = vsel %vm413, 0.0, %v1361
    %v1387 = vsel %vm414, 0.0, %v1360
    %v1388 = vsel %vm415, 0.0, %v1359
    %v1389 = vsel %vm416, 0.0, %v1358
    %v1390 = vpack.c.bf16 %v1375, %v1374
    %v1391 = vpack.c.bf16 %v1377, %v1376
    %v1392 = vpack.c.bf16 %v1379, %v1378
    %v1393 = vpack.c.bf16 %v1381, %v1380
    %v1394 = vpack.c.bf16 %v1383, %v1382
    %v1395 = vpack.c.bf16 %v1385, %v1384
    %v1396 = vpack.c.bf16 %v1387, %v1386
    %v1397 = vpack.c.bf16 %v1389, %v1388
    %v1398 = vrot.slane %v1318, 1
    %v1399 = vrot.slane %v1319, 1
    %v1400 = vrot.slane %v1320, 1
    %v1401 = vrot.slane %v1321, 1
    %v1402 = vrot.slane %v1322, 1
    %v1403 = vrot.slane %v1323, 1
    %v1404 = vrot.slane %v1324, 1
    %v1405 = vrot.slane %v1325, 1
    %v1406 = vrot.slane %v1326, 1
    %v1407 = vrot.slane %v1327, 1
    %v1408 = vrot.slane %v1328, 1
    %v1409 = vrot.slane %v1329, 1
    %v1410 = vrot.slane %v1330, 1
    %v1411 = vrot.slane %v1331, 1
    %v1412 = vrot.slane %v1332, 1
    %v1413 = vrot.slane %v1333, 1
    %v1414 = vsel %vm457, %v1412, %v1413
    %v1415 = vsel %vm457, %v1411, %v1412
    %v1416 = vsel %vm457, %v1410, %v1411
    %v1417 = vsel %vm457, %v1409, %v1410
    %v1418 = vsel %vm457, %v1408, %v1409
    %v1419 = vsel %vm457, %v1407, %v1408
    %v1420 = vsel %vm457, %v1406, %v1407
    %v1421 = vsel %vm457, %v1405, %v1406
    %v1422 = vsel %vm457, %v1404, %v1405
    %v1423 = vsel %vm457, %v1403, %v1404
    %v1424 = vsel %vm457, %v1402, %v1403
    %v1425 = vsel %vm457, %v1401, %v1402
    %v1426 = vsel %vm457, %v1400, %v1401
    %v1427 = vsel %vm457, %v1399, %v1400
    %v1428 = vsel %vm457, %v1398, %v1399
    %v1429 = vsel %vm457, %v1413, %v1398
    %v1430 = vsel %vm474, 0.0, %v1428
    %v1431 = vsel %vm475, 0.0, %v1427
    %v1432 = vsel %vm476, 0.0, %v1426
    %v1433 = vsel %vm477, 0.0, %v1425
    %v1434 = vsel %vm478, 0.0, %v1424
    %v1435 = vsel %vm479, 0.0, %v1423
    %v1436 = vsel %vm480, 0.0, %v1422
    %v1437 = vsel %vm481, 0.0, %v1421
    %v1438 = vsel %vm482, 0.0, %v1420
    %v1439 = vsel %vm483, 0.0, %v1419
    %v1440 = vsel %vm484, 0.0, %v1418
    %v1441 = vsel %vm485, 0.0, %v1417
    %v1442 = vsel %vm486, 0.0, %v1416
    %v1443 = vsel %vm487, 0.0, %v1415
    %v1444 = vsel %vm488, 0.0, %v1414
    %v1445 = vsel %vm489, 0.0, %v1429
    %v1446 = vpack.c.bf16 %v1431, %v1430
    %v1447 = vpack.c.bf16 %v1433, %v1432
    %v1448 = vpack.c.bf16 %v1435, %v1434
    %v1449 = vpack.c.bf16 %v1437, %v1436
    %v1450 = vpack.c.bf16 %v1439, %v1438
    %v1451 = vpack.c.bf16 %v1441, %v1440
    %v1452 = vpack.c.bf16 %v1443, %v1442
    %v1453 = vpack.c.bf16 %v1445, %v1444
    %s1454 = scalar_lea.vmem [#allocation2], 16
    %v1455 = vld [vmem:[%s1454] sm:$0xf]
    %v1456 = vld [vmem:[%s1454 + $0x4] sm:$0xf]
    %v1457 = vld [vmem:[%s1454 + $0x8] sm:$0xf]
    %v1458 = vld [vmem:[%s1454 + $0xc] sm:$0xf]
    %v1459 = vld [vmem:[#allocation2] sm:$0xf]
    %v1460 = vld [vmem:[#allocation2 + $0x4] sm:$0xf]
    %v1461 = vld [vmem:[#allocation2 + $0x8] sm:$0xf]
    %v1462 = vld [vmem:[#allocation2 + $0xc] sm:$0xf]
    %v1467 = vunpack.c.l.b16 %v1459
    %v1468 = vunpack.c.l.b16 %v1460
    %v1469 = vunpack.c.l.b16 %v1461
    %v1470 = vunpack.c.l.b16 %v1462
    %v1471 = vpack.c.b16 %v1468, %v1467
    %v1472 = vpack.c.b16 %v1470, %v1469
    %v1476 = vsel %vm1013, %v1390, 0
    %v1479 = vsel %vm1013, %v1391, 0
    %v1482 = vsel %vm1013, %v1392, 0
    %v1485 = vsel %vm1013, %v1393, 0
    %v1488 = vsel %vm1013, %v1394, 0
    %v1491 = vsel %vm1013, %v1395, 0
    %v1494 = vsel %vm1013, %v1396, 0
    %v1497 = vsel %vm1013, %v1397, 0
    %1499 = vmatpush.bf16.msra.mxu0 0
    %1500 = vmatpush.bf16.msra.mxu0 0
    %1501 = vmatpush.bf16.msra.mxu0 0
    %1502 = vmatpush.bf16.msra.mxu0 0
    %1503 = vmatpush.bf16.msra.mxu0 0
    %1504 = vmatpush.bf16.msra.mxu0 0
    %1505 = vmatpush.bf16.msra.mxu0 %v1472
    %1506 = vmatpush.bf16.msra.mxu0 %v1471
    %1507 = vmatmul.bf16.gmra.mxu0 %v1476
    %v1508 = vpop.f32.mrf.mxu0
    %v1509 = vadd.f32 0.0, %v1508
    %v1510 = vpop.f32.mrf.mxu0
    %v1511 = vadd.f32 0.0, %v1510
    %1512 = vmatmul.bf16.gmra.mxu0 %v1479
    %v1513 = vpop.f32.mrf.mxu0
    %v1514 = vadd.f32 0.0, %v1513
    %v1515 = vpop.f32.mrf.mxu0
    %v1516 = vadd.f32 0.0, %v1515
    %1517 = vmatmul.bf16.gmra.mxu0 %v1482
    %v1518 = vpop.f32.mrf.mxu0
    %v1519 = vadd.f32 0.0, %v1518
    %v1520 = vpop.f32.mrf.mxu0
    %v1521 = vadd.f32 0.0, %v1520
    %1522 = vmatmul.bf16.gmra.mxu0 %v1485
    %v1523 = vpop.f32.mrf.mxu0
    %v1524 = vadd.f32 0.0, %v1523
    %v1525 = vpop.f32.mrf.mxu0
    %v1526 = vadd.f32 0.0, %v1525
    %1527 = vmatmul.bf16.gmra.mxu0 %v1488
    %v1528 = vpop.f32.mrf.mxu0
    %v1529 = vadd.f32 0.0, %v1528
    %v1530 = vpop.f32.mrf.mxu0
    %v1531 = vadd.f32 0.0, %v1530
    %1532 = vmatmul.bf16.gmra.mxu0 %v1491
    %v1533 = vpop.f32.mrf.mxu0
    %v1534 = vadd.f32 0.0, %v1533
    %v1535 = vpop.f32.mrf.mxu0
    %v1536 = vadd.f32 0.0, %v1535
    %1537 = vmatmul.bf16.gmra.mxu0 %v1494
    %v1538 = vpop.f32.mrf.mxu0
    %v1539 = vadd.f32 0.0, %v1538
    %v1540 = vpop.f32.mrf.mxu0
    %v1541 = vadd.f32 0.0, %v1540
    %1542 = vmatmul.bf16.gmra.mxu0 %v1497
    %v1543 = vpop.f32.mrf.mxu0
    %v1544 = vadd.f32 0.0, %v1543
    %v1545 = vpop.f32.mrf.mxu0
    %v1546 = vadd.f32 0.0, %v1545
    %1547 = vdwg.mxu0
    %v1552 = vunpack.c.l.b16 %v1455
    %v1553 = vunpack.c.l.b16 %v1456
    %v1554 = vunpack.c.l.b16 %v1457
    %v1555 = vunpack.c.l.b16 %v1458
    %v1556 = vpack.c.b16 %v1553, %v1552
    %v1557 = vpack.c.b16 %v1555, %v1554
    %v1561 = vsel %vm1013, %v1334, 0
    %v1564 = vsel %vm1013, %v1335, 0
    %v1567 = vsel %vm1013, %v1336, 0
    %v1570 = vsel %vm1013, %v1337, 0
    %v1573 = vsel %vm1013, %v1338, 0
    %v1576 = vsel %vm1013, %v1339, 0
    %v1579 = vsel %vm1013, %v1340, 0
    %v1582 = vsel %vm1013, %v1341, 0
    %1584 = vmatpush.bf16.msra.mxu0 0
    %1585 = vmatpush.bf16.msra.mxu0 0
    %1586 = vmatpush.bf16.msra.mxu0 0
    %1587 = vmatpush.bf16.msra.mxu0 0
    %1588 = vmatpush.bf16.msra.mxu0 0
    %1589 = vmatpush.bf16.msra.mxu0 0
    %1590 = vmatpush.bf16.msra.mxu0 %v1557
    %1591 = vmatpush.bf16.msra.mxu0 %v1556
    %1592 = vmatmul.bf16.gmra.mxu0 %v1561
    %v1593 = vpop.f32.mrf.mxu0
    %v1594 = vadd.f32 %v1509, %v1593
    %v1595 = vpop.f32.mrf.mxu0
    %v1596 = vadd.f32 %v1511, %v1595
    %1597 = vmatmul.bf16.gmra.mxu0 %v1564
    %v1598 = vpop.f32.mrf.mxu0
    %v1599 = vadd.f32 %v1514, %v1598
    %v1600 = vpop.f32.mrf.mxu0
    %v1601 = vadd.f32 %v1516, %v1600
    %1602 = vmatmul.bf16.gmra.mxu0 %v1567
    %v1603 = vpop.f32.mrf.mxu0
    %v1604 = vadd.f32 %v1519, %v1603
    %v1605 = vpop.f32.mrf.mxu0
    %v1606 = vadd.f32 %v1521, %v1605
    %1607 = vmatmul.bf16.gmra.mxu0 %v1570
    %v1608 = vpop.f32.mrf.mxu0
    %v1609 = vadd.f32 %v1524, %v1608
    %v1610 = vpop.f32.mrf.mxu0
    %v1611 = vadd.f32 %v1526, %v1610
    %1612 = vmatmul.bf16.gmra.mxu0 %v1573
    %v1613 = vpop.f32.mrf.mxu0
    %v1614 = vadd.f32 %v1529, %v1613
    %v1615 = vpop.f32.mrf.mxu0
    %v1616 = vadd.f32 %v1531, %v1615
    %1617 = vmatmul.bf16.gmra.mxu0 %v1576
    %v1618 = vpop.f32.mrf.mxu0
    %v1619 = vadd.f32 %v1534, %v1618
    %v1620 = vpop.f32.mrf.mxu0
    %v1621 = vadd.f32 %v1536, %v1620
    %1622 = vmatmul.bf16.gmra.mxu0 %v1579
    %v1623 = vpop.f32.mrf.mxu0
    %v1624 = vadd.f32 %v1539, %v1623
    %v1625 = vpop.f32.mrf.mxu0
    %v1626 = vadd.f32 %v1541, %v1625
    %1627 = vmatmul.bf16.gmra.mxu0 %v1582
    %v1628 = vpop.f32.mrf.mxu0
    %v1629 = vadd.f32 %v1544, %v1628
    %v1630 = vpop.f32.mrf.mxu0
    %v1631 = vadd.f32 %v1546, %v1630
    %1632 = vdwg.mxu0
    %s1633 = scalar_lea.vmem [#allocation2], 32
    %v1634 = vld [vmem:[%s1633] sm:$0xf]
    %v1635 = vld [vmem:[%s1633 + $0x4] sm:$0xf]
    %v1636 = vld [vmem:[%s1633 + $0x8] sm:$0xf]
    %v1637 = vld [vmem:[%s1633 + $0xc] sm:$0xf]
    %v1642 = vunpack.c.l.b16 %v1634
    %v1643 = vunpack.c.l.b16 %v1635
    %v1644 = vunpack.c.l.b16 %v1636
    %v1645 = vunpack.c.l.b16 %v1637
    %v1646 = vpack.c.b16 %v1643, %v1642
    %v1647 = vpack.c.b16 %v1645, %v1644
    %v1651 = vsel %vm1013, %v1446, 0
    %v1654 = vsel %vm1013, %v1447, 0
    %v1657 = vsel %vm1013, %v1448, 0
    %v1660 = vsel %vm1013, %v1449, 0
    %v1663 = vsel %vm1013, %v1450, 0
    %v1666 = vsel %vm1013, %v1451, 0
    %v1669 = vsel %vm1013, %v1452, 0
    %v1672 = vsel %vm1013, %v1453, 0
    %1674 = vmatpush.bf16.msra.mxu0 0
    %1675 = vmatpush.bf16.msra.mxu0 0
    %1676 = vmatpush.bf16.msra.mxu0 0
    %1677 = vmatpush.bf16.msra.mxu0 0
    %1678 = vmatpush.bf16.msra.mxu0 0
    %1679 = vmatpush.bf16.msra.mxu0 0
    %1680 = vmatpush.bf16.msra.mxu0 %v1647
    %1681 = vmatpush.bf16.msra.mxu0 %v1646
    %1682 = vmatmul.bf16.gmra.mxu0 %v1651
    %v1683 = vpop.f32.mrf.mxu0
    %v1684 = vadd.f32 0.0, %v1683
    %v1685 = vpop.f32.mrf.mxu0
    %v1686 = vadd.f32 0.0, %v1685
    %1687 = vmatmul.bf16.gmra.mxu0 %v1654
    %v1688 = vpop.f32.mrf.mxu0
    %v1689 = vadd.f32 0.0, %v1688
    %v1690 = vpop.f32.mrf.mxu0
    %v1691 = vadd.f32 0.0, %v1690
    %1692 = vmatmul.bf16.gmra.mxu0 %v1657
    %v1693 = vpop.f32.mrf.mxu0
    %v1694 = vadd.f32 0.0, %v1693
    %v1695 = vpop.f32.mrf.mxu0
    %v1696 = vadd.f32 0.0, %v1695
    %1697 = vmatmul.bf16.gmra.mxu0 %v1660
    %v1698 = vpop.f32.mrf.mxu0
    %v1699 = vadd.f32 0.0, %v1698
    %v1700 = vpop.f32.mrf.mxu0
    %v1701 = vadd.f32 0.0, %v1700
    %1702 = vmatmul.bf16.gmra.mxu0 %v1663
    %v1703 = vpop.f32.mrf.mxu0
    %v1704 = vadd.f32 0.0, %v1703
    %v1705 = vpop.f32.mrf.mxu0
    %v1706 = vadd.f32 0.0, %v1705
    %1707 = vmatmul.bf16.gmra.mxu0 %v1666
    %v1708 = vpop.f32.mrf.mxu0
    %v1709 = vadd.f32 0.0, %v1708
    %v1710 = vpop.f32.mrf.mxu0
    %v1711 = vadd.f32 0.0, %v1710
    %1712 = vmatmul.bf16.gmra.mxu0 %v1669
    %v1713 = vpop.f32.mrf.mxu0
    %v1714 = vadd.f32 0.0, %v1713
    %v1715 = vpop.f32.mrf.mxu0
    %v1716 = vadd.f32 0.0, %v1715
    %1717 = vmatmul.bf16.gmra.mxu0 %v1672
    %v1718 = vpop.f32.mrf.mxu0
    %v1719 = vadd.f32 0.0, %v1718
    %v1720 = vpop.f32.mrf.mxu0
    %v1721 = vadd.f32 0.0, %v1720
    %1722 = vdwg.mxu0
    %v1723 = vadd.f32 %v1594, %v1684
    %v1724 = vadd.f32 %v1596, %v1686
    %v1725 = vadd.f32 %v1599, %v1689
    %v1726 = vadd.f32 %v1601, %v1691
    %v1727 = vadd.f32 %v1604, %v1694
    %v1728 = vadd.f32 %v1606, %v1696
    %v1729 = vadd.f32 %v1609, %v1699
    %v1730 = vadd.f32 %v1611, %v1701
    %v1731 = vadd.f32 %v1614, %v1704
    %v1732 = vadd.f32 %v1616, %v1706
    %v1733 = vadd.f32 %v1619, %v1709
    %v1734 = vadd.f32 %v1621, %v1711
    %v1735 = vadd.f32 %v1624, %v1714
    %v1736 = vadd.f32 %v1626, %v1716
    %v1737 = vadd.f32 %v1629, %v1719
    %v1738 = vadd.f32 %v1631, %v1721
    %v1739 = vld [vmem:[%s8] sm:$0x1]
    %v1741 = vperm.slane %v1739, 0
    %v1743 = vmul.f32 %v1723, %v1741
    %v1744 = vmul.f32 %v1724, %v1741
    %v1745 = vmul.f32 %v1725, %v1741
    %v1746 = vmul.f32 %v1726, %v1741
    %v1747 = vmul.f32 %v1727, %v1741
    %v1748 = vmul.f32 %v1728, %v1741
    %v1749 = vmul.f32 %v1729, %v1741
    %v1750 = vmul.f32 %v1730, %v1741
    %v1751 = vmul.f32 %v1731, %v1741
    %v1752 = vmul.f32 %v1732, %v1741
    %v1753 = vmul.f32 %v1733, %v1741
    %v1754 = vmul.f32 %v1734, %v1741
    %v1755 = vmul.f32 %v1735, %v1741
    %v1756 = vmul.f32 %v1736, %v1741
    %v1757 = vmul.f32 %v1737, %v1741
    %v1758 = vmul.f32 %v1738, %v1741
    %v1759 = vld [vmem:[%s9] sm:$0x1]
    %v1761 = vperm.slane %v1759, 0
    %v1763 = vadd.f32 %v1743, %v1761
    %v1764 = vadd.f32 %v1744, %v1761
    %v1765 = vadd.f32 %v1745, %v1761
    %v1766 = vadd.f32 %v1746, %v1761
    %v1767 = vadd.f32 %v1747, %v1761
    %v1768 = vadd.f32 %v1748, %v1761
    %v1769 = vadd.f32 %v1749, %v1761
    %v1770 = vadd.f32 %v1750, %v1761
    %v1771 = vadd.f32 %v1751, %v1761
    %v1772 = vadd.f32 %v1752, %v1761
    %v1773 = vadd.f32 %v1753, %v1761
    %v1774 = vadd.f32 %v1754, %v1761
    %v1775 = vadd.f32 %v1755, %v1761
    %v1776 = vadd.f32 %v1756, %v1761
    %v1777 = vadd.f32 %v1757, %v1761
    %v1778 = vadd.f32 %v1758, %v1761
    %v1779 = vadd.f32 %v1763, %v856
    %v1780 = vadd.f32 %v1764, %v857
    %v1781 = vadd.f32 %v1765, %v858
    %v1782 = vadd.f32 %v1766, %v859
    %v1783 = vadd.f32 %v1767, %v860
    %v1784 = vadd.f32 %v1768, %v861
    %v1785 = vadd.f32 %v1769, %v862
    %v1786 = vadd.f32 %v1770, %v863
    %v1787 = vadd.f32 %v1771, %v864
    %v1788 = vadd.f32 %v1772, %v865
    %v1789 = vadd.f32 %v1773, %v866
    %v1790 = vadd.f32 %v1774, %v867
    %v1791 = vadd.f32 %v1775, %v868
    %v1792 = vadd.f32 %v1776, %v869
    %v1793 = vadd.f32 %v1777, %v870
    %v1794 = vadd.f32 %v1778, %v871
    %v1795 = vmul.f32 %v1779, 0.5
    %v1796 = vmul.f32 %v1780, 0.5
    %v1797 = vmul.f32 %v1781, 0.5
    %v1798 = vmul.f32 %v1782, 0.5
    %v1799 = vmul.f32 %v1783, 0.5
    %v1800 = vmul.f32 %v1784, 0.5
    %v1801 = vmul.f32 %v1785, 0.5
    %v1802 = vmul.f32 %v1786, 0.5
    %v1803 = vmul.f32 %v1787, 0.5
    %v1804 = vmul.f32 %v1788, 0.5
    %v1805 = vmul.f32 %v1789, 0.5
    %v1806 = vmul.f32 %v1790, 0.5
    %v1807 = vmul.f32 %v1791, 0.5
    %v1808 = vmul.f32 %v1792, 0.5
    %v1809 = vmul.f32 %v1793, 0.5
    %v1810 = vmul.f32 %v1794, 0.5
    %v1811 = vmax.f32 %v1795, 0.0
    %v1812 = vmax.f32 %v1796, 0.0
    %v1813 = vmax.f32 %v1797, 0.0
    %v1814 = vmax.f32 %v1798, 0.0
    %v1815 = vmax.f32 %v1799, 0.0
    %v1816 = vmax.f32 %v1800, 0.0
    %v1817 = vmax.f32 %v1801, 0.0
    %v1818 = vmax.f32 %v1802, 0.0
    %v1819 = vmax.f32 %v1803, 0.0
    %v1820 = vmax.f32 %v1804, 0.0
    %v1821 = vmax.f32 %v1805, 0.0
    %v1822 = vmax.f32 %v1806, 0.0
    %v1823 = vmax.f32 %v1807, 0.0
    %v1824 = vmax.f32 %v1808, 0.0
    %v1825 = vmax.f32 %v1809, 0.0
    %v1826 = vmax.f32 %v1810, 0.0
    %v1827 = vrot.slane %v1811, 7
    %v1828 = vrot.slane %v1812, 7
    %v1829 = vrot.slane %v1813, 7
    %v1830 = vrot.slane %v1814, 7
    %v1831 = vrot.slane %v1815, 7
    %v1832 = vrot.slane %v1816, 7
    %v1833 = vrot.slane %v1817, 7
    %v1834 = vrot.slane %v1818, 7
    %v1835 = vrot.slane %v1819, 7
    %v1836 = vrot.slane %v1820, 7
    %v1837 = vrot.slane %v1821, 7
    %v1838 = vrot.slane %v1822, 7
    %v1839 = vrot.slane %v1823, 7
    %v1840 = vrot.slane %v1824, 7
    %v1841 = vrot.slane %v1825, 7
    %v1842 = vrot.slane %v1826, 7
    %v1843 = vsel %vm177, %v1841, %v1842
    %v1844 = vsel %vm177, %v1840, %v1841
    %v1845 = vsel %vm177, %v1839, %v1840
    %v1846 = vsel %vm177, %v1838, %v1839
    %v1847 = vsel %vm177, %v1837, %v1838
    %v1848 = vsel %vm177, %v1836, %v1837
    %v1849 = vsel %vm177, %v1835, %v1836
    %v1850 = vsel %vm177, %v1834, %v1835
    %v1851 = vsel %vm177, %v1833, %v1834
    %v1852 = vsel %vm177, %v1832, %v1833
    %v1853 = vsel %vm177, %v1831, %v1832
    %v1854 = vsel %vm177, %v1830, %v1831
    %v1855 = vsel %vm177, %v1829, %v1830
    %v1856 = vsel %vm177, %v1828, %v1829
    %v1857 = vsel %vm177, %v1827, %v1828
    %v1858 = vsel %vm177, %v1842, %v1827
    %v1859 = vsel %vm401, 0.0, %v1858
    %v1860 = vsel %vm402, 0.0, %v1857
    %v1861 = vsel %vm403, 0.0, %v1856
    %v1862 = vsel %vm404, 0.0, %v1855
    %v1863 = vsel %vm405, 0.0, %v1854
    %v1864 = vsel %vm406, 0.0, %v1853
    %v1865 = vsel %vm407, 0.0, %v1852
    %v1866 = vsel %vm408, 0.0, %v1851
    %v1867 = vsel %vm409, 0.0, %v1850
    %v1868 = vsel %vm410, 0.0, %v1849
    %v1869 = vsel %vm411, 0.0, %v1848
    %v1870 = vsel %vm412, 0.0, %v1847
    %v1871 = vsel %vm413, 0.0, %v1846
    %v1872 = vsel %vm414, 0.0, %v1845
    %v1873 = vsel %vm415, 0.0, %v1844
    %v1874 = vsel %vm416, 0.0, %v1843
    %v1875 = vmax.f32 %v1859, %v1811
    %v1876 = vmax.f32 %v1860, %v1812
    %v1877 = vmax.f32 %v1861, %v1813
    %v1878 = vmax.f32 %v1862, %v1814
    %v1879 = vmax.f32 %v1863, %v1815
    %v1880 = vmax.f32 %v1864, %v1816
    %v1881 = vmax.f32 %v1865, %v1817
    %v1882 = vmax.f32 %v1866, %v1818
    %v1883 = vmax.f32 %v1867, %v1819
    %v1884 = vmax.f32 %v1868, %v1820
    %v1885 = vmax.f32 %v1869, %v1821
    %v1886 = vmax.f32 %v1870, %v1822
    %v1887 = vmax.f32 %v1871, %v1823
    %v1888 = vmax.f32 %v1872, %v1824
    %v1889 = vmax.f32 %v1873, %v1825
    %v1890 = vmax.f32 %v1874, %v1826
    %v1891 = vrot.slane %v1811, 1
    %v1892 = vrot.slane %v1812, 1
    %v1893 = vrot.slane %v1813, 1
    %v1894 = vrot.slane %v1814, 1
    %v1895 = vrot.slane %v1815, 1
    %v1896 = vrot.slane %v1816, 1
    %v1897 = vrot.slane %v1817, 1
    %v1898 = vrot.slane %v1818, 1
    %v1899 = vrot.slane %v1819, 1
    %v1900 = vrot.slane %v1820, 1
    %v1901 = vrot.slane %v1821, 1
    %v1902 = vrot.slane %v1822, 1
    %v1903 = vrot.slane %v1823, 1
    %v1904 = vrot.slane %v1824, 1
    %v1905 = vrot.slane %v1825, 1
    %v1906 = vrot.slane %v1826, 1
    %v1907 = vsel %vm457, %v1905, %v1906
    %v1908 = vsel %vm457, %v1904, %v1905
    %v1909 = vsel %vm457, %v1903, %v1904
    %v1910 = vsel %vm457, %v1902, %v1903
    %v1911 = vsel %vm457, %v1901, %v1902
    %v1912 = vsel %vm457, %v1900, %v1901
    %v1913 = vsel %vm457, %v1899, %v1900
    %v1914 = vsel %vm457, %v1898, %v1899
    %v1915 = vsel %vm457, %v1897, %v1898
    %v1916 = vsel %vm457, %v1896, %v1897
    %v1917 = vsel %vm457, %v1895, %v1896
    %v1918 = vsel %vm457, %v1894, %v1895
    %v1919 = vsel %vm457, %v1893, %v1894
    %v1920 = vsel %vm457, %v1892, %v1893
    %v1921 = vsel %vm457, %v1891, %v1892
    %v1922 = vsel %vm457, %v1906, %v1891
    %v1923 = vsel %vm474, 0.0, %v1921
    %v1924 = vsel %vm475, 0.0, %v1920
    %v1925 = vsel %vm476, 0.0, %v1919
    %v1926 = vsel %vm477, 0.0, %v1918
    %v1927 = vsel %vm478, 0.0, %v1917
    %v1928 = vsel %vm479, 0.0, %v1916
    %v1929 = vsel %vm480, 0.0, %v1915
    %v1930 = vsel %vm481, 0.0, %v1914
    %v1931 = vsel %vm482, 0.0, %v1913
    %v1932 = vsel %vm483, 0.0, %v1912
    %v1933 = vsel %vm484, 0.0, %v1911
    %v1934 = vsel %vm485, 0.0, %v1910
    %v1935 = vsel %vm486, 0.0, %v1909
    %v1936 = vsel %vm487, 0.0, %v1908
    %v1937 = vsel %vm488, 0.0, %v1907
    %v1938 = vsel %vm489, 0.0, %v1922
    %v1939 = vmax.f32 %v1875, %v1923
    %v1940 = vmax.f32 %v1876, %v1924
    %v1941 = vmax.f32 %v1877, %v1925
    %v1942 = vmax.f32 %v1878, %v1926
    %v1943 = vmax.f32 %v1879, %v1927
    %v1944 = vmax.f32 %v1880, %v1928
    %v1945 = vmax.f32 %v1881, %v1929
    %v1946 = vmax.f32 %v1882, %v1930
    %v1947 = vmax.f32 %v1883, %v1931
    %v1948 = vmax.f32 %v1884, %v1932
    %v1949 = vmax.f32 %v1885, %v1933
    %v1950 = vmax.f32 %v1886, %v1934
    %v1951 = vmax.f32 %v1887, %v1935
    %v1952 = vmax.f32 %v1888, %v1936
    %v1953 = vmax.f32 %v1889, %v1937
    %v1954 = vmax.f32 %v1890, %v1938
    %v1971 = vrot.slane %v1939, 2
    %v1972 = vrot.slane %v1939, 4
    %v1973 = vrot.slane %v1939, 6
    %v1974 = vrot.slane %v1940, 2
    %v1975 = vrot.slane %v1940, 4
    %v1976 = vrot.slane %v1940, 6
    %v1977 = vrot.slane %v1941, 2
    %v1978 = vrot.slane %v1941, 4
    %v1979 = vrot.slane %v1941, 6
    %v1980 = vrot.slane %v1942, 2
    %v1981 = vrot.slane %v1942, 4
    %v1982 = vrot.slane %v1942, 6
    %v1983 = vrot.slane %v1943, 2
    %v1984 = vrot.slane %v1943, 4
    %v1985 = vrot.slane %v1943, 6
    %v1986 = vrot.slane %v1944, 2
    %v1987 = vrot.slane %v1944, 4
    %v1988 = vrot.slane %v1944, 6
    %v1989 = vrot.slane %v1945, 2
    %v1990 = vrot.slane %v1945, 4
    %v1991 = vrot.slane %v1945, 6
    %v1992 = vrot.slane %v1946, 2
    %v1993 = vrot.slane %v1946, 4
    %v1994 = vrot.slane %v1946, 6
    %v1995 = vrot.slane %v1947, 2
    %v1996 = vrot.slane %v1947, 4
    %v1997 = vrot.slane %v1947, 6
    %v1998 = vrot.slane %v1948, 2
    %v1999 = vrot.slane %v1948, 4
    %v2000 = vrot.slane %v1948, 6
    %v2001 = vrot.slane %v1949, 2
    %v2002 = vrot.slane %v1949, 4
    %v2003 = vrot.slane %v1949, 6
    %v2004 = vrot.slane %v1950, 2
    %v2005 = vrot.slane %v1950, 4
    %v2006 = vrot.slane %v1950, 6
    %v2007 = vrot.slane %v1951, 2
    %v2008 = vrot.slane %v1951, 4
    %v2009 = vrot.slane %v1951, 6
    %v2010 = vrot.slane %v1952, 2
    %v2011 = vrot.slane %v1952, 4
    %v2012 = vrot.slane %v1952, 6
    %v2013 = vrot.slane %v1953, 2
    %v2014 = vrot.slane %v1953, 4
    %v2015 = vrot.slane %v1953, 6
    %v2016 = vrot.slane %v1954, 2
    %v2017 = vrot.slane %v1954, 4
    %v2018 = vrot.slane %v1954, 6
    %v2067 = vpack.c.bf16 %v1939, %v1939
    %v2068 = vpack.c.bf16 %v1971, %v1971
    %v2069 = vpack.c.bf16 %v1972, %v1972
    %v2070 = vpack.c.bf16 %v1973, %v1973
    %v2071 = vpack.c.bf16 %v1940, %v1940
    %v2072 = vpack.c.bf16 %v1974, %v1974
    %v2073 = vpack.c.bf16 %v1975, %v1975
    %v2074 = vpack.c.bf16 %v1976, %v1976
    %v2075 = vpack.c.bf16 %v1941, %v1941
    %v2076 = vpack.c.bf16 %v1977, %v1977
    %v2077 = vpack.c.bf16 %v1978, %v1978
    %v2078 = vpack.c.bf16 %v1979, %v1979
    %v2079 = vpack.c.bf16 %v1942, %v1942
    %v2080 = vpack.c.bf16 %v1980, %v1980
    %v2081 = vpack.c.bf16 %v1981, %v1981
    %v2082 = vpack.c.bf16 %v1982, %v1982
    %v2083 = vpack.c.bf16 %v1943, %v1943
    %v2084 = vpack.c.bf16 %v1983, %v1983
    %v2085 = vpack.c.bf16 %v1984, %v1984
    %v2086 = vpack.c.bf16 %v1985, %v1985
    %v2087 = vpack.c.bf16 %v1944, %v1944
    %v2088 = vpack.c.bf16 %v1986, %v1986
    %v2089 = vpack.c.bf16 %v1987, %v1987
    %v2090 = vpack.c.bf16 %v1988, %v1988
    %v2091 = vpack.c.bf16 %v1945, %v1945
    %v2092 = vpack.c.bf16 %v1989, %v1989
    %v2093 = vpack.c.bf16 %v1990, %v1990
    %v2094 = vpack.c.bf16 %v1991, %v1991
    %v2095 = vpack.c.bf16 %v1946, %v1946
    %v2096 = vpack.c.bf16 %v1992, %v1992
    %v2097 = vpack.c.bf16 %v1993, %v1993
    %v2098 = vpack.c.bf16 %v1994, %v1994
    %v2099 = vpack.c.bf16 %v1947, %v1947
    %v2100 = vpack.c.bf16 %v1995, %v1995
    %v2101 = vpack.c.bf16 %v1996, %v1996
    %v2102 = vpack.c.bf16 %v1997, %v1997
    %v2103 = vpack.c.bf16 %v1948, %v1948
    %v2104 = vpack.c.bf16 %v1998, %v1998
    %v2105 = vpack.c.bf16 %v1999, %v1999
    %v2106 = vpack.c.bf16 %v2000, %v2000
    %v2107 = vpack.c.bf16 %v1949, %v1949
    %v2108 = vpack.c.bf16 %v2001, %v2001
    %v2109 = vpack.c.bf16 %v2002, %v2002
    %v2110 = vpack.c.bf16 %v2003, %v2003
    %v2111 = vpack.c.bf16 %v1950, %v1950
    %v2112 = vpack.c.bf16 %v2004, %v2004
    %v2113 = vpack.c.bf16 %v2005, %v2005
    %v2114 = vpack.c.bf16 %v2006, %v2006
    %v2115 = vpack.c.bf16 %v1951, %v1951
    %v2116 = vpack.c.bf16 %v2007, %v2007
    %v2117 = vpack.c.bf16 %v2008, %v2008
    %v2118 = vpack.c.bf16 %v2009, %v2009
    %v2119 = vpack.c.bf16 %v1952, %v1952
    %v2120 = vpack.c.bf16 %v2010, %v2010
    %v2121 = vpack.c.bf16 %v2011, %v2011
    %v2122 = vpack.c.bf16 %v2012, %v2012
    %v2123 = vpack.c.bf16 %v1953, %v1953
    %v2124 = vpack.c.bf16 %v2013, %v2013
    %v2125 = vpack.c.bf16 %v2014, %v2014
    %v2126 = vpack.c.bf16 %v2015, %v2015
    %v2127 = vpack.c.bf16 %v1954, %v1954
    %v2128 = vpack.c.bf16 %v2016, %v2016
    %v2129 = vpack.c.bf16 %v2017, %v2017
    %v2130 = vpack.c.bf16 %v2018, %v2018
    %v2131 = vperm.slane %v1939, 0
    %v2132 = vperm.slane %v1971, 0
    %v2133 = vperm.slane %v1972, 0
    %v2134 = vperm.slane %v1973, 0
    %v2135 = vperm.slane %v1940, 0
    %v2136 = vperm.slane %v1974, 0
    %v2137 = vperm.slane %v1975, 0
    %v2138 = vperm.slane %v1976, 0
    %v2139 = vperm.slane %v1941, 0
    %v2140 = vperm.slane %v1977, 0
    %v2141 = vperm.slane %v1978, 0
    %v2142 = vperm.slane %v1979, 0
    %v2143 = vperm.slane %v1942, 0
    %v2144 = vperm.slane %v1980, 0
    %v2145 = vperm.slane %v1981, 0
    %v2146 = vperm.slane %v1982, 0
    %v2147 = vperm.slane %v1943, 0
    %v2148 = vperm.slane %v1983, 0
    %v2149 = vperm.slane %v1984, 0
    %v2150 = vperm.slane %v1985, 0
    %v2151 = vperm.slane %v1944, 0
    %v2152 = vperm.slane %v1986, 0
    %v2153 = vperm.slane %v1987, 0
    %v2154 = vperm.slane %v1988, 0
    %v2155 = vperm.slane %v1945, 0
    %v2156 = vperm.slane %v1989, 0
    %v2157 = vperm.slane %v1990, 0
    %v2158 = vperm.slane %v1991, 0
    %v2159 = vperm.slane %v1946, 0
    %v2160 = vperm.slane %v1992, 0
    %v2161 = vperm.slane %v1993, 0
    %v2162 = vperm.slane %v1994, 0
    %v2163 = vperm.slane %v1947, 0
    %v2164 = vperm.slane %v1995, 0
    %v2165 = vperm.slane %v1996, 0
    %v2166 = vperm.slane %v1997, 0
    %v2167 = vperm.slane %v1948, 0
    %v2168 = vperm.slane %v1998, 0
    %v2169 = vperm.slane %v1999, 0
    %v2170 = vperm.slane %v2000, 0
    %v2171 = vperm.slane %v1949, 0
    %v2172 = vperm.slane %v2001, 0
    %v2173 = vperm.slane %v2002, 0
    %v2174 = vperm.slane %v2003, 0
    %v2175 = vperm.slane %v1950, 0
    %v2176 = vperm.slane %v2004, 0
    %v2177 = vperm.slane %v2005, 0
    %v2178 = vperm.slane %v2006, 0
    %v2179 = vperm.slane %v1951, 0
    %v2180 = vperm.slane %v2007, 0
    %v2181 = vperm.slane %v2008, 0
    %v2182 = vperm.slane %v2009, 0
    %v2183 = vperm.slane %v1952, 0
    %v2184 = vperm.slane %v2010, 0
    %v2185 = vperm.slane %v2011, 0
    %v2186 = vperm.slane %v2012, 0
    %v2187 = vperm.slane %v1953, 0
    %v2188 = vperm.slane %v2013, 0
    %v2189 = vperm.slane %v2014, 0
    %v2190 = vperm.slane %v2015, 0
    %v2191 = vperm.slane %v1954, 0
    %v2192 = vperm.slane %v2016, 0
    %v2193 = vperm.slane %v2017, 0
    %v2194 = vperm.slane %v2018, 0
    %vm2195 = vcmask 1041409
    %v2196 = vsel %vm2195, %v2132, %v2131
    %vm2197 = vcmask 1042434
    %v2198 = vsel %vm2197, %v2133, %v2196
    %vm2199 = vcmask 1043459
    %v2200 = vsel %vm2199, %v2134, %v2198
    %vm2201 = vcmask 1044484
    %v2202 = vsel %vm2201, %v2135, %v2200
    %vm2203 = vcmask 1045509
    %v2204 = vsel %vm2203, %v2136, %v2202
    %vm2205 = vcmask 1046534
    %v2206 = vsel %vm2205, %v2137, %v2204
    %vm2207 = vcmask 1047559
    %v2208 = vsel %vm2207, %v2138, %v2206
    %v2209 = vsel %vm2195, %v2140, %v2139
    %v2210 = vsel %vm2197, %v2141, %v2209
    %v2211 = vsel %vm2199, %v2142, %v2210
    %v2212 = vsel %vm2201, %v2143, %v2211
    %v2213 = vsel %vm2203, %v2144, %v2212
    %v2214 = vsel %vm2205, %v2145, %v2213
    %v2215 = vsel %vm2207, %v2146, %v2214
    %v2216 = vsel %vm2195, %v2148, %v2147
    %v2217 = vsel %vm2197, %v2149, %v2216
    %v2218 = vsel %vm2199, %v2150, %v2217
    %v2219 = vsel %vm2201, %v2151, %v2218
    %v2220 = vsel %vm2203, %v2152, %v2219
    %v2221 = vsel %vm2205, %v2153, %v2220
    %v2222 = vsel %vm2207, %v2154, %v2221
    %v2223 = vsel %vm2195, %v2156, %v2155
    %v2224 = vsel %vm2197, %v2157, %v2223
    %v2225 = vsel %vm2199, %v2158, %v2224
    %v2226 = vsel %vm2201, %v2159, %v2225
    %v2227 = vsel %vm2203, %v2160, %v2226
    %v2228 = vsel %vm2205, %v2161, %v2227
    %v2229 = vsel %vm2207, %v2162, %v2228
    %v2230 = vsel %vm2195, %v2164, %v2163
    %v2231 = vsel %vm2197, %v2165, %v2230
    %v2232 = vsel %vm2199, %v2166, %v2231
    %v2233 = vsel %vm2201, %v2167, %v2232
    %v2234 = vsel %vm2203, %v2168, %v2233
    %v2235 = vsel %vm2205, %v2169, %v2234
    %v2236 = vsel %vm2207, %v2170, %v2235
    %v2237 = vsel %vm2195, %v2172, %v2171
    %v2238 = vsel %vm2197, %v2173, %v2237
    %v2239 = vsel %vm2199, %v2174, %v2238
    %v2240 = vsel %vm2201, %v2175, %v2239
    %v2241 = vsel %vm2203, %v2176, %v2240
    %v2242 = vsel %vm2205, %v2177, %v2241
    %v2243 = vsel %vm2207, %v2178, %v2242
    %v2244 = vsel %vm2195, %v2180, %v2179
    %v2245 = vsel %vm2197, %v2181, %v2244
    %v2246 = vsel %vm2199, %v2182, %v2245
    %v2247 = vsel %vm2201, %v2183, %v2246
    %v2248 = vsel %vm2203, %v2184, %v2247
    %v2249 = vsel %vm2205, %v2185, %v2248
    %v2250 = vsel %vm2207, %v2186, %v2249
    %v2251 = vsel %vm2195, %v2188, %v2187
    %v2252 = vsel %vm2197, %v2189, %v2251
    %v2253 = vsel %vm2199, %v2190, %v2252
    %v2254 = vsel %vm2201, %v2191, %v2253
    %v2255 = vsel %vm2203, %v2192, %v2254
    %v2256 = vsel %vm2205, %v2193, %v2255
    %v2257 = vsel %vm2207, %v2194, %v2256
    %v2266 = vrot.slane %v2208, 7
    %v2267 = vrot.slane %v2215, 7
    %v2268 = vrot.slane %v2222, 7
    %v2269 = vrot.slane %v2229, 7
    %v2270 = vrot.slane %v2236, 7
    %v2271 = vrot.slane %v2243, 7
    %v2272 = vrot.slane %v2250, 7
    %v2273 = vrot.slane %v2257, 7
    %v2274 = vsel %vm177, %v2272, %v2273
    %v2275 = vsel %vm177, %v2271, %v2272
    %v2276 = vsel %vm177, %v2270, %v2271
    %v2277 = vsel %vm177, %v2269, %v2270
    %v2278 = vsel %vm177, %v2268, %v2269
    %v2279 = vsel %vm177, %v2267, %v2268
    %v2280 = vsel %vm177, %v2266, %v2267
    %v2281 = vsel %vm177, %v2273, %v2266
    %vm2282 = vcmp.lt.s32.totalorder %v176, 0
    %v2283 = vsub.s32 0, %v176
    %v2284 = vsel %vm2282, %v2283, %v176
    %v2285 = vshrl.u32 %v2284, 5
    %v2286 = vand.u32 %v2284, 31
    %v2287 = vsub.s32 0, %v2286
    %v2288 = vsel %vm2282, %v2287, %v2286
    %vm2289 = vcmp.lt.s32.totalorder %v194, 0
    %v2290 = vsub.s32 0, %v194
    %v2291 = vsel %vm2289, %v2290, %v194
    %v2292 = vshrl.u32 %v2291, 5
    %v2293 = vand.u32 %v2291, 31
    %v2294 = vsub.s32 0, %v2293
    %v2295 = vsel %vm2289, %v2294, %v2293
    %vm2296 = vcmp.lt.s32.totalorder %v195, 0
    %v2297 = vsub.s32 0, %v195
    %v2298 = vsel %vm2296, %v2297, %v195
    %v2299 = vshrl.u32 %v2298, 5
    %v2300 = vand.u32 %v2298, 31
    %v2301 = vsub.s32 0, %v2300
    %v2302 = vsel %vm2296, %v2301, %v2300
    %vm2303 = vcmp.lt.s32.totalorder %v196, 0
    %v2304 = vsub.s32 0, %v196
    %v2305 = vsel %vm2303, %v2304, %v196
    %v2306 = vshrl.u32 %v2305, 5
    %v2307 = vand.u32 %v2305, 31
    %v2308 = vsub.s32 0, %v2307
    %v2309 = vsel %vm2303, %v2308, %v2307
    %vm2310 = vcmp.lt.s32.totalorder %v197, 0
    %v2311 = vsub.s32 0, %v197
    %v2312 = vsel %vm2310, %v2311, %v197
    %v2313 = vshrl.u32 %v2312, 5
    %v2314 = vand.u32 %v2312, 31
    %v2315 = vsub.s32 0, %v2314
    %v2316 = vsel %vm2310, %v2315, %v2314
    %vm2317 = vcmp.lt.s32.totalorder %v198, 0
    %v2318 = vsub.s32 0, %v198
    %v2319 = vsel %vm2317, %v2318, %v198
    %v2320 = vshrl.u32 %v2319, 5
    %v2321 = vand.u32 %v2319, 31
    %v2322 = vsub.s32 0, %v2321
    %v2323 = vsel %vm2317, %v2322, %v2321
    %vm2324 = vcmp.lt.s32.totalorder %v199, 0
    %v2325 = vsub.s32 0, %v199
    %v2326 = vsel %vm2324, %v2325, %v199
    %v2327 = vshrl.u32 %v2326, 5
    %v2328 = vand.u32 %v2326, 31
    %v2329 = vsub.s32 0, %v2328
    %v2330 = vsel %vm2324, %v2329, %v2328
    %vm2331 = vcmp.lt.s32.totalorder %v200, 0
    %v2332 = vsub.s32 0, %v200
    %v2333 = vsel %vm2331, %v2332, %v200
    %v2334 = vshrl.u32 %v2333, 5
    %v2335 = vand.u32 %v2333, 31
    %v2336 = vsub.s32 0, %v2335
    %v2337 = vsel %vm2331, %v2336, %v2335
    %vm2338 = vcmp.ne.s32.totalorder %v2288, 0
    %vm2339 = vcmp.ne.s32.totalorder %v2295, 0
    %vm2340 = vcmp.ne.s32.totalorder %v2302, 0
    %vm2341 = vcmp.ne.s32.totalorder %v2309, 0
    %vm2342 = vcmp.ne.s32.totalorder %v2316, 0
    %vm2343 = vcmp.ne.s32.totalorder %v2323, 0
    %vm2344 = vcmp.ne.s32.totalorder %v2330, 0
    %vm2345 = vcmp.ne.s32.totalorder %v2337, 0
    %vm2346 = vcmp.lt.s32.totalorder %v2288, 0
    %vm2347 = vcmp.lt.s32.totalorder %v2295, 0
    %vm2348 = vcmp.lt.s32.totalorder %v2302, 0
    %vm2349 = vcmp.lt.s32.totalorder %v2309, 0
    %vm2350 = vcmp.lt.s32.totalorder %v2316, 0
    %vm2351 = vcmp.lt.s32.totalorder %v2323, 0
    %vm2352 = vcmp.lt.s32.totalorder %v2330, 0
    %vm2353 = vcmp.lt.s32.totalorder %v2337, 0
    %vm2354 = vmand %vm2346, %vm2338
    %vm2355 = vmand %vm2347, %vm2339
    %vm2356 = vmand %vm2348, %vm2340
    %vm2357 = vmand %vm2349, %vm2341
    %vm2358 = vmand %vm2350, %vm2342
    %vm2359 = vmand %vm2351, %vm2343
    %vm2360 = vmand %vm2352, %vm2344
    %vm2361 = vmand %vm2353, %vm2345
    %v2362 = vadd.s32 %v2288, 32
    %v2363 = vadd.s32 %v2295, 32
    %v2364 = vadd.s32 %v2302, 32
    %v2365 = vadd.s32 %v2309, 32
    %v2366 = vadd.s32 %v2316, 32
    %v2367 = vadd.s32 %v2323, 32
    %v2368 = vadd.s32 %v2330, 32
    %v2369 = vadd.s32 %v2337, 32
    %v2370 = vsel %vm2354, %v2362, %v2288
    %v2371 = vsel %vm2355, %v2363, %v2295
    %v2372 = vsel %vm2356, %v2364, %v2302
    %v2373 = vsel %vm2357, %v2365, %v2309
    %v2374 = vsel %vm2358, %v2366, %v2316
    %v2375 = vsel %vm2359, %v2367, %v2323
    %v2376 = vsel %vm2360, %v2368, %v2330
    %v2377 = vsel %vm2361, %v2369, %v2337
    %vm2378 = vcmp.eq.s32.totalorder %v2370, 0
    %vm2379 = vcmp.eq.s32.totalorder %v2371, 0
    %vm2380 = vcmp.eq.s32.totalorder %v2372, 0
    %vm2381 = vcmp.eq.s32.totalorder %v2373, 0
    %vm2382 = vcmp.eq.s32.totalorder %v2374, 0
    %vm2383 = vcmp.eq.s32.totalorder %v2375, 0
    %vm2384 = vcmp.eq.s32.totalorder %v2376, 0
    %vm2385 = vcmp.eq.s32.totalorder %v2377, 0
    %v2386 = vsel %vm2378, 0.0, %v2281
    %v2387 = vsel %vm2379, 0.0, %v2280
    %v2388 = vsel %vm2380, 0.0, %v2279
    %v2389 = vsel %vm2381, 0.0, %v2278
    %v2390 = vsel %vm2382, 0.0, %v2277
    %v2391 = vsel %vm2383, 0.0, %v2276
    %v2392 = vsel %vm2384, 0.0, %v2275
    %v2393 = vsel %vm2385, 0.0, %v2274
    %v2394 = vpack.c.bf16 %v2387, %v2386
    %v2395 = vpack.c.bf16 %v2389, %v2388
    %v2396 = vpack.c.bf16 %v2391, %v2390
    %v2397 = vpack.c.bf16 %v2393, %v2392
    %v2398 = vrot.slane %v2208, 1
    %v2399 = vrot.slane %v2215, 1
    %v2400 = vrot.slane %v2222, 1
    %v2401 = vrot.slane %v2229, 1
    %v2402 = vrot.slane %v2236, 1
    %v2403 = vrot.slane %v2243, 1
    %v2404 = vrot.slane %v2250, 1
    %v2405 = vrot.slane %v2257, 1
    %v2406 = vsel %vm457, %v2404, %v2405
    %v2407 = vsel %vm457, %v2403, %v2404
    %v2408 = vsel %vm457, %v2402, %v2403
    %v2409 = vsel %vm457, %v2401, %v2402
    %v2410 = vsel %vm457, %v2400, %v2401
    %v2411 = vsel %vm457, %v2399, %v2400
    %v2412 = vsel %vm457, %v2398, %v2399
    %v2413 = vsel %vm457, %v2405, %v2398
    %vm2414 = vcmp.eq.s32.totalorder %v2370, 31
    %vm2415 = vcmp.eq.s32.totalorder %v2371, 31
    %vm2416 = vcmp.eq.s32.totalorder %v2372, 31
    %vm2417 = vcmp.eq.s32.totalorder %v2373, 31
    %vm2418 = vcmp.eq.s32.totalorder %v2374, 31
    %vm2419 = vcmp.eq.s32.totalorder %v2375, 31
    %vm2420 = vcmp.eq.s32.totalorder %v2376, 31
    %vm2421 = vcmp.eq.s32.totalorder %v2377, 31
    %v2422 = vsel %vm2414, 0.0, %v2412
    %v2423 = vsel %vm2415, 0.0, %v2411
    %v2424 = vsel %vm2416, 0.0, %v2410
    %v2425 = vsel %vm2417, 0.0, %v2409
    %v2426 = vsel %vm2418, 0.0, %v2408
    %v2427 = vsel %vm2419, 0.0, %v2407
    %v2428 = vsel %vm2420, 0.0, %v2406
    %v2429 = vsel %vm2421, 0.0, %v2413
    %v2430 = vpack.c.bf16 %v2423, %v2422
    %v2431 = vpack.c.bf16 %v2425, %v2424
    %v2432 = vpack.c.bf16 %v2427, %v2426
    %v2433 = vpack.c.bf16 %v2429, %v2428
    %s2434 = scalar_lea.vmem [#allocation7], 16
    %v2435 = vld [vmem:[%s2434] sm:$0xf]
    %v2436 = vld [vmem:[%s2434 + $0x4] sm:$0xf]
    %v2437 = vld [vmem:[%s2434 + $0x8] sm:$0xf]
    %v2438 = vld [vmem:[%s2434 + $0xc] sm:$0xf]
    %v2439 = vld [vmem:[#allocation7] sm:$0xf]
    %v2440 = vld [vmem:[#allocation7 + $0x4] sm:$0xf]
    %v2441 = vld [vmem:[#allocation7 + $0x8] sm:$0xf]
    %v2442 = vld [vmem:[#allocation7 + $0xc] sm:$0xf]
    %v2447 = vunpack.c.l.b16 %v2439
    %v2448 = vunpack.c.l.b16 %v2440
    %v2449 = vunpack.c.l.b16 %v2441
    %v2450 = vunpack.c.l.b16 %v2442
    %v2451 = vpack.c.b16 %v2448, %v2447
    %v2452 = vpack.c.b16 %v2450, %v2449
    %v2456 = vsel %vm1013, %v2394, 0
    %v2459 = vsel %vm1013, %v2395, 0
    %v2462 = vsel %vm1013, %v2396, 0
    %v2465 = vsel %vm1013, %v2397, 0
    %2467 = vmatpush.bf16.msra.mxu0 0
    %2468 = vmatpush.bf16.msra.mxu0 0
    %2469 = vmatpush.bf16.msra.mxu0 0
    %2470 = vmatpush.bf16.msra.mxu0 0
    %2471 = vmatpush.bf16.msra.mxu0 0
    %2472 = vmatpush.bf16.msra.mxu0 0
    %2473 = vmatpush.bf16.msra.mxu0 %v2452
    %2474 = vmatpush.bf16.msra.mxu0 %v2451
    %2475 = vmatmul.bf16.gmra.mxu0 %v2456
    %v2476 = vpop.f32.mrf.mxu0
    %v2477 = vadd.f32 0.0, %v2476
    %v2478 = vpop.f32.mrf.mxu0
    %v2479 = vadd.f32 0.0, %v2478
    %2480 = vmatmul.bf16.gmra.mxu0 %v2459
    %v2481 = vpop.f32.mrf.mxu0
    %v2482 = vadd.f32 0.0, %v2481
    %v2483 = vpop.f32.mrf.mxu0
    %v2484 = vadd.f32 0.0, %v2483
    %2485 = vmatmul.bf16.gmra.mxu0 %v2462
    %v2486 = vpop.f32.mrf.mxu0
    %v2487 = vadd.f32 0.0, %v2486
    %v2488 = vpop.f32.mrf.mxu0
    %v2489 = vadd.f32 0.0, %v2488
    %2490 = vmatmul.bf16.gmra.mxu0 %v2465
    %v2491 = vpop.f32.mrf.mxu0
    %v2492 = vadd.f32 0.0, %v2491
    %v2493 = vpop.f32.mrf.mxu0
    %v2494 = vadd.f32 0.0, %v2493
    %2495 = vdwg.mxu0
    %v2560 = vunpack.c.l.b16 %v2067
    %v2561 = vunpack.c.l.b16 %v2068
    %v2562 = vunpack.c.l.b16 %v2069
    %v2563 = vunpack.c.l.b16 %v2070
    %v2564 = vunpack.c.l.b16 %v2071
    %v2565 = vunpack.c.l.b16 %v2072
    %v2566 = vunpack.c.l.b16 %v2073
    %v2567 = vunpack.c.l.b16 %v2074
    %v2568 = vunpack.c.l.b16 %v2075
    %v2569 = vunpack.c.l.b16 %v2076
    %v2570 = vunpack.c.l.b16 %v2077
    %v2571 = vunpack.c.l.b16 %v2078
    %v2572 = vunpack.c.l.b16 %v2079
    %v2573 = vunpack.c.l.b16 %v2080
    %v2574 = vunpack.c.l.b16 %v2081
    %v2575 = vunpack.c.l.b16 %v2082
    %v2576 = vunpack.c.l.b16 %v2083
    %v2577 = vunpack.c.l.b16 %v2084
    %v2578 = vunpack.c.l.b16 %v2085
    %v2579 = vunpack.c.l.b16 %v2086
    %v2580 = vunpack.c.l.b16 %v2087
    %v2581 = vunpack.c.l.b16 %v2088
    %v2582 = vunpack.c.l.b16 %v2089
    %v2583 = vunpack.c.l.b16 %v2090
    %v2584 = vunpack.c.l.b16 %v2091
    %v2585 = vunpack.c.l.b16 %v2092
    %v2586 = vunpack.c.l.b16 %v2093
    %v2587 = vunpack.c.l.b16 %v2094
    %v2588 = vunpack.c.l.b16 %v2095
    %v2589 = vunpack.c.l.b16 %v2096
    %v2590 = vunpack.c.l.b16 %v2097
    %v2591 = vunpack.c.l.b16 %v2098
    %v2592 = vunpack.c.l.b16 %v2099
    %v2593 = vunpack.c.l.b16 %v2100
    %v2594 = vunpack.c.l.b16 %v2101
    %v2595 = vunpack.c.l.b16 %v2102
    %v2596 = vunpack.c.l.b16 %v2103
    %v2597 = vunpack.c.l.b16 %v2104
    %v2598 = vunpack.c.l.b16 %v2105
    %v2599 = vunpack.c.l.b16 %v2106
    %v2600 = vunpack.c.l.b16 %v2107
    %v2601 = vunpack.c.l.b16 %v2108
    %v2602 = vunpack.c.l.b16 %v2109
    %v2603 = vunpack.c.l.b16 %v2110
    %v2604 = vunpack.c.l.b16 %v2111
    %v2605 = vunpack.c.l.b16 %v2112
    %v2606 = vunpack.c.l.b16 %v2113
    %v2607 = vunpack.c.l.b16 %v2114
    %v2608 = vunpack.c.l.b16 %v2115
    %v2609 = vunpack.c.l.b16 %v2116
    %v2610 = vunpack.c.l.b16 %v2117
    %v2611 = vunpack.c.l.b16 %v2118
    %v2612 = vunpack.c.l.b16 %v2119
    %v2613 = vunpack.c.l.b16 %v2120
    %v2614 = vunpack.c.l.b16 %v2121
    %v2615 = vunpack.c.l.b16 %v2122
    %v2616 = vunpack.c.l.b16 %v2123
    %v2617 = vunpack.c.l.b16 %v2124
    %v2618 = vunpack.c.l.b16 %v2125
    %v2619 = vunpack.c.l.b16 %v2126
    %v2620 = vunpack.c.l.b16 %v2127
    %v2621 = vunpack.c.l.b16 %v2128
    %v2622 = vunpack.c.l.b16 %v2129
    %v2623 = vunpack.c.l.b16 %v2130
    %v2624 = vrot.slane %v2561, 7
    %v2625 = vsel %vm2195, %v2624, %v2560
    %v2626 = vrot.slane %v2562, 6
    %v2627 = vsel %vm2197, %v2626, %v2625
    %v2628 = vrot.slane %v2563, 5
    %v2629 = vsel %vm2199, %v2628, %v2627
    %v2630 = vrot.slane %v2564, 4
    %v2631 = vsel %vm2201, %v2630, %v2629
    %v2632 = vrot.slane %v2565, 3
    %v2633 = vsel %vm2203, %v2632, %v2631
    %v2634 = vrot.slane %v2566, 2
    %v2635 = vsel %vm2205, %v2634, %v2633
    %v2636 = vrot.slane %v2567, 1
    %v2637 = vsel %vm2207, %v2636, %v2635
    %v2638 = vrot.slane %v2569, 7
    %v2639 = vsel %vm2195, %v2638, %v2568
    %v2640 = vrot.slane %v2570, 6
    %v2641 = vsel %vm2197, %v2640, %v2639
    %v2642 = vrot.slane %v2571, 5
    %v2643 = vsel %vm2199, %v2642, %v2641
    %v2644 = vrot.slane %v2572, 4
    %v2645 = vsel %vm2201, %v2644, %v2643
    %v2646 = vrot.slane %v2573, 3
    %v2647 = vsel %vm2203, %v2646, %v2645
    %v2648 = vrot.slane %v2574, 2
    %v2649 = vsel %vm2205, %v2648, %v2647
    %v2650 = vrot.slane %v2575, 1
    %v2651 = vsel %vm2207, %v2650, %v2649
    %v2652 = vrot.slane %v2577, 7
    %v2653 = vsel %vm2195, %v2652, %v2576
    %v2654 = vrot.slane %v2578, 6
    %v2655 = vsel %vm2197, %v2654, %v2653
    %v2656 = vrot.slane %v2579, 5
    %v2657 = vsel %vm2199, %v2656, %v2655
    %v2658 = vrot.slane %v2580, 4
    %v2659 = vsel %vm2201, %v2658, %v2657
    %v2660 = vrot.slane %v2581, 3
    %v2661 = vsel %vm2203, %v2660, %v2659
    %v2662 = vrot.slane %v2582, 2
    %v2663 = vsel %vm2205, %v2662, %v2661
    %v2664 = vrot.slane %v2583, 1
    %v2665 = vsel %vm2207, %v2664, %v2663
    %v2666 = vrot.slane %v2585, 7
    %v2667 = vsel %vm2195, %v2666, %v2584
    %v2668 = vrot.slane %v2586, 6
    %v2669 = vsel %vm2197, %v2668, %v2667
    %v2670 = vrot.slane %v2587, 5
    %v2671 = vsel %vm2199, %v2670, %v2669
    %v2672 = vrot.slane %v2588, 4
    %v2673 = vsel %vm2201, %v2672, %v2671
    %v2674 = vrot.slane %v2589, 3
    %v2675 = vsel %vm2203, %v2674, %v2673
    %v2676 = vrot.slane %v2590, 2
    %v2677 = vsel %vm2205, %v2676, %v2675
    %v2678 = vrot.slane %v2591, 1
    %v2679 = vsel %vm2207, %v2678, %v2677
    %v2680 = vrot.slane %v2593, 7
    %v2681 = vsel %vm2195, %v2680, %v2592
    %v2682 = vrot.slane %v2594, 6
    %v2683 = vsel %vm2197, %v2682, %v2681
    %v2684 = vrot.slane %v2595, 5
    %v2685 = vsel %vm2199, %v2684, %v2683
    %v2686 = vrot.slane %v2596, 4
    %v2687 = vsel %vm2201, %v2686, %v2685
    %v2688 = vrot.slane %v2597, 3
    %v2689 = vsel %vm2203, %v2688, %v2687
    %v2690 = vrot.slane %v2598, 2
    %v2691 = vsel %vm2205, %v2690, %v2689
    %v2692 = vrot.slane %v2599, 1
    %v2693 = vsel %vm2207, %v2692, %v2691
    %v2694 = vrot.slane %v2601, 7
    %v2695 = vsel %vm2195, %v2694, %v2600
    %v2696 = vrot.slane %v2602, 6
    %v2697 = vsel %vm2197, %v2696, %v2695
    %v2698 = vrot.slane %v2603, 5
    %v2699 = vsel %vm2199, %v2698, %v2697
    %v2700 = vrot.slane %v2604, 4
    %v2701 = vsel %vm2201, %v2700, %v2699
    %v2702 = vrot.slane %v2605, 3
    %v2703 = vsel %vm2203, %v2702, %v2701
    %v2704 = vrot.slane %v2606, 2
    %v2705 = vsel %vm2205, %v2704, %v2703
    %v2706 = vrot.slane %v2607, 1
    %v2707 = vsel %vm2207, %v2706, %v2705
    %v2708 = vrot.slane %v2609, 7
    %v2709 = vsel %vm2195, %v2708, %v2608
    %v2710 = vrot.slane %v2610, 6
    %v2711 = vsel %vm2197, %v2710, %v2709
    %v2712 = vrot.slane %v2611, 5
    %v2713 = vsel %vm2199, %v2712, %v2711
    %v2714 = vrot.slane %v2612, 4
    %v2715 = vsel %vm2201, %v2714, %v2713
    %v2716 = vrot.slane %v2613, 3
    %v2717 = vsel %vm2203, %v2716, %v2715
    %v2718 = vrot.slane %v2614, 2
    %v2719 = vsel %vm2205, %v2718, %v2717
    %v2720 = vrot.slane %v2615, 1
    %v2721 = vsel %vm2207, %v2720, %v2719
    %v2722 = vrot.slane %v2617, 7
    %v2723 = vsel %vm2195, %v2722, %v2616
    %v2724 = vrot.slane %v2618, 6
    %v2725 = vsel %vm2197, %v2724, %v2723
    %v2726 = vrot.slane %v2619, 5
    %v2727 = vsel %vm2199, %v2726, %v2725
    %v2728 = vrot.slane %v2620, 4
    %v2729 = vsel %vm2201, %v2728, %v2727
    %v2730 = vrot.slane %v2621, 3
    %v2731 = vsel %vm2203, %v2730, %v2729
    %v2732 = vrot.slane %v2622, 2
    %v2733 = vsel %vm2205, %v2732, %v2731
    %v2734 = vrot.slane %v2623, 1
    %v2735 = vsel %vm2207, %v2734, %v2733
    %v2736 = vpack.c.b16 %v2651, %v2637
    %v2737 = vpack.c.b16 %v2679, %v2665
    %v2738 = vpack.c.b16 %v2707, %v2693
    %v2739 = vpack.c.b16 %v2735, %v2721
    %v2744 = vunpack.c.l.b16 %v2435
    %v2745 = vunpack.c.l.b16 %v2436
    %v2746 = vunpack.c.l.b16 %v2437
    %v2747 = vunpack.c.l.b16 %v2438
    %v2748 = vpack.c.b16 %v2745, %v2744
    %v2749 = vpack.c.b16 %v2747, %v2746
    %v2753 = vsel %vm1013, %v2736, 0
    %v2756 = vsel %vm1013, %v2737, 0
    %v2759 = vsel %vm1013, %v2738, 0
    %v2762 = vsel %vm1013, %v2739, 0
    %2764 = vmatpush.bf16.msra.mxu0 0
    %2765 = vmatpush.bf16.msra.mxu0 0
    %2766 = vmatpush.bf16.msra.mxu0 0
    %2767 = vmatpush.bf16.msra.mxu0 0
    %2768 = vmatpush.bf16.msra.mxu0 0
    %2769 = vmatpush.bf16.msra.mxu0 0
    %2770 = vmatpush.bf16.msra.mxu0 %v2749
    %2771 = vmatpush.bf16.msra.mxu0 %v2748
    %2772 = vmatmul.bf16.gmra.mxu0 %v2753
    %v2773 = vpop.f32.mrf.mxu0
    %v2774 = vadd.f32 %v2477, %v2773
    %v2775 = vpop.f32.mrf.mxu0
    %v2776 = vadd.f32 %v2479, %v2775
    %2777 = vmatmul.bf16.gmra.mxu0 %v2756
    %v2778 = vpop.f32.mrf.mxu0
    %v2779 = vadd.f32 %v2482, %v2778
    %v2780 = vpop.f32.mrf.mxu0
    %v2781 = vadd.f32 %v2484, %v2780
    %2782 = vmatmul.bf16.gmra.mxu0 %v2759
    %v2783 = vpop.f32.mrf.mxu0
    %v2784 = vadd.f32 %v2487, %v2783
    %v2785 = vpop.f32.mrf.mxu0
    %v2786 = vadd.f32 %v2489, %v2785
    %2787 = vmatmul.bf16.gmra.mxu0 %v2762
    %v2788 = vpop.f32.mrf.mxu0
    %v2789 = vadd.f32 %v2492, %v2788
    %v2790 = vpop.f32.mrf.mxu0
    %v2791 = vadd.f32 %v2494, %v2790
    %2792 = vdwg.mxu0
    %s2793 = scalar_lea.vmem [#allocation7], 32
    %v2794 = vld [vmem:[%s2793] sm:$0xf]
    %v2795 = vld [vmem:[%s2793 + $0x4] sm:$0xf]
    %v2796 = vld [vmem:[%s2793 + $0x8] sm:$0xf]
    %v2797 = vld [vmem:[%s2793 + $0xc] sm:$0xf]
    %v2802 = vunpack.c.l.b16 %v2794
    %v2803 = vunpack.c.l.b16 %v2795
    %v2804 = vunpack.c.l.b16 %v2796
    %v2805 = vunpack.c.l.b16 %v2797
    %v2806 = vpack.c.b16 %v2803, %v2802
    %v2807 = vpack.c.b16 %v2805, %v2804
    %v2811 = vsel %vm1013, %v2430, 0
    %v2814 = vsel %vm1013, %v2431, 0
    %v2817 = vsel %vm1013, %v2432, 0
    %v2820 = vsel %vm1013, %v2433, 0
    %2822 = vmatpush.bf16.msra.mxu0 0
    %2823 = vmatpush.bf16.msra.mxu0 0
    %2824 = vmatpush.bf16.msra.mxu0 0
    %2825 = vmatpush.bf16.msra.mxu0 0
    %2826 = vmatpush.bf16.msra.mxu0 0
    %2827 = vmatpush.bf16.msra.mxu0 0
    %2828 = vmatpush.bf16.msra.mxu0 %v2807
    %2829 = vmatpush.bf16.msra.mxu0 %v2806
    %2830 = vmatmul.bf16.gmra.mxu0 %v2811
    %v2831 = vpop.f32.mrf.mxu0
    %v2832 = vadd.f32 0.0, %v2831
    %v2833 = vpop.f32.mrf.mxu0
    %v2834 = vadd.f32 0.0, %v2833
    %2835 = vmatmul.bf16.gmra.mxu0 %v2814
    %v2836 = vpop.f32.mrf.mxu0
    %v2837 = vadd.f32 0.0, %v2836
    %v2838 = vpop.f32.mrf.mxu0
    %v2839 = vadd.f32 0.0, %v2838
    %2840 = vmatmul.bf16.gmra.mxu0 %v2817
    %v2841 = vpop.f32.mrf.mxu0
    %v2842 = vadd.f32 0.0, %v2841
    %v2843 = vpop.f32.mrf.mxu0
    %v2844 = vadd.f32 0.0, %v2843
    %2845 = vmatmul.bf16.gmra.mxu0 %v2820
    %v2846 = vpop.f32.mrf.mxu0
    %v2847 = vadd.f32 0.0, %v2846
    %v2848 = vpop.f32.mrf.mxu0
    %v2849 = vadd.f32 0.0, %v2848
    %2850 = vdwg.mxu0
    %v2851 = vadd.f32 %v2774, %v2832
    %v2852 = vadd.f32 %v2776, %v2834
    %v2853 = vadd.f32 %v2779, %v2837
    %v2854 = vadd.f32 %v2781, %v2839
    %v2855 = vadd.f32 %v2784, %v2842
    %v2856 = vadd.f32 %v2786, %v2844
    %v2857 = vadd.f32 %v2789, %v2847
    %v2858 = vadd.f32 %v2791, %v2849
    %v2859 = vld [vmem:[%s14] sm:$0x1]
    %v2861 = vperm.slane %v2859, 0
    %v2863 = vmul.f32 %v2851, %v2861
    %v2864 = vmul.f32 %v2852, %v2861
    %v2865 = vmul.f32 %v2853, %v2861
    %v2866 = vmul.f32 %v2854, %v2861
    %v2867 = vmul.f32 %v2855, %v2861
    %v2868 = vmul.f32 %v2856, %v2861
    %v2869 = vmul.f32 %v2857, %v2861
    %v2870 = vmul.f32 %v2858, %v2861
    %v2871 = vld [vmem:[%s15] sm:$0x1]
    %v2873 = vperm.slane %v2871, 0
    %v2875 = vadd.f32 %v2863, %v2873
    %v2876 = vadd.f32 %v2864, %v2873
    %v2877 = vadd.f32 %v2865, %v2873
    %v2878 = vadd.f32 %v2866, %v2873
    %v2879 = vadd.f32 %v2867, %v2873
    %v2880 = vadd.f32 %v2868, %v2873
    %v2881 = vadd.f32 %v2869, %v2873
    %v2882 = vadd.f32 %v2870, %v2873
    %v2883 = vmax.f32 %v2875, 0.0
    %v2884 = vmax.f32 %v2876, 0.0
    %v2885 = vmax.f32 %v2877, 0.0
    %v2886 = vmax.f32 %v2878, 0.0
    %v2887 = vmax.f32 %v2879, 0.0
    %v2888 = vmax.f32 %v2880, 0.0
    %v2889 = vmax.f32 %v2881, 0.0
    %v2890 = vmax.f32 %v2882, 0.0
    %v2891 = vpack.c.bf16 %v2884, %v2883
    %v2892 = vpack.c.bf16 %v2886, %v2885
    %v2893 = vpack.c.bf16 %v2888, %v2887
    %v2894 = vpack.c.bf16 %v2890, %v2889
    %v2895 = vrot.slane %v2883, 7
    %v2896 = vrot.slane %v2884, 7
    %v2897 = vrot.slane %v2885, 7
    %v2898 = vrot.slane %v2886, 7
    %v2899 = vrot.slane %v2887, 7
    %v2900 = vrot.slane %v2888, 7
    %v2901 = vrot.slane %v2889, 7
    %v2902 = vrot.slane %v2890, 7
    %v2903 = vsel %vm177, %v2901, %v2902
    %v2904 = vsel %vm177, %v2900, %v2901
    %v2905 = vsel %vm177, %v2899, %v2900
    %v2906 = vsel %vm177, %v2898, %v2899
    %v2907 = vsel %vm177, %v2897, %v2898
    %v2908 = vsel %vm177, %v2896, %v2897
    %v2909 = vsel %vm177, %v2895, %v2896
    %v2910 = vsel %vm177, %v2902, %v2895
    %v2911 = vsel %vm2378, 0.0, %v2910
    %v2912 = vsel %vm2379, 0.0, %v2909
    %v2913 = vsel %vm2380, 0.0, %v2908
    %v2914 = vsel %vm2381, 0.0, %v2907
    %v2915 = vsel %vm2382, 0.0, %v2906
    %v2916 = vsel %vm2383, 0.0, %v2905
    %v2917 = vsel %vm2384, 0.0, %v2904
    %v2918 = vsel %vm2385, 0.0, %v2903
    %v2919 = vpack.c.bf16 %v2912, %v2911
    %v2920 = vpack.c.bf16 %v2914, %v2913
    %v2921 = vpack.c.bf16 %v2916, %v2915
    %v2922 = vpack.c.bf16 %v2918, %v2917
    %v2923 = vrot.slane %v2883, 1
    %v2924 = vrot.slane %v2884, 1
    %v2925 = vrot.slane %v2885, 1
    %v2926 = vrot.slane %v2886, 1
    %v2927 = vrot.slane %v2887, 1
    %v2928 = vrot.slane %v2888, 1
    %v2929 = vrot.slane %v2889, 1
    %v2930 = vrot.slane %v2890, 1
    %v2931 = vsel %vm457, %v2929, %v2930
    %v2932 = vsel %vm457, %v2928, %v2929
    %v2933 = vsel %vm457, %v2927, %v2928
    %v2934 = vsel %vm457, %v2926, %v2927
    %v2935 = vsel %vm457, %v2925, %v2926
    %v2936 = vsel %vm457, %v2924, %v2925
    %v2937 = vsel %vm457, %v2923, %v2924
    %v2938 = vsel %vm457, %v2930, %v2923
    %v2939 = vsel %vm2414, 0.0, %v2937
    %v2940 = vsel %vm2415, 0.0, %v2936
    %v2941 = vsel %vm2416, 0.0, %v2935
    %v2942 = vsel %vm2417, 0.0, %v2934
    %v2943 = vsel %vm2418, 0.0, %v2933
    %v2944 = vsel %vm2419, 0.0, %v2932
    %v2945 = vsel %vm2420, 0.0, %v2931
    %v2946 = vsel %vm2421, 0.0, %v2938
    %v2947 = vpack.c.bf16 %v2940, %v2939
    %v2948 = vpack.c.bf16 %v2942, %v2941
    %v2949 = vpack.c.bf16 %v2944, %v2943
    %v2950 = vpack.c.bf16 %v2946, %v2945
    %s2951 = scalar_lea.vmem [#allocation8], 32
    %v2952 = vld [vmem:[%s2951] sm:$0xf]
    %v2953 = vld [vmem:[%s2951 + $0x4] sm:$0xf]
    %v2954 = vld [vmem:[%s2951 + $0x8] sm:$0xf]
    %v2955 = vld [vmem:[%s2951 + $0xc] sm:$0xf]
    %v2956 = vld [vmem:[%s2951 + $0x10] sm:$0xf]
    %v2957 = vld [vmem:[%s2951 + $0x14] sm:$0xf]
    %v2958 = vld [vmem:[%s2951 + $0x18] sm:$0xf]
    %v2959 = vld [vmem:[%s2951 + $0x1c] sm:$0xf]
    %v2960 = vld [vmem:[#allocation8] sm:$0xf]
    %v2961 = vld [vmem:[#allocation8 + $0x4] sm:$0xf]
    %v2962 = vld [vmem:[#allocation8 + $0x8] sm:$0xf]
    %v2963 = vld [vmem:[#allocation8 + $0xc] sm:$0xf]
    %v2964 = vld [vmem:[#allocation8 + $0x10] sm:$0xf]
    %v2965 = vld [vmem:[#allocation8 + $0x14] sm:$0xf]
    %v2966 = vld [vmem:[#allocation8 + $0x18] sm:$0xf]
    %v2967 = vld [vmem:[#allocation8 + $0x1c] sm:$0xf]
    %v2976 = vunpack.c.l.b16 %v2960
    %v2977 = vunpack.c.l.b16 %v2961
    %v2978 = vunpack.c.l.b16 %v2962
    %v2979 = vunpack.c.l.b16 %v2963
    %v2980 = vunpack.c.l.b16 %v2964
    %v2981 = vunpack.c.l.b16 %v2965
    %v2982 = vunpack.c.l.b16 %v2966
    %v2983 = vunpack.c.l.b16 %v2967
    %v2984 = vpack.c.b16 %v2977, %v2976
    %v2985 = vpack.c.b16 %v2979, %v2978
    %v2986 = vpack.c.b16 %v2981, %v2980
    %v2987 = vpack.c.b16 %v2983, %v2982
    %vm2992 = vcmask 523264
    %v2994 = vsel %vm2992, %v2919, 0
    %v2997 = vsel %vm2992, %v2920, 0
    %v3000 = vsel %vm2992, %v2921, 0
    %v3003 = vsel %vm2992, %v2922, 0
    %3005 = vmatpush.bf16.msra.mxu0 0
    %3006 = vmatpush.bf16.msra.mxu0 0
    %3007 = vmatpush.bf16.msra.mxu0 0
    %3008 = vmatpush.bf16.msra.mxu0 0
    %3009 = vmatpush.bf16.msra.mxu0 %v2987
    %3010 = vmatpush.bf16.msra.mxu0 %v2986
    %3011 = vmatpush.bf16.msra.mxu0 %v2985
    %3012 = vmatpush.bf16.msra.mxu0 %v2984
    %3013 = vmatmul.bf16.gmra.mxu0 %v2994
    %v3014 = vpop.f32.mrf.mxu0
    %v3015 = vadd.f32 0.0, %v3014
    %v3016 = vpop.f32.mrf.mxu0
    %v3017 = vadd.f32 0.0, %v3016
    %3018 = vmatmul.bf16.gmra.mxu0 %v2997
    %v3019 = vpop.f32.mrf.mxu0
    %v3020 = vadd.f32 0.0, %v3019
    %v3021 = vpop.f32.mrf.mxu0
    %v3022 = vadd.f32 0.0, %v3021
    %3023 = vmatmul.bf16.gmra.mxu0 %v3000
    %v3024 = vpop.f32.mrf.mxu0
    %v3025 = vadd.f32 0.0, %v3024
    %v3026 = vpop.f32.mrf.mxu0
    %v3027 = vadd.f32 0.0, %v3026
    %3028 = vmatmul.bf16.gmra.mxu0 %v3003
    %v3029 = vpop.f32.mrf.mxu0
    %v3030 = vadd.f32 0.0, %v3029
    %v3031 = vpop.f32.mrf.mxu0
    %v3032 = vadd.f32 0.0, %v3031
    %3033 = vdwg.mxu0
    %v3042 = vunpack.c.l.b16 %v2952
    %v3043 = vunpack.c.l.b16 %v2953
    %v3044 = vunpack.c.l.b16 %v2954
    %v3045 = vunpack.c.l.b16 %v2955
    %v3046 = vunpack.c.l.b16 %v2956
    %v3047 = vunpack.c.l.b16 %v2957
    %v3048 = vunpack.c.l.b16 %v2958
    %v3049 = vunpack.c.l.b16 %v2959
    %v3050 = vpack.c.b16 %v3043, %v3042
    %v3051 = vpack.c.b16 %v3045, %v3044
    %v3052 = vpack.c.b16 %v3047, %v3046
    %v3053 = vpack.c.b16 %v3049, %v3048
    %v3059 = vsel %vm2992, %v2891, 0
    %v3062 = vsel %vm2992, %v2892, 0
    %v3065 = vsel %vm2992, %v2893, 0
    %v3068 = vsel %vm2992, %v2894, 0
    %3070 = vmatpush.bf16.msra.mxu0 0
    %3071 = vmatpush.bf16.msra.mxu0 0
    %3072 = vmatpush.bf16.msra.mxu0 0
    %3073 = vmatpush.bf16.msra.mxu0 0
    %3074 = vmatpush.bf16.msra.mxu0 %v3053
    %3075 = vmatpush.bf16.msra.mxu0 %v3052
    %3076 = vmatpush.bf16.msra.mxu0 %v3051
    %3077 = vmatpush.bf16.msra.mxu0 %v3050
    %3078 = vmatmul.bf16.gmra.mxu0 %v3059
    %v3079 = vpop.f32.mrf.mxu0
    %v3080 = vadd.f32 %v3015, %v3079
    %v3081 = vpop.f32.mrf.mxu0
    %v3082 = vadd.f32 %v3017, %v3081
    %3083 = vmatmul.bf16.gmra.mxu0 %v3062
    %v3084 = vpop.f32.mrf.mxu0
    %v3085 = vadd.f32 %v3020, %v3084
    %v3086 = vpop.f32.mrf.mxu0
    %v3087 = vadd.f32 %v3022, %v3086
    %3088 = vmatmul.bf16.gmra.mxu0 %v3065
    %v3089 = vpop.f32.mrf.mxu0
    %v3090 = vadd.f32 %v3025, %v3089
    %v3091 = vpop.f32.mrf.mxu0
    %v3092 = vadd.f32 %v3027, %v3091
    %3093 = vmatmul.bf16.gmra.mxu0 %v3068
    %v3094 = vpop.f32.mrf.mxu0
    %v3095 = vadd.f32 %v3030, %v3094
    %v3096 = vpop.f32.mrf.mxu0
    %v3097 = vadd.f32 %v3032, %v3096
    %3098 = vdwg.mxu0
    %s3099 = scalar_lea.vmem [#allocation8], 64
    %v3100 = vld [vmem:[%s3099] sm:$0xf]
    %v3101 = vld [vmem:[%s3099 + $0x4] sm:$0xf]
    %v3102 = vld [vmem:[%s3099 + $0x8] sm:$0xf]
    %v3103 = vld [vmem:[%s3099 + $0xc] sm:$0xf]
    %v3104 = vld [vmem:[%s3099 + $0x10] sm:$0xf]
    %v3105 = vld [vmem:[%s3099 + $0x14] sm:$0xf]
    %v3106 = vld [vmem:[%s3099 + $0x18] sm:$0xf]
    %v3107 = vld [vmem:[%s3099 + $0x1c] sm:$0xf]
    %v3116 = vunpack.c.l.b16 %v3100
    %v3117 = vunpack.c.l.b16 %v3101
    %v3118 = vunpack.c.l.b16 %v3102
    %v3119 = vunpack.c.l.b16 %v3103
    %v3120 = vunpack.c.l.b16 %v3104
    %v3121 = vunpack.c.l.b16 %v3105
    %v3122 = vunpack.c.l.b16 %v3106
    %v3123 = vunpack.c.l.b16 %v3107
    %v3124 = vpack.c.b16 %v3117, %v3116
    %v3125 = vpack.c.b16 %v3119, %v3118
    %v3126 = vpack.c.b16 %v3121, %v3120
    %v3127 = vpack.c.b16 %v3123, %v3122
    %v3133 = vsel %vm2992, %v2947, 0
    %v3136 = vsel %vm2992, %v2948, 0
    %v3139 = vsel %vm2992, %v2949, 0
    %v3142 = vsel %vm2992, %v2950, 0
    %3144 = vmatpush.bf16.msra.mxu0 0
    %3145 = vmatpush.bf16.msra.mxu0 0
    %3146 = vmatpush.bf16.msra.mxu0 0
    %3147 = vmatpush.bf16.msra.mxu0 0
    %3148 = vmatpush.bf16.msra.mxu0 %v3127
    %3149 = vmatpush.bf16.msra.mxu0 %v3126
    %3150 = vmatpush.bf16.msra.mxu0 %v3125
    %3151 = vmatpush.bf16.msra.mxu0 %v3124
    %3152 = vmatmul.bf16.gmra.mxu0 %v3133
    %v3153 = vpop.f32.mrf.mxu0
    %v3154 = vadd.f32 0.0, %v3153
    %v3155 = vpop.f32.mrf.mxu0
    %v3156 = vadd.f32 0.0, %v3155
    %3157 = vmatmul.bf16.gmra.mxu0 %v3136
    %v3158 = vpop.f32.mrf.mxu0
    %v3159 = vadd.f32 0.0, %v3158
    %v3160 = vpop.f32.mrf.mxu0
    %v3161 = vadd.f32 0.0, %v3160
    %3162 = vmatmul.bf16.gmra.mxu0 %v3139
    %v3163 = vpop.f32.mrf.mxu0
    %v3164 = vadd.f32 0.0, %v3163
    %v3165 = vpop.f32.mrf.mxu0
    %v3166 = vadd.f32 0.0, %v3165
    %3167 = vmatmul.bf16.gmra.mxu0 %v3142
    %v3168 = vpop.f32.mrf.mxu0
    %v3169 = vadd.f32 0.0, %v3168
    %v3170 = vpop.f32.mrf.mxu0
    %v3171 = vadd.f32 0.0, %v3170
    %3172 = vdwg.mxu0
    %v3173 = vadd.f32 %v3080, %v3154
    %v3174 = vadd.f32 %v3082, %v3156
    %v3175 = vadd.f32 %v3085, %v3159
    %v3176 = vadd.f32 %v3087, %v3161
    %v3177 = vadd.f32 %v3090, %v3164
    %v3178 = vadd.f32 %v3092, %v3166
    %v3179 = vadd.f32 %v3095, %v3169
    %v3180 = vadd.f32 %v3097, %v3171
    %v3181 = vld [vmem:[%s17] sm:$0x1]
    %v3183 = vperm.slane %v3181, 0
    %v3185 = vmul.f32 %v3173, %v3183
    %v3186 = vmul.f32 %v3174, %v3183
    %v3187 = vmul.f32 %v3175, %v3183
    %v3188 = vmul.f32 %v3176, %v3183
    %v3189 = vmul.f32 %v3177, %v3183
    %v3190 = vmul.f32 %v3178, %v3183
    %v3191 = vmul.f32 %v3179, %v3183
    %v3192 = vmul.f32 %v3180, %v3183
    %v3193 = vld [vmem:[%s18] sm:$0x1]
    %v3195 = vperm.slane %v3193, 0
    %v3197 = vadd.f32 %v3185, %v3195
    %v3198 = vadd.f32 %v3186, %v3195
    %v3199 = vadd.f32 %v3187, %v3195
    %v3200 = vadd.f32 %v3188, %v3195
    %v3201 = vadd.f32 %v3189, %v3195
    %v3202 = vadd.f32 %v3190, %v3195
    %v3203 = vadd.f32 %v3191, %v3195
    %v3204 = vadd.f32 %v3192, %v3195
    %s3205 = scalar_lea.vmem [#allocation5], 16
    %v3206 = vld [vmem:[%s3205] sm:$0xf]
    %v3207 = vld [vmem:[%s3205 + $0x4] sm:$0xf]
    %v3208 = vld [vmem:[%s3205 + $0x8] sm:$0xf]
    %v3209 = vld [vmem:[%s3205 + $0xc] sm:$0xf]
    %v3210 = vld [vmem:[#allocation5] sm:$0xf]
    %v3211 = vld [vmem:[#allocation5 + $0x4] sm:$0xf]
    %v3212 = vld [vmem:[#allocation5 + $0x8] sm:$0xf]
    %v3213 = vld [vmem:[#allocation5 + $0xc] sm:$0xf]
    %v3218 = vunpack.c.l.b16 %v3210
    %v3219 = vunpack.c.l.b16 %v3211
    %v3220 = vunpack.c.l.b16 %v3212
    %v3221 = vunpack.c.l.b16 %v3213
    %v3222 = vpack.c.b16 %v3219, %v3218
    %v3223 = vpack.c.b16 %v3221, %v3220
    %3226 = vmatpush.bf16.msra.mxu0 0
    %3227 = vmatpush.bf16.msra.mxu0 0
    %3228 = vmatpush.bf16.msra.mxu0 0
    %3229 = vmatpush.bf16.msra.mxu0 0
    %3230 = vmatpush.bf16.msra.mxu0 0
    %3231 = vmatpush.bf16.msra.mxu0 0
    %3232 = vmatpush.bf16.msra.mxu0 %v3223
    %3233 = vmatpush.bf16.msra.mxu0 %v3222
    %3234 = vmatmul.bf16.gmra.mxu0 %v2456
    %v3235 = vpop.f32.mrf.mxu0
    %v3236 = vadd.f32 0.0, %v3235
    %v3237 = vpop.f32.mrf.mxu0
    %v3238 = vadd.f32 0.0, %v3237
    %3239 = vmatmul.bf16.gmra.mxu0 %v2459
    %v3240 = vpop.f32.mrf.mxu0
    %v3241 = vadd.f32 0.0, %v3240
    %v3242 = vpop.f32.mrf.mxu0
    %v3243 = vadd.f32 0.0, %v3242
    %3244 = vmatmul.bf16.gmra.mxu0 %v2462
    %v3245 = vpop.f32.mrf.mxu0
    %v3246 = vadd.f32 0.0, %v3245
    %v3247 = vpop.f32.mrf.mxu0
    %v3248 = vadd.f32 0.0, %v3247
    %3249 = vmatmul.bf16.gmra.mxu0 %v2465
    %v3250 = vpop.f32.mrf.mxu0
    %v3251 = vadd.f32 0.0, %v3250
    %v3252 = vpop.f32.mrf.mxu0
    %v3253 = vadd.f32 0.0, %v3252
    %3254 = vdwg.mxu0
    %v3259 = vunpack.c.l.b16 %v3206
    %v3260 = vunpack.c.l.b16 %v3207
    %v3261 = vunpack.c.l.b16 %v3208
    %v3262 = vunpack.c.l.b16 %v3209
    %v3263 = vpack.c.b16 %v3260, %v3259
    %v3264 = vpack.c.b16 %v3262, %v3261
    %3267 = vmatpush.bf16.msra.mxu0 0
    %3268 = vmatpush.bf16.msra.mxu0 0
    %3269 = vmatpush.bf16.msra.mxu0 0
    %3270 = vmatpush.bf16.msra.mxu0 0
    %3271 = vmatpush.bf16.msra.mxu0 0
    %3272 = vmatpush.bf16.msra.mxu0 0
    %3273 = vmatpush.bf16.msra.mxu0 %v3264
    %3274 = vmatpush.bf16.msra.mxu0 %v3263
    %3275 = vmatmul.bf16.gmra.mxu0 %v2753
    %v3276 = vpop.f32.mrf.mxu0
    %v3277 = vadd.f32 %v3236, %v3276
    %v3278 = vpop.f32.mrf.mxu0
    %v3279 = vadd.f32 %v3238, %v3278
    %3280 = vmatmul.bf16.gmra.mxu0 %v2756
    %v3281 = vpop.f32.mrf.mxu0
    %v3282 = vadd.f32 %v3241, %v3281
    %v3283 = vpop.f32.mrf.mxu0
    %v3284 = vadd.f32 %v3243, %v3283
    %3285 = vmatmul.bf16.gmra.mxu0 %v2759
    %v3286 = vpop.f32.mrf.mxu0
    %v3287 = vadd.f32 %v3246, %v3286
    %v3288 = vpop.f32.mrf.mxu0
    %v3289 = vadd.f32 %v3248, %v3288
    %3290 = vmatmul.bf16.gmra.mxu0 %v2762
    %v3291 = vpop.f32.mrf.mxu0
    %v3292 = vadd.f32 %v3251, %v3291
    %v3293 = vpop.f32.mrf.mxu0
    %v3294 = vadd.f32 %v3253, %v3293
    %3295 = vdwg.mxu0
    %s3296 = scalar_lea.vmem [#allocation5], 32
    %v3297 = vld [vmem:[%s3296] sm:$0xf]
    %v3298 = vld [vmem:[%s3296 + $0x4] sm:$0xf]
    %v3299 = vld [vmem:[%s3296 + $0x8] sm:$0xf]
    %v3300 = vld [vmem:[%s3296 + $0xc] sm:$0xf]
    %v3305 = vunpack.c.l.b16 %v3297
    %v3306 = vunpack.c.l.b16 %v3298
    %v3307 = vunpack.c.l.b16 %v3299
    %v3308 = vunpack.c.l.b16 %v3300
    %v3309 = vpack.c.b16 %v3306, %v3305
    %v3310 = vpack.c.b16 %v3308, %v3307
    %3313 = vmatpush.bf16.msra.mxu0 0
    %3314 = vmatpush.bf16.msra.mxu0 0
    %3315 = vmatpush.bf16.msra.mxu0 0
    %3316 = vmatpush.bf16.msra.mxu0 0
    %3317 = vmatpush.bf16.msra.mxu0 0
    %3318 = vmatpush.bf16.msra.mxu0 0
    %3319 = vmatpush.bf16.msra.mxu0 %v3310
    %3320 = vmatpush.bf16.msra.mxu0 %v3309
    %3321 = vmatmul.bf16.gmra.mxu0 %v2811
    %v3322 = vpop.f32.mrf.mxu0
    %v3323 = vadd.f32 0.0, %v3322
    %v3324 = vpop.f32.mrf.mxu0
    %v3325 = vadd.f32 0.0, %v3324
    %3326 = vmatmul.bf16.gmra.mxu0 %v2814
    %v3327 = vpop.f32.mrf.mxu0
    %v3328 = vadd.f32 0.0, %v3327
    %v3329 = vpop.f32.mrf.mxu0
    %v3330 = vadd.f32 0.0, %v3329
    %3331 = vmatmul.bf16.gmra.mxu0 %v2817
    %v3332 = vpop.f32.mrf.mxu0
    %v3333 = vadd.f32 0.0, %v3332
    %v3334 = vpop.f32.mrf.mxu0
    %v3335 = vadd.f32 0.0, %v3334
    %3336 = vmatmul.bf16.gmra.mxu0 %v2820
    %v3337 = vpop.f32.mrf.mxu0
    %v3338 = vadd.f32 0.0, %v3337
    %v3339 = vpop.f32.mrf.mxu0
    %v3340 = vadd.f32 0.0, %v3339
    %3341 = vdwg.mxu0
    %v3342 = vadd.f32 %v3277, %v3323
    %v3343 = vadd.f32 %v3279, %v3325
    %v3344 = vadd.f32 %v3282, %v3328
    %v3345 = vadd.f32 %v3284, %v3330
    %v3346 = vadd.f32 %v3287, %v3333
    %v3347 = vadd.f32 %v3289, %v3335
    %v3348 = vadd.f32 %v3292, %v3338
    %v3349 = vadd.f32 %v3294, %v3340
    %v3350 = vld [vmem:[%s11] sm:$0x1]
    %v3352 = vperm.slane %v3350, 0
    %v3354 = vmul.f32 %v3342, %v3352
    %v3355 = vmul.f32 %v3343, %v3352
    %v3356 = vmul.f32 %v3344, %v3352
    %v3357 = vmul.f32 %v3345, %v3352
    %v3358 = vmul.f32 %v3346, %v3352
    %v3359 = vmul.f32 %v3347, %v3352
    %v3360 = vmul.f32 %v3348, %v3352
    %v3361 = vmul.f32 %v3349, %v3352
    %v3362 = vld [vmem:[%s12] sm:$0x1]
    %v3364 = vperm.slane %v3362, 0
    %v3366 = vadd.f32 %v3354, %v3364
    %v3367 = vadd.f32 %v3355, %v3364
    %v3368 = vadd.f32 %v3356, %v3364
    %v3369 = vadd.f32 %v3357, %v3364
    %v3370 = vadd.f32 %v3358, %v3364
    %v3371 = vadd.f32 %v3359, %v3364
    %v3372 = vadd.f32 %v3360, %v3364
    %v3373 = vadd.f32 %v3361, %v3364
    %v3374 = vadd.f32 %v3197, %v3366
    %v3375 = vadd.f32 %v3198, %v3367
    %v3376 = vadd.f32 %v3199, %v3368
    %v3377 = vadd.f32 %v3200, %v3369
    %v3378 = vadd.f32 %v3201, %v3370
    %v3379 = vadd.f32 %v3202, %v3371
    %v3380 = vadd.f32 %v3203, %v3372
    %v3381 = vadd.f32 %v3204, %v3373
    %v3382 = vmul.f32 %v3374, 0.5
    %v3383 = vmul.f32 %v3375, 0.5
    %v3384 = vmul.f32 %v3376, 0.5
    %v3385 = vmul.f32 %v3377, 0.5
    %v3386 = vmul.f32 %v3378, 0.5
    %v3387 = vmul.f32 %v3379, 0.5
    %v3388 = vmul.f32 %v3380, 0.5
    %v3389 = vmul.f32 %v3381, 0.5
    %v3390 = vmax.f32 %v3382, 0.0
    %v3391 = vmax.f32 %v3383, 0.0
    %v3392 = vmax.f32 %v3384, 0.0
    %v3393 = vmax.f32 %v3385, 0.0
    %v3394 = vmax.f32 %v3386, 0.0
    %v3395 = vmax.f32 %v3387, 0.0
    %v3396 = vmax.f32 %v3388, 0.0
    %v3397 = vmax.f32 %v3389, 0.0
    %v3398 = vrot.slane %v3390, 7
    %v3399 = vrot.slane %v3391, 7
    %v3400 = vrot.slane %v3392, 7
    %v3401 = vrot.slane %v3393, 7
    %v3402 = vrot.slane %v3394, 7
    %v3403 = vrot.slane %v3395, 7
    %v3404 = vrot.slane %v3396, 7
    %v3405 = vrot.slane %v3397, 7
    %v3406 = vsel %vm177, %v3404, %v3405
    %v3407 = vsel %vm177, %v3403, %v3404
    %v3408 = vsel %vm177, %v3402, %v3403
    %v3409 = vsel %vm177, %v3401, %v3402
    %v3410 = vsel %vm177, %v3400, %v3401
    %v3411 = vsel %vm177, %v3399, %v3400
    %v3412 = vsel %vm177, %v3398, %v3399
    %v3413 = vsel %vm177, %v3405, %v3398
    %v3414 = vsel %vm2378, 0.0, %v3413
    %v3415 = vsel %vm2379, 0.0, %v3412
    %v3416 = vsel %vm2380, 0.0, %v3411
    %v3417 = vsel %vm2381, 0.0, %v3410
    %v3418 = vsel %vm2382, 0.0, %v3409
    %v3419 = vsel %vm2383, 0.0, %v3408
    %v3420 = vsel %vm2384, 0.0, %v3407
    %v3421 = vsel %vm2385, 0.0, %v3406
    %v3422 = vmax.f32 %v3414, %v3390
    %v3423 = vmax.f32 %v3415, %v3391
    %v3424 = vmax.f32 %v3416, %v3392
    %v3425 = vmax.f32 %v3417, %v3393
    %v3426 = vmax.f32 %v3418, %v3394
    %v3427 = vmax.f32 %v3419, %v3395
    %v3428 = vmax.f32 %v3420, %v3396
    %v3429 = vmax.f32 %v3421, %v3397
    %v3430 = vrot.slane %v3390, 1
    %v3431 = vrot.slane %v3391, 1
    %v3432 = vrot.slane %v3392, 1
    %v3433 = vrot.slane %v3393, 1
    %v3434 = vrot.slane %v3394, 1
    %v3435 = vrot.slane %v3395, 1
    %v3436 = vrot.slane %v3396, 1
    %v3437 = vrot.slane %v3397, 1
    %v3438 = vsel %vm457, %v3436, %v3437
    %v3439 = vsel %vm457, %v3435, %v3436
    %v3440 = vsel %vm457, %v3434, %v3435
    %v3441 = vsel %vm457, %v3433, %v3434
    %v3442 = vsel %vm457, %v3432, %v3433
    %v3443 = vsel %vm457, %v3431, %v3432
    %v3444 = vsel %vm457, %v3430, %v3431
    %v3445 = vsel %vm457, %v3437, %v3430
    %v3446 = vsel %vm2414, 0.0, %v3444
    %v3447 = vsel %vm2415, 0.0, %v3443
    %v3448 = vsel %vm2416, 0.0, %v3442
    %v3449 = vsel %vm2417, 0.0, %v3441
    %v3450 = vsel %vm2418, 0.0, %v3440
    %v3451 = vsel %vm2419, 0.0, %v3439
    %v3452 = vsel %vm2420, 0.0, %v3438
    %v3453 = vsel %vm2421, 0.0, %v3445
    %v3454 = vmax.f32 %v3422, %v3446
    %v3455 = vmax.f32 %v3423, %v3447
    %v3456 = vmax.f32 %v3424, %v3448
    %v3457 = vmax.f32 %v3425, %v3449
    %v3458 = vmax.f32 %v3426, %v3450
    %v3459 = vmax.f32 %v3427, %v3451
    %v3460 = vmax.f32 %v3428, %v3452
    %v3461 = vmax.f32 %v3429, %v3453
    %v3470 = vrot.slane %v3454, 2
    %v3471 = vrot.slane %v3454, 4
    %v3472 = vrot.slane %v3454, 6
    %v3473 = vrot.slane %v3455, 2
    %v3474 = vrot.slane %v3455, 4
    %v3475 = vrot.slane %v3455, 6
    %v3476 = vrot.slane %v3456, 2
    %v3477 = vrot.slane %v3456, 4
    %v3478 = vrot.slane %v3456, 6
    %v3479 = vrot.slane %v3457, 2
    %v3480 = vrot.slane %v3457, 4
    %v3481 = vrot.slane %v3457, 6
    %v3482 = vrot.slane %v3458, 2
    %v3483 = vrot.slane %v3458, 4
    %v3484 = vrot.slane %v3458, 6
    %v3485 = vrot.slane %v3459, 2
    %v3486 = vrot.slane %v3459, 4
    %v3487 = vrot.slane %v3459, 6
    %v3488 = vrot.slane %v3460, 2
    %v3489 = vrot.slane %v3460, 4
    %v3490 = vrot.slane %v3460, 6
    %v3491 = vrot.slane %v3461, 2
    %v3492 = vrot.slane %v3461, 4
    %v3493 = vrot.slane %v3461, 6
    %v3494 = vperm.slane %v3454, 0
    %v3495 = vperm.slane %v3470, 0
    %v3496 = vperm.slane %v3471, 0
    %v3497 = vperm.slane %v3472, 0
    %v3498 = vperm.slane %v3455, 0
    %v3499 = vperm.slane %v3473, 0
    %v3500 = vperm.slane %v3474, 0
    %v3501 = vperm.slane %v3475, 0
    %v3502 = vperm.slane %v3456, 0
    %v3503 = vperm.slane %v3476, 0
    %v3504 = vperm.slane %v3477, 0
    %v3505 = vperm.slane %v3478, 0
    %v3506 = vperm.slane %v3457, 0
    %v3507 = vperm.slane %v3479, 0
    %v3508 = vperm.slane %v3480, 0
    %v3509 = vperm.slane %v3481, 0
    %v3510 = vperm.slane %v3458, 0
    %v3511 = vperm.slane %v3482, 0
    %v3512 = vperm.slane %v3483, 0
    %v3513 = vperm.slane %v3484, 0
    %v3514 = vperm.slane %v3459, 0
    %v3515 = vperm.slane %v3485, 0
    %v3516 = vperm.slane %v3486, 0
    %v3517 = vperm.slane %v3487, 0
    %v3518 = vperm.slane %v3460, 0
    %v3519 = vperm.slane %v3488, 0
    %v3520 = vperm.slane %v3489, 0
    %v3521 = vperm.slane %v3490, 0
    %v3522 = vperm.slane %v3461, 0
    %v3523 = vperm.slane %v3491, 0
    %v3524 = vperm.slane %v3492, 0
    %v3525 = vperm.slane %v3493, 0
    %v3526 = vsel %vm2195, %v3495, %v3494
    %v3527 = vsel %vm2197, %v3496, %v3526
    %v3528 = vsel %vm2199, %v3497, %v3527
    %v3529 = vsel %vm2201, %v3498, %v3528
    %v3530 = vsel %vm2203, %v3499, %v3529
    %v3531 = vsel %vm2205, %v3500, %v3530
    %v3532 = vsel %vm2207, %v3501, %v3531
    %v3533 = vsel %vm2195, %v3503, %v3502
    %v3534 = vsel %vm2197, %v3504, %v3533
    %v3535 = vsel %vm2199, %v3505, %v3534
    %v3536 = vsel %vm2201, %v3506, %v3535
    %v3537 = vsel %vm2203, %v3507, %v3536
    %v3538 = vsel %vm2205, %v3508, %v3537
    %v3539 = vsel %vm2207, %v3509, %v3538
    %v3540 = vsel %vm2195, %v3511, %v3510
    %v3541 = vsel %vm2197, %v3512, %v3540
    %v3542 = vsel %vm2199, %v3513, %v3541
    %v3543 = vsel %vm2201, %v3514, %v3542
    %v3544 = vsel %vm2203, %v3515, %v3543
    %v3545 = vsel %vm2205, %v3516, %v3544
    %v3546 = vsel %vm2207, %v3517, %v3545
    %v3547 = vsel %vm2195, %v3519, %v3518
    %v3548 = vsel %vm2197, %v3520, %v3547
    %v3549 = vsel %vm2199, %v3521, %v3548
    %v3550 = vsel %vm2201, %v3522, %v3549
    %v3551 = vsel %vm2203, %v3523, %v3550
    %v3552 = vsel %vm2205, %v3524, %v3551
    %v3553 = vsel %vm2207, %v3525, %v3552
    %v3558 = vrot.slane %v3532, 7
    %v3559 = vrot.slane %v3539, 7
    %v3560 = vrot.slane %v3546, 7
    %v3561 = vrot.slane %v3553, 7
    %v3562 = vsel %vm177, %v3560, %v3561
    %v3563 = vsel %vm177, %v3559, %v3560
    %v3564 = vsel %vm177, %v3558, %v3559
    %v3565 = vsel %vm177, %v3561, %v3558
    %vm3566 = vcmp.lt.s32.totalorder %v176, 0
    %v3567 = vsub.s32 0, %v176
    %v3568 = vsel %vm3566, %v3567, %v176
    %v3569 = vshrl.u32 %v3568, 4
    %v3570 = vand.u32 %v3568, 15
    %v3571 = vsub.s32 0, %v3570
    %v3572 = vsel %vm3566, %v3571, %v3570
    %vm3573 = vcmp.lt.s32.totalorder %v194, 0
    %v3574 = vsub.s32 0, %v194
    %v3575 = vsel %vm3573, %v3574, %v194
    %v3576 = vshrl.u32 %v3575, 4
    %v3577 = vand.u32 %v3575, 15
    %v3578 = vsub.s32 0, %v3577
    %v3579 = vsel %vm3573, %v3578, %v3577
    %vm3580 = vcmp.lt.s32.totalorder %v195, 0
    %v3581 = vsub.s32 0, %v195
    %v3582 = vsel %vm3580, %v3581, %v195
    %v3583 = vshrl.u32 %v3582, 4
    %v3584 = vand.u32 %v3582, 15
    %v3585 = vsub.s32 0, %v3584
    %v3586 = vsel %vm3580, %v3585, %v3584
    %vm3587 = vcmp.lt.s32.totalorder %v196, 0
    %v3588 = vsub.s32 0, %v196
    %v3589 = vsel %vm3587, %v3588, %v196
    %v3590 = vshrl.u32 %v3589, 4
    %v3591 = vand.u32 %v3589, 15
    %v3592 = vsub.s32 0, %v3591
    %v3593 = vsel %vm3587, %v3592, %v3591
    %vm3594 = vcmp.ne.s32.totalorder %v3572, 0
    %vm3595 = vcmp.ne.s32.totalorder %v3579, 0
    %vm3596 = vcmp.ne.s32.totalorder %v3586, 0
    %vm3597 = vcmp.ne.s32.totalorder %v3593, 0
    %vm3598 = vcmp.lt.s32.totalorder %v3572, 0
    %vm3599 = vcmp.lt.s32.totalorder %v3579, 0
    %vm3600 = vcmp.lt.s32.totalorder %v3586, 0
    %vm3601 = vcmp.lt.s32.totalorder %v3593, 0
    %vm3602 = vmand %vm3598, %vm3594
    %vm3603 = vmand %vm3599, %vm3595
    %vm3604 = vmand %vm3600, %vm3596
    %vm3605 = vmand %vm3601, %vm3597
    %v3606 = vadd.s32 %v3572, 16
    %v3607 = vadd.s32 %v3579, 16
    %v3608 = vadd.s32 %v3586, 16
    %v3609 = vadd.s32 %v3593, 16
    %v3610 = vsel %vm3602, %v3606, %v3572
    %v3611 = vsel %vm3603, %v3607, %v3579
    %v3612 = vsel %vm3604, %v3608, %v3586
    %v3613 = vsel %vm3605, %v3609, %v3593
    %vm3614 = vcmp.eq.s32.totalorder %v3610, 0
    %vm3615 = vcmp.eq.s32.totalorder %v3611, 0
    %vm3616 = vcmp.eq.s32.totalorder %v3612, 0
    %vm3617 = vcmp.eq.s32.totalorder %v3613, 0
    %v3618 = vsel %vm3614, 0.0, %v3565
    %v3619 = vsel %vm3615, 0.0, %v3564
    %v3620 = vsel %vm3616, 0.0, %v3563
    %v3621 = vsel %vm3617, 0.0, %v3562
    %v3622 = vmax.f32 %v3618, %v3532
    %v3623 = vmax.f32 %v3619, %v3539
    %v3624 = vmax.f32 %v3620, %v3546
    %v3625 = vmax.f32 %v3621, %v3553
    %v3626 = vrot.slane %v3532, 1
    %v3627 = vrot.slane %v3539, 1
    %v3628 = vrot.slane %v3546, 1
    %v3629 = vrot.slane %v3553, 1
    %v3630 = vsel %vm457, %v3628, %v3629
    %v3631 = vsel %vm457, %v3627, %v3628
    %v3632 = vsel %vm457, %v3626, %v3627
    %v3633 = vsel %vm457, %v3629, %v3626
    %vm3634 = vcmp.eq.s32.totalorder %v3610, 15
    %vm3635 = vcmp.eq.s32.totalorder %v3611, 15
    %vm3636 = vcmp.eq.s32.totalorder %v3612, 15
    %vm3637 = vcmp.eq.s32.totalorder %v3613, 15
    %v3638 = vsel %vm3634, 0.0, %v3632
    %v3639 = vsel %vm3635, 0.0, %v3631
    %v3640 = vsel %vm3636, 0.0, %v3630
    %v3641 = vsel %vm3637, 0.0, %v3633
    %v3642 = vmax.f32 %v3622, %v3638
    %v3643 = vmax.f32 %v3623, %v3639
    %v3644 = vmax.f32 %v3624, %v3640
    %v3645 = vmax.f32 %v3625, %v3641
    %v3650 = vrot.slane %v3642, 2
    %v3651 = vrot.slane %v3642, 4
    %v3652 = vrot.slane %v3642, 6
    %v3653 = vrot.slane %v3643, 2
    %v3654 = vrot.slane %v3643, 4
    %v3655 = vrot.slane %v3643, 6
    %v3656 = vrot.slane %v3644, 2
    %v3657 = vrot.slane %v3644, 4
    %v3658 = vrot.slane %v3644, 6
    %v3659 = vrot.slane %v3645, 2
    %v3660 = vrot.slane %v3645, 4
    %v3661 = vrot.slane %v3645, 6
    %v3662 = vperm.slane %v3642, 0
    %v3663 = vperm.slane %v3650, 0
    %v3664 = vperm.slane %v3651, 0
    %v3665 = vperm.slane %v3652, 0
    %v3666 = vperm.slane %v3643, 0
    %v3667 = vperm.slane %v3653, 0
    %v3668 = vperm.slane %v3654, 0
    %v3669 = vperm.slane %v3655, 0
    %v3670 = vperm.slane %v3644, 0
    %v3671 = vperm.slane %v3656, 0
    %v3672 = vperm.slane %v3657, 0
    %v3673 = vperm.slane %v3658, 0
    %v3674 = vperm.slane %v3645, 0
    %v3675 = vperm.slane %v3659, 0
    %v3676 = vperm.slane %v3660, 0
    %v3677 = vperm.slane %v3661, 0
    %v3678 = vsel %vm2195, %v3663, %v3662
    %v3679 = vsel %vm2197, %v3664, %v3678
    %v3680 = vsel %vm2199, %v3665, %v3679
    %v3681 = vsel %vm2201, %v3666, %v3680
    %v3682 = vsel %vm2203, %v3667, %v3681
    %v3683 = vsel %vm2205, %v3668, %v3682
    %v3684 = vsel %vm2207, %v3669, %v3683
    %v3685 = vsel %vm2195, %v3671, %v3670
    %v3686 = vsel %vm2197, %v3672, %v3685
    %v3687 = vsel %vm2199, %v3673, %v3686
    %v3688 = vsel %vm2201, %v3674, %v3687
    %v3689 = vsel %vm2203, %v3675, %v3688
    %v3690 = vsel %vm2205, %v3676, %v3689
    %v3691 = vsel %vm2207, %v3677, %v3690
    %v3694 = vrot.slane %v3684, 7
    %v3695 = vrot.slane %v3691, 7
    %v3696 = vsel %vm177, %v3694, %v3695
    %v3697 = vsel %vm177, %v3695, %v3694
    %vm3698 = vcmp.lt.s32.totalorder %v176, 0
    %v3699 = vsub.s32 0, %v176
    %v3700 = vsel %vm3698, %v3699, %v176
    %v3701 = vshrl.u32 %v3700, 3
    %v3702 = vand.u32 %v3700, 7
    %v3703 = vsub.s32 0, %v3702
    %v3704 = vsel %vm3698, %v3703, %v3702
    %vm3705 = vcmp.lt.s32.totalorder %v194, 0
    %v3706 = vsub.s32 0, %v194
    %v3707 = vsel %vm3705, %v3706, %v194
    %v3708 = vshrl.u32 %v3707, 3
    %v3709 = vand.u32 %v3707, 7
    %v3710 = vsub.s32 0, %v3709
    %v3711 = vsel %vm3705, %v3710, %v3709
    %vm3712 = vcmp.ne.s32.totalorder %v3704, 0
    %vm3713 = vcmp.ne.s32.totalorder %v3711, 0
    %vm3714 = vcmp.lt.s32.totalorder %v3704, 0
    %vm3715 = vcmp.lt.s32.totalorder %v3711, 0
    %vm3716 = vmand %vm3714, %vm3712
    %vm3717 = vmand %vm3715, %vm3713
    %v3718 = vadd.s32 %v3704, 8
    %v3719 = vadd.s32 %v3711, 8
    %v3720 = vsel %vm3716, %v3718, %v3704
    %v3721 = vsel %vm3717, %v3719, %v3711
    %vm3722 = vcmp.eq.s32.totalorder %v3720, 0
    %vm3723 = vcmp.eq.s32.totalorder %v3721, 0
    %v3724 = vsel %vm3722, 0.0, %v3697
    %v3725 = vsel %vm3723, 0.0, %v3696
    %v3726 = vmax.f32 %v3724, %v3684
    %v3727 = vmax.f32 %v3725, %v3691
    %v3728 = vrot.slane %v3684, 1
    %v3729 = vrot.slane %v3691, 1
    %v3730 = vsel %vm457, %v3728, %v3729
    %v3731 = vsel %vm457, %v3729, %v3728
    %vm3732 = vcmp.eq.s32.totalorder %v3720, 7
    %vm3733 = vcmp.eq.s32.totalorder %v3721, 7
    %v3734 = vsel %vm3732, 0.0, %v3730
    %v3735 = vsel %vm3733, 0.0, %v3731
    %v3736 = vmax.f32 %v3726, %v3734
    %v3737 = vmax.f32 %v3727, %v3735
    %v3740 = vrot.slane %v3736, 2
    %v3741 = vrot.slane %v3736, 4
    %v3742 = vrot.slane %v3736, 6
    %v3743 = vrot.slane %v3737, 2
    %v3744 = vrot.slane %v3737, 4
    %v3745 = vrot.slane %v3737, 6
    %v3752 = vpack.c.bf16 %v3736, %v3736
    %v3753 = vpack.c.bf16 %v3740, %v3740
    %v3754 = vpack.c.bf16 %v3741, %v3741
    %v3755 = vpack.c.bf16 %v3742, %v3742
    %v3756 = vpack.c.bf16 %v3737, %v3737
    %v3757 = vpack.c.bf16 %v3743, %v3743
    %v3758 = vpack.c.bf16 %v3744, %v3744
    %v3759 = vpack.c.bf16 %v3745, %v3745
    %v3768 = vunpack.c.l.b16 %v3752
    %v3769 = vunpack.c.l.b16 %v3753
    %v3770 = vunpack.c.l.b16 %v3754
    %v3771 = vunpack.c.l.b16 %v3755
    %v3772 = vunpack.c.l.b16 %v3756
    %v3773 = vunpack.c.l.b16 %v3757
    %v3774 = vunpack.c.l.b16 %v3758
    %v3775 = vunpack.c.l.b16 %v3759
    %v3776 = vrot.slane %v3769, 7
    %v3777 = vsel %vm2195, %v3776, %v3768
    %v3778 = vrot.slane %v3770, 6
    %v3779 = vsel %vm2197, %v3778, %v3777
    %v3780 = vrot.slane %v3771, 5
    %v3781 = vsel %vm2199, %v3780, %v3779
    %v3782 = vrot.slane %v3772, 4
    %v3783 = vsel %vm2201, %v3782, %v3781
    %v3784 = vrot.slane %v3773, 3
    %v3785 = vsel %vm2203, %v3784, %v3783
    %v3786 = vrot.slane %v3774, 2
    %v3787 = vsel %vm2205, %v3786, %v3785
    %v3788 = vrot.slane %v3775, 1
    %v3789 = vsel %vm2207, %v3788, %v3787
    %v3790 = vpack.c.b16 %v3789, %v3789
    %vm3792 = vcmask 519168
    %3793 = vst.msk [vmem:[#allocation10] sm:$0xf] %vm3792, %v3790
    // Predicated region
    $region94: #{tpu_custom_call.1} parent=1 // pred_check
      _
    $region95: #{tpu_custom_call.1} parent=1 // pred_check_branch
      %3795 = sbr.rel (0) target = $region97
    $region96: #{tpu_custom_call.1} parent=1 // pred_region
      %3797 = vsyncadd [#allocation4], 0
      %s3799 = sshll.u32 [#allocation10], 4
      %s3800 = int_to_ptr.vmem [resolvable:$true] %s3799
      %s3801 = sshll.u32 %s19, 4
      %s3802 = int_to_ptr.hbm [resolvable:$true] %s3801
      %3804 = dma.vmem_to_hbm [thread:$0]  %s3800, 64, %s3802, [#allocation4]
    $region97: #{tpu_custom_call.1} parent=1 // pred_fallthru
      _
    // Predicated region
    $region98: #{tpu_custom_call.1} parent=1 // pred_check
      _
    $region99: #{tpu_custom_call.1} parent=1 // pred_check_branch
      %3806 = sbr.rel (0) target = $region101
    $region100: #{tpu_custom_call.1} parent=1 // pred_region
      %3808 = dma.done [#allocation4], 64
    $region101: #{tpu_custom_call.1} parent=1 // pred_fallthru
      _
    %3809 = vsyncpa [#allocation3], 1
    %3810 = vsyncpa [#allocation6], 1
    %3811 = vsyncpa [#allocation9], 1
    %3812 = vsyncpa [#allocation4], 1

</llo_original>
